<compile_context>
chip_gen: v6e
topology: v6e:2x2x1
jax: 0.10.0
libtpu: 0.0.40
codegen_flags: <defaults>
</compile_context>

<pallas_src>
import numpy as np
import jax
import jax.numpy as jnp
from jax import lax
from jax.experimental import pallas as pl
from jax.experimental.pallas import tpu as pltpu

# ----------------------- PixelDRN hyperparameters ---------------------------
FILTERS = 3               # forced to 3 by the module's (buggy) arg shifting
INITIAL_FILTER_SIZE = 3   # must equal FILTERS (initial BatchNorm channels)
DILATION = 1
LAYERS = 2
OUT_MAPS = 2
PADDING = 2

BF = 2 * FILTERS          # bottleneck_factor * filters = 6
NUM_BLOCKS = 6
KEEP_RESIDUES = [1, 1, 1, 1, 0, 0]
BN_EPS = 1e-5

B = 2
H_IN = W_IN = 5
STRIDE0 = PADDING * (INITIAL_FILTER_SIZE - 1) // 2          # = 2
H0 = (H_IN - 1) // STRIDE0 + 1                              # = 3 inside the blocks
P_OUT = B * H0 * H0                                         # pixels on the lane axis
NPARAM_K = NUM_BLOCKS * LAYERS
LANE = 128


# ----------------------- parameter slab layout -------------------------------
def _build_layout():
    """Pack every parameter into one (8, TOTAL_COLS) f32 slab.

    Channels go down sublanes (<= 6 rows used).  Every item is stored
    LANE-REPLICATED in a full 128-lane tile; a weight matrix (Cout, Cin)
    occupies Cin consecutive 128-lane tiles (one per input-channel column).
    layout[name] = (col_offset, rows, n_tiles).
    """
    layout = {}
    col = 0

    def add(name, rows, n_tiles):
        nonlocal col
        layout[name] = (col, rows, n_tiles)
        col += n_tiles * LANE

    add('h0', BF, 1)                                        # folded prologue constant
    add('out_w', OUT_MAPS, BF); add('out_b', OUT_MAPS, 1)
    for k in range(NPARAM_K):
        add(f'bn1_g{k}', BF, 1); add(f'bn1_b{k}', BF, 1)
        add(f'sh_w{k}', FILTERS, BF); add(f'sh_b{k}', FILTERS, 1)
        add(f'bn2_g{k}', FILTERS, 1); add(f'bn2_b{k}', FILTERS, 1)
        add(f'cv_w{k}', FILTERS, FILTERS); add(f'cv_b{k}', FILTERS, 1)
        add(f'bn3_g{k}', FILTERS, 1); add(f'bn3_b{k}', FILTERS, 1)
        add(f'gr_w{k}', BF, FILTERS); add(f'gr_b{k}', BF, 1)
    for i in range(NUM_BLOCKS):
        if KEEP_RESIDUES[i]:                                # grow_residues only used here
            add(f'res_w{i}', BF, BF); add(f'res_b{i}', BF, 1)
    return layout, col


LAYOUT, TOTAL_COLS = _build_layout()


def _center_cols():
    """Pixel columns where the stride-2/pad-1 block 1x1 conv samples real data."""
    cols = []
    d = DILATION
    for b in range(B):
        for ho in range(H0):
            for wo in range(H0):
                hb = ho * PADDING * d - d
                wb = wo * PADDING * d - d
                if 0 <= hb < H0 and 0 <= wb < H0:
                    # source pixel == destination pixel for this config, so the
                    # spatial gather collapses to an element-wise mask.
                    assert hb == ho and wb == wo
                    cols.append((b * H0 + ho) * H0 + wo)
    return cols


CENTER_COLS = _center_cols()


def build_conv_mask(mask_type, channels, c_out, c_in, kh, kw):
    """Exact replica of MaskedConv2d mask construction."""
    mask = np.ones((c_out, c_in, kh, kw), dtype=np.float32)
    mask[:, :, kh // 2, kw // 2 + (mask_type == 'B'):] = 0
    mask[:, :, kh // 2 + 1:] = 0
    if channels > 1:
        def channel_mask(i_out, i_in):
            cout_idx = np.expand_dims(np.arange(c_out) % 2 == i_out, 1)
            cin_idx = np.expand_dims(np.arange(c_in) % 2 == i_in, 0)
            a1, a2 = np.broadcast_arrays(cout_idx, cin_idx)
            return a1 * a2
        for c in range(2):
            mask[channel_mask(c, c), kh // 2, kw // 2] = 0.0 if mask_type == 'A' else 1.0
        mask[channel_mask(0, 1), kh // 2, kw // 2] = 0.0
    return mask


# The 'A' mask of the initial 1x1 conv is all zero -> the input path is dead.
_MASK_A = build_conv_mask('A', 1, INITIAL_FILTER_SIZE, FILTERS, 1, 1)
assert not _MASK_A.any(), "expected fully-masked 'A' 1x1 conv (dead input path)"


# ------------------------------- kernel -------------------------------------
def _tree_sum(terms):
    """Pairwise (log-depth) sum of a list of same-shaped arrays."""
    while len(terms) > 1:
        nxt = [terms[i] + terms[i + 1] for i in range(0, len(terms) - 1, 2)]
        if len(terms) % 2 == 1:
            nxt.append(terms[-1])
        terms = nxt
    return terms[0]


def pixeldrn_kernel(p_ref, o_ref):
    inv_p = float(1.0 / P_OUT)

    def loadp(name):
        # lane-replicated (rows, P_OUT) view of a packed parameter tile
        off, rows, _ = LAYOUT[name]
        return p_ref[0:rows, off:off + P_OUT]

    def wcol(name, c):
        off, rows, _ = LAYOUT[name]
        base = off + c * LANE
        return p_ref[0:rows, base:base + P_OUT]

    def mac(x, wname, bname):
        # 1x1 conv as an unrolled VPU MAC with tree-summed terms:
        #   y[o, p] = b[o] + sum_c W[o, c] * x[c, p]
        # weight columns & bias are pre-broadcast along lanes in the slab.
        _, cout, cin = LAYOUT[wname]
        terms = [loadp(bname)]
        for c in range(cin):
            terms.append(wcol(wname, c) * x[c:c + 1, :])
        return _tree_sum(terms)

    def bn(x, gname, bname, relu):
        # training-mode BatchNorm2d fused into one scale/shift (+ optional ReLU)
        g, b = loadp(gname), loadp(bname)                   # (C, P) lane-replicated
        c = x.shape[0]
        if 2 * c <= 8:
            # fuse the two lane reductions into one (x and x*x stacked on sublanes)
            stacked = jnp.concatenate([x, x * x], axis=0)   # (2C, P)
            s = jnp.sum(stacked, axis=-1, keepdims=True) * inv_p
            mean, meansq = s[:c], s[c:]
        else:
            mean = jnp.mean(x, axis=-1, keepdims=True)
            meansq = jnp.mean(x * x, axis=-1, keepdims=True)
        var = jnp.maximum(meansq - mean * mean, 0.0)
        scale = g * lax.rsqrt(var + BN_EPS)                 # rsqrt -> EUP slot
        shift = b - mean * scale
        y = x * scale + shift
        return jnp.maximum(y, 0.0) if relu else y

    # ---- prologue: constant, folded host-side into 'h0' (see packing) ----
    h = loadp('h0')                                         # (BF, P)

    # ---- 6 blocks x 2 layers, fully unrolled ----
    for i in range(NUM_BLOCKS):
        for j in range(LAYERS):
            k = i * LAYERS + j
            residue = h
            t = bn(h, f'bn1_g{k}', f'bn1_b{k}', relu=True)
            t = mac(t, f'sh_w{k}', f'sh_b{k}')              # (F, P)
            t = bn(t, f'bn2_g{k}', f'bn2_b{k}', relu=True)
            # masked + strided 1x1 conv: centre mask pre-folded into cv_w columns
            t = mac(t, f'cv_w{k}', f'cv_b{k}')
            t = bn(t, f'bn3_g{k}', f'bn3_b{k}', relu=True)
            t = mac(t, f'gr_w{k}', f'gr_b{k}')              # (BF, P)
            if KEEP_RESIDUES[i]:
                if j == 0:
                    residue = mac(residue, f'res_w{i}', f'res_b{i}')
                h = t + residue
            else:
                h = t    # reference adds residue*0 here; skipped structurally

    o_ref[...] = mac(h, 'out_w', 'out_b')                   # (OUT_MAPS, P)


# ------------------------------ glue / setup ---------------------------------
def init_params(key):
    """Random module parameters packed into the lane-replicated (8, TOTAL_COLS) slab."""
    n_prologue = 3 * FILTERS + BF * FILTERS + BF            # b0, bn0_g, bn0_b, g0_w, g0_b
    n_out = OUT_MAPS * BF + OUT_MAPS
    n_layer = (2 * BF + FILTERS * BF + FILTERS + 2 * FILTERS + FILTERS * FILTERS
               + FILTERS + 2 * FILTERS + BF * FILTERS + BF)
    n_res = BF * BF + BF
    total = n_prologue + n_out + NPARAM_K * n_layer + sum(KEEP_RESIDUES) * n_res
    flat = np.asarray(0.1 * jax.random.normal(key, (total,), dtype=jnp.float32))
    pos = 0

    def take(rows, cols):
        nonlocal pos
        v = flat[pos:pos + rows * cols].reshape(rows, cols)
        pos += rows * cols
        return v

    slab = np.zeros((8, TOTAL_COLS), np.float32)
    center_lane = np.zeros((1, LANE), np.float32)
    center_lane[0, CENTER_COLS] = 1.0                       # stride-2/pad-1 centre mask

    def put_vec(name, vec):
        off, rows, _ = LAYOUT[name]
        slab[:rows, off:off + LANE] = np.repeat(
            np.asarray(vec, np.float32).reshape(rows, 1), LANE, axis=1)

    def put_w(name, w, lane_mask=None):
        off, rows, ntiles = LAYOUT[name]
        w = np.asarray(w, np.float32).reshape(rows, ntiles)
        for c in range(ntiles):
            tile = np.repeat(w[:, c:c + 1], LANE, axis=1)
            if lane_mask is not None:
                tile = tile * lane_mask
            slab[:rows, off + c * LANE: off + (c + 1) * LANE] = tile

    mask_b = build_conv_mask('B', FILTERS, FILTERS, FILTERS, 1, 1)[:, :, 0, 0]

    # --- prologue parameters (drawn for fidelity, then algebraically folded) ---
    b0 = take(FILTERS, 1)                                   # dead: cancelled by BN mean
    bn0_g = 1.0 + take(FILTERS, 1)                          # dead: multiplies (x - mean) ~= 0
    bn0_b = take(FILTERS, 1)
    g0_w = take(BF, FILTERS)
    g0_b = take(BF, 1)
    del b0, bn0_g
    # initial_conv(x) is a per-channel constant (bias only); training BN of a
    # constant reduces to beta; hence the whole prologue folds to:
    h0 = np.maximum(g0_w @ bn0_b + g0_b, 0.0)               # (BF, 1)
    put_vec('h0', h0)

    put_w('out_w', take(OUT_MAPS, BF)); put_vec('out_b', take(OUT_MAPS, 1))
    for k in range(NPARAM_K):
        put_vec(f'bn1_g{k}', 1.0 + take(BF, 1)); put_vec(f'bn1_b{k}', take(BF, 1))
        put_w(f'sh_w{k}', take(FILTERS, BF));    put_vec(f'sh_b{k}', take(FILTERS, 1))
        put_vec(f'bn2_g{k}', 1.0 + take(FILTERS, 1)); put_vec(f'bn2_b{k}', take(FILTERS, 1))
        # 'B' channel mask AND the centre (stride/pad) mask pre-applied to the weights
        put_w(f'cv_w{k}', take(FILTERS, FILTERS) * mask_b, lane_mask=center_lane)
        put_vec(f'cv_b{k}', take(FILTERS, 1))
        put_vec(f'bn3_g{k}', 1.0 + take(FILTERS, 1)); put_vec(f'bn3_b{k}', take(FILTERS, 1))
        put_w(f'gr_w{k}', take(BF, FILTERS));    put_vec(f'gr_b{k}', take(BF, 1))
    for i in range(NUM_BLOCKS):
        if KEEP_RESIDUES[i]:
            put_w(f'res_w{i}', take(BF, BF)); put_vec(f'res_b{i}', take(BF, 1))
    assert pos == total
    return jnp.asarray(slab)


def pixeldrn_forward(x_nchw, param_slab):
    # The fully-masked 'A' initial conv makes the output independent of the
    # values of x; x only validates the (static) input spatial size.
    assert x_nchw.shape == (B, FILTERS, H_IN, W_IN)
    vmem = lambda: pl.BlockSpec(memory_space=pltpu.MemorySpace.VMEM)
    out = pl.pallas_call(
        pixeldrn_kernel,
        out_shape=jax.ShapeDtypeStruct((OUT_MAPS, P_OUT), jnp.float32),
        in_specs=[vmem()],
        out_specs=vmem(),
        cost_estimate=pl.CostEstimate(
            flops=50_000, transcendentals=64,
            bytes_accessed=int(param_slab.size) * 4 + OUT_MAPS * P_OUT * 4),
    )(param_slab)
    # (OUT_MAPS, P) -> NCHW
    return jnp.transpose(out.reshape(OUT_MAPS, B, H0, H0), (1, 0, 2, 3))


# TODO(synk): BatchNorm running-stat updates (a training-mode side effect on the
# module's buffers) are not materialized; only the returned tensor is reproduced.

if __name__ == "__main__":
    key = jax.random.PRNGKey(0)
    kx, kp = jax.random.split(key)
    x = jax.random.normal(kx, (B, FILTERS, H_IN, W_IN), dtype=jnp.float32)
    param_slab = init_params(kp)
    y = pixeldrn_forward(x, param_slab)
    jax.block_until_ready(y)
    assert y.shape == (B, OUT_MAPS, H0, H0)
    assert bool(jnp.all(jnp.isfinite(y)))
    print("KERNEL_OK")
</pallas_src>

<mosaic_0001>
module attributes {stable_mosaic.version = 11 : i64} {
  func.func @pixeldrn_kernel(%arg0: memref<8x36864xf32, #tpu.memory_space<vmem>>, %arg1: memref<2x18xf32, #tpu.memory_space<vmem>>) attributes {dimension_semantics = [], scalar_prefetch = 0 : i64, scratch_operands = 0 : i64, tpu.core_type = #tpu.core_type<tc>} {
    %c0 = arith.constant 0 : index
    %c0_0 = arith.constant 0 : index
    %0 = vector.load %arg0[%c0, %c0_0] : memref<8x36864xf32, #tpu.memory_space<vmem>>, vector<6x18xf32>
    %c0_1 = arith.constant 0 : index
    %c1024 = arith.constant 1024 : index
    %1 = vector.load %arg0[%c0_1, %c1024] : memref<8x36864xf32, #tpu.memory_space<vmem>>, vector<6x18xf32>
    %c0_2 = arith.constant 0 : index
    %c1152 = arith.constant 1152 : index
    %2 = vector.load %arg0[%c0_2, %c1152] : memref<8x36864xf32, #tpu.memory_space<vmem>>, vector<6x18xf32>
    %cst = arith.constant dense<0.000000e+00> : vector<6xf32>
    %3 = vector.multi_reduction <add>, %0, %cst [1] : vector<6x18xf32> to vector<6xf32>
    %4 = vector.shape_cast %3 : vector<6xf32> to vector<6x1xf32>
    %cst_3 = arith.constant 1.800000e+01 : f32
    %5 = vector.broadcast %cst_3 : f32 to vector<6x1xf32>
    %6 = arith.divf %4, %5 : vector<6x1xf32>
    %7 = arith.mulf %0, %0 : vector<6x18xf32>
    %cst_4 = arith.constant dense<0.000000e+00> : vector<6xf32>
    %8 = vector.multi_reduction <add>, %7, %cst_4 [1] : vector<6x18xf32> to vector<6xf32>
    %9 = vector.shape_cast %8 : vector<6xf32> to vector<6x1xf32>
    %cst_5 = arith.constant 1.800000e+01 : f32
    %10 = vector.broadcast %cst_5 : f32 to vector<6x1xf32>
    %11 = arith.divf %9, %10 : vector<6x1xf32>
    %12 = arith.mulf %6, %6 : vector<6x1xf32>
    %13 = arith.subf %11, %12 : vector<6x1xf32>
    %cst_6 = arith.constant 0.000000e+00 : f32
    %14 = vector.broadcast %cst_6 : f32 to vector<6x1xf32>
    %15 = arith.maximumf %13, %14 : vector<6x1xf32>
    %cst_7 = arith.constant 9.99999974E-6 : f32
    %16 = vector.broadcast %cst_7 : f32 to vector<6x1xf32>
    %17 = arith.addf %15, %16 : vector<6x1xf32>
    %18 = math.rsqrt %17 : vector<6x1xf32>
    %19 = vector.broadcast %18 : vector<6x1xf32> to vector<6x18xf32>
    %20 = arith.mulf %1, %19 : vector<6x18xf32>
    %21 = vector.broadcast %6 : vector<6x1xf32> to vector<6x18xf32>
    %22 = arith.mulf %21, %20 : vector<6x18xf32>
    %23 = arith.subf %2, %22 : vector<6x18xf32>
    %24 = arith.mulf %0, %20 : vector<6x18xf32>
    %25 = arith.addf %24, %23 : vector<6x18xf32>
    %cst_8 = arith.constant 0.000000e+00 : f32
    %26 = vector.broadcast %cst_8 : f32 to vector<6x18xf32>
    %27 = arith.maximumf %25, %26 : vector<6x18xf32>
    %c0_9 = arith.constant 0 : index
    %c2048 = arith.constant 2048 : index
    %28 = vector.load %arg0[%c0_9, %c2048] : memref<8x36864xf32, #tpu.memory_space<vmem>>, vector<3x18xf32>
    %c0_10 = arith.constant 0 : index
    %c1280 = arith.constant 1280 : index
    %29 = vector.load %arg0[%c0_10, %c1280] : memref<8x36864xf32, #tpu.memory_space<vmem>>, vector<3x18xf32>
    %30 = vector.extract_strided_slice %27 {offsets = [0, 0], sizes = [1, 18], strides = [1, 1]} : vector<6x18xf32> to vector<1x18xf32>
    %31 = vector.broadcast %30 : vector<1x18xf32> to vector<3x18xf32>
    %32 = arith.mulf %29, %31 : vector<3x18xf32>
    %c0_11 = arith.constant 0 : index
    %c1408 = arith.constant 1408 : index
    %33 = vector.load %arg0[%c0_11, %c1408] : memref<8x36864xf32, #tpu.memory_space<vmem>>, vector<3x18xf32>
    %34 = vector.extract_strided_slice %27 {offsets = [1, 0], sizes = [1, 18], strides = [1, 1]} : vector<6x18xf32> to vector<1x18xf32>
    %35 = vector.broadcast %34 : vector<1x18xf32> to vector<3x18xf32>
    %36 = arith.mulf %33, %35 : vector<3x18xf32>
    %c0_12 = arith.constant 0 : index
    %c1536 = arith.constant 1536 : index
    %37 = vector.load %arg0[%c0_12, %c1536] : memref<8x36864xf32, #tpu.memory_space<vmem>>, vector<3x18xf32>
    %38 = vector.extract_strided_slice %27 {offsets = [2, 0], sizes = [1, 18], strides = [1, 1]} : vector<6x18xf32> to vector<1x18xf32>
    %39 = vector.broadcast %38 : vector<1x18xf32> to vector<3x18xf32>
    %40 = arith.mulf %37, %39 : vector<3x18xf32>
    %c0_13 = arith.constant 0 : index
    %c1664 = arith.constant 1664 : index
    %41 = vector.load %arg0[%c0_13, %c1664] : memref<8x36864xf32, #tpu.memory_space<vmem>>, vector<3x18xf32>
    %42 = vector.extract_strided_slice %27 {offsets = [3, 0], sizes = [1, 18], strides = [1, 1]} : vector<6x18xf32> to vector<1x18xf32>
    %43 = vector.broadcast %42 : vector<1x18xf32> to vector<3x18xf32>
    %44 = arith.mulf %41, %43 : vector<3x18xf32>
    %c0_14 = arith.constant 0 : index
    %c1792 = arith.constant 1792 : index
    %45 = vector.load %arg0[%c0_14, %c1792] : memref<8x36864xf32, #tpu.memory_space<vmem>>, vector<3x18xf32>
    %46 = vector.extract_strided_slice %27 {offsets = [4, 0], sizes = [1, 18], strides = [1, 1]} : vector<6x18xf32> to vector<1x18xf32>
    %47 = vector.broadcast %46 : vector<1x18xf32> to vector<3x18xf32>
    %48 = arith.mulf %45, %47 : vector<3x18xf32>
    %c0_15 = arith.constant 0 : index
    %c1920 = arith.constant 1920 : index
    %49 = vector.load %arg0[%c0_15, %c1920] : memref<8x36864xf32, #tpu.memory_space<vmem>>, vector<3x18xf32>
    %50 = vector.extract_strided_slice %27 {offsets = [5, 0], sizes = [1, 18], strides = [1, 1]} : vector<6x18xf32> to vector<1x18xf32>
    %51 = vector.broadcast %50 : vector<1x18xf32> to vector<3x18xf32>
    %52 = arith.mulf %49, %51 : vector<3x18xf32>
    %53 = arith.addf %28, %32 : vector<3x18xf32>
    %54 = arith.addf %36, %40 : vector<3x18xf32>
    %55 = arith.addf %44, %48 : vector<3x18xf32>
    %56 = arith.addf %53, %54 : vector<3x18xf32>
    %57 = arith.addf %55, %52 : vector<3x18xf32>
    %58 = arith.addf %56, %57 : vector<3x18xf32>
    %c0_16 = arith.constant 0 : index
    %c2176 = arith.constant 2176 : index
    %59 = vector.load %arg0[%c0_16, %c2176] : memref<8x36864xf32, #tpu.memory_space<vmem>>, vector<3x18xf32>
    %c0_17 = arith.constant 0 : index
    %c2304 = arith.constant 2304 : index
    %60 = vector.load %arg0[%c0_17, %c2304] : memref<8x36864xf32, #tpu.memory_space<vmem>>, vector<3x18xf32>
    %61 = arith.mulf %58, %58 : vector<3x18xf32>
    %62 = tpu.concatenate %58, %61 in 0 : vector<3x18xf32>, vector<3x18xf32> -> vector<6x18xf32>
    %cst_18 = arith.constant dense<0.000000e+00> : vector<6xf32>
    %63 = vector.multi_reduction <add>, %62, %cst_18 [1] : vector<6x18xf32> to vector<6xf32>
    %64 = vector.shape_cast %63 : vector<6xf32> to vector<6x1xf32>
    %cst_19 = arith.constant 0.055555556 : f32
    %65 = vector.broadcast %cst_19 : f32 to vector<6x1xf32>
    %66 = arith.mulf %64, %65 : vector<6x1xf32>
    %67 = vector.extract_strided_slice %66 {offsets = [0, 0], sizes = [3, 1], strides = [1, 1]} : vector<6x1xf32> to vector<3x1xf32>
    %68 = vector.extract_strided_slice %66 {offsets = [3, 0], sizes = [3, 1], strides = [1, 1]} : vector<6x1xf32> to vector<3x1xf32>
    %69 = arith.mulf %67, %67 : vector<3x1xf32>
    %70 = arith.subf %68, %69 : vector<3x1xf32>
    %cst_20 = arith.constant 0.000000e+00 : f32
    %71 = vector.broadcast %cst_20 : f32 to vector<3x1xf32>
    %72 = arith.maximumf %70, %71 : vector<3x1xf32>
    %cst_21 = arith.constant 9.99999974E-6 : f32
    %73 = vector.broadcast %cst_21 : f32 to vector<3x1xf32>
    %74 = arith.addf %72, %73 : vector<3x1xf32>
    %75 = math.rsqrt %74 : vector<3x1xf32>
    %76 = vector.broadcast %75 : vector<3x1xf32> to vector<3x18xf32>
    %77 = arith.mulf %59, %76 : vector<3x18xf32>
    %78 = vector.broadcast %67 : vector<3x1xf32> to vector<3x18xf32>
    %79 = arith.mulf %78, %77 : vector<3x18xf32>
    %80 = arith.subf %60, %79 : vector<3x18xf32>
    %81 = arith.mulf %58, %77 : vector<3x18xf32>
    %82 = arith.addf %81, %80 : vector<3x18xf32>
    %cst_22 = arith.constant 0.000000e+00 : f32
    %83 = vector.broadcast %cst_22 : f32 to vector<3x18xf32>
    %84 = arith.maximumf %82, %83 : vector<3x18xf32>
    %c0_23 = arith.constant 0 : index
    %c2816 = arith.constant 2816 : index
    %85 = vector.load %arg0[%c0_23, %c2816] : memref<8x36864xf32, #tpu.memory_space<vmem>>, vector<3x18xf32>
    %c0_24 = arith.constant 0 : index
    %c2432 = arith.constant 2432 : index
    %86 = vector.load %arg0[%c0_24, %c2432] : memref<8x36864xf32, #tpu.memory_space<vmem>>, vector<3x18xf32>
    %87 = vector.extract_strided_slice %84 {offsets = [0, 0], sizes = [1, 18], strides = [1, 1]} : vector<3x18xf32> to vector<1x18xf32>
    %88 = vector.broadcast %87 : vector<1x18xf32> to vector<3x18xf32>
    %89 = arith.mulf %86, %88 : vector<3x18xf32>
    %c0_25 = arith.constant 0 : index
    %c2560 = arith.constant 2560 : index
    %90 = vector.load %arg0[%c0_25, %c2560] : memref<8x36864xf32, #tpu.memory_space<vmem>>, vector<3x18xf32>
    %91 = vector.extract_strided_slice %84 {offsets = [1, 0], sizes = [1, 18], strides = [1, 1]} : vector<3x18xf32> to vector<1x18xf32>
    %92 = vector.broadcast %91 : vector<1x18xf32> to vector<3x18xf32>
    %93 = arith.mulf %90, %92 : vector<3x18xf32>
    %c0_26 = arith.constant 0 : index
    %c2688 = arith.constant 2688 : index
    %94 = vector.load %arg0[%c0_26, %c2688] : memref<8x36864xf32, #tpu.memory_space<vmem>>, vector<3x18xf32>
    %95 = vector.extract_strided_slice %84 {offsets = [2, 0], sizes = [1, 18], strides = [1, 1]} : vector<3x18xf32> to vector<1x18xf32>
    %96 = vector.broadcast %95 : vector<1x18xf32> to vector<3x18xf32>
    %97 = arith.mulf %94, %96 : vector<3x18xf32>
    %98 = arith.addf %85, %89 : vector<3x18xf32>
    %99 = arith.addf %93, %97 : vector<3x18xf32>
    %100 = arith.addf %98, %99 : vector<3x18xf32>
    %c0_27 = arith.constant 0 : index
    %c2944 = arith.constant 2944 : index
    %101 = vector.load %arg0[%c0_27, %c2944] : memref<8x36864xf32, #tpu.memory_space<vmem>>, vector<3x18xf32>
    %c0_28 = arith.constant 0 : index
    %c3072 = arith.constant 3072 : index
    %102 = vector.load %arg0[%c0_28, %c3072] : memref<8x36864xf32, #tpu.memory_space<vmem>>, vector<3x18xf32>
    %103 = arith.mulf %100, %100 : vector<3x18xf32>
    %104 = tpu.concatenate %100, %103 in 0 : vector<3x18xf32>, vector<3x18xf32> -> vector<6x18xf32>
    %cst_29 = arith.constant dense<0.000000e+00> : vector<6xf32>
    %105 = vector.multi_reduction <add>, %104, %cst_29 [1] : vector<6x18xf32> to vector<6xf32>
    %106 = vector.shape_cast %105 : vector<6xf32> to vector<6x1xf32>
    %cst_30 = arith.constant 0.055555556 : f32
    %107 = vector.broadcast %cst_30 : f32 to vector<6x1xf32>
    %108 = arith.mulf %106, %107 : vector<6x1xf32>
    %109 = vector.extract_strided_slice %108 {offsets = [0, 0], sizes = [3, 1], strides = [1, 1]} : vector<6x1xf32> to vector<3x1xf32>
    %110 = vector.extract_strided_slice %108 {offsets = [3, 0], sizes = [3, 1], strides = [1, 1]} : vector<6x1xf32> to vector<3x1xf32>
    %111 = arith.mulf %109, %109 : vector<3x1xf32>
    %112 = arith.subf %110, %111 : vector<3x1xf32>
    %cst_31 = arith.constant 0.000000e+00 : f32
    %113 = vector.broadcast %cst_31 : f32 to vector<3x1xf32>
    %114 = arith.maximumf %112, %113 : vector<3x1xf32>
    %cst_32 = arith.constant 9.99999974E-6 : f32
    %115 = vector.broadcast %cst_32 : f32 to vector<3x1xf32>
    %116 = arith.addf %114, %115 : vector<3x1xf32>
    %117 = math.rsqrt %116 : vector<3x1xf32>
    %118 = vector.broadcast %117 : vector<3x1xf32> to vector<3x18xf32>
    %119 = arith.mulf %101, %118 : vector<3x18xf32>
    %120 = vector.broadcast %109 : vector<3x1xf32> to vector<3x18xf32>
    %121 = arith.mulf %120, %119 : vector<3x18xf32>
    %122 = arith.subf %102, %121 : vector<3x18xf32>
    %123 = arith.mulf %100, %119 : vector<3x18xf32>
    %124 = arith.addf %123, %122 : vector<3x18xf32>
    %cst_33 = arith.constant 0.000000e+00 : f32
    %125 = vector.broadcast %cst_33 : f32 to vector<3x18xf32>
    %126 = arith.maximumf %124, %125 : vector<3x18xf32>
    %c0_34 = arith.constant 0 : index
    %c3584 = arith.constant 3584 : index
    %127 = vector.load %arg0[%c0_34, %c3584] : memref<8x36864xf32, #tpu.memory_space<vmem>>, vector<6x18xf32>
    %c0_35 = arith.constant 0 : index
    %c3200 = arith.constant 3200 : index
    %128 = vector.load %arg0[%c0_35, %c3200] : memref<8x36864xf32, #tpu.memory_space<vmem>>, vector<6x18xf32>
    %129 = vector.extract_strided_slice %126 {offsets = [0, 0], sizes = [1, 18], strides = [1, 1]} : vector<3x18xf32> to vector<1x18xf32>
    %130 = vector.broadcast %129 : vector<1x18xf32> to vector<6x18xf32>
    %131 = arith.mulf %128, %130 : vector<6x18xf32>
    %c0_36 = arith.constant 0 : index
    %c3328 = arith.constant 3328 : index
    %132 = vector.load %arg0[%c0_36, %c3328] : memref<8x36864xf32, #tpu.memory_space<vmem>>, vector<6x18xf32>
    %133 = vector.extract_strided_slice %126 {offsets = [1, 0], sizes = [1, 18], strides = [1, 1]} : vector<3x18xf32> to vector<1x18xf32>
    %134 = vector.broadcast %133 : vector<1x18xf32> to vector<6x18xf32>
    %135 = arith.mulf %132, %134 : vector<6x18xf32>
    %c0_37 = arith.constant 0 : index
    %c3456 = arith.constant 3456 : index
    %136 = vector.load %arg0[%c0_37, %c3456] : memref<8x36864xf32, #tpu.memory_space<vmem>>, vector<6x18xf32>
    %137 = vector.extract_strided_slice %126 {offsets = [2, 0], sizes = [1, 18], strides = [1, 1]} : vector<3x18xf32> to vector<1x18xf32>
    %138 = vector.broadcast %137 : vector<1x18xf32> to vector<6x18xf32>
    %139 = arith.mulf %136, %138 : vector<6x18xf32>
    %140 = arith.addf %127, %131 : vector<6x18xf32>
    %141 = arith.addf %135, %139 : vector<6x18xf32>
    %142 = arith.addf %140, %141 : vector<6x18xf32>
    %c0_38 = arith.constant 0 : index
    %c34048 = arith.constant 34048 : index
    %143 = vector.load %arg0[%c0_38, %c34048] : memref<8x36864xf32, #tpu.memory_space<vmem>>, vector<6x18xf32>
    %c0_39 = arith.constant 0 : index
    %c33280 = arith.constant 33280 : index
    %144 = vector.load %arg0[%c0_39, %c33280] : memref<8x36864xf32, #tpu.memory_space<vmem>>, vector<6x18xf32>
    %145 = vector.extract_strided_slice %0 {offsets = [0, 0], sizes = [1, 18], strides = [1, 1]} : vector<6x18xf32> to vector<1x18xf32>
    %146 = vector.broadcast %145 : vector<1x18xf32> to vector<6x18xf32>
    %147 = arith.mulf %144, %146 : vector<6x18xf32>
    %c0_40 = arith.constant 0 : index
    %c33408 = arith.constant 33408 : index
    %148 = vector.load %arg0[%c0_40, %c33408] : memref<8x36864xf32, #tpu.memory_space<vmem>>, vector<6x18xf32>
    %149 = vector.extract_strided_slice %0 {offsets = [1, 0], sizes = [1, 18], strides = [1, 1]} : vector<6x18xf32> to vector<1x18xf32>
    %150 = vector.broadcast %149 : vector<1x18xf32> to vector<6x18xf32>
    %151 = arith.mulf %148, %150 : vector<6x18xf32>
    %c0_41 = arith.constant 0 : index
    %c33536 = arith.constant 33536 : index
    %152 = vector.load %arg0[%c0_41, %c33536] : memref<8x36864xf32, #tpu.memory_space<vmem>>, vector<6x18xf32>
    %153 = vector.extract_strided_slice %0 {offsets = [2, 0], sizes = [1, 18], strides = [1, 1]} : vector<6x18xf32> to vector<1x18xf32>
    %154 = vector.broadcast %153 : vector<1x18xf32> to vector<6x18xf32>
    %155 = arith.mulf %152, %154 : vector<6x18xf32>
    %c0_42 = arith.constant 0 : index
    %c33664 = arith.constant 33664 : index
    %156 = vector.load %arg0[%c0_42, %c33664] : memref<8x36864xf32, #tpu.memory_space<vmem>>, vector<6x18xf32>
    %157 = vector.extract_strided_slice %0 {offsets = [3, 0], sizes = [1, 18], strides = [1, 1]} : vector<6x18xf32> to vector<1x18xf32>
    %158 = vector.broadcast %157 : vector<1x18xf32> to vector<6x18xf32>
    %159 = arith.mulf %156, %158 : vector<6x18xf32>
    %c0_43 = arith.constant 0 : index
    %c33792 = arith.constant 33792 : index
    %160 = vector.load %arg0[%c0_43, %c33792] : memref<8x36864xf32, #tpu.memory_space<vmem>>, vector<6x18xf32>
    %161 = vector.extract_strided_slice %0 {offsets = [4, 0], sizes = [1, 18], strides = [1, 1]} : vector<6x18xf32> to vector<1x18xf32>
    %162 = vector.broadcast %161 : vector<1x18xf32> to vector<6x18xf32>
    %163 = arith.mulf %160, %162 : vector<6x18xf32>
    %c0_44 = arith.constant 0 : index
    %c33920 = arith.constant 33920 : index
    %164 = vector.load %arg0[%c0_44, %c33920] : memref<8x36864xf32, #tpu.memory_space<vmem>>, vector<6x18xf32>
    %165 = vector.extract_strided_slice %0 {offsets = [5, 0], sizes = [1, 18], strides = [1, 1]} : vector<6x18xf32> to vector<1x18xf32>
    %166 = vector.broadcast %165 : vector<1x18xf32> to vector<6x18xf32>
    %167 = arith.mulf %164, %166 : vector<6x18xf32>
    %168 = arith.addf %143, %147 : vector<6x18xf32>
    %169 = arith.addf %151, %155 : vector<6x18xf32>
    %170 = arith.addf %159, %163 : vector<6x18xf32>
    %171 = arith.addf %168, %169 : vector<6x18xf32>
    %172 = arith.addf %170, %167 : vector<6x18xf32>
    %173 = arith.addf %171, %172 : vector<6x18xf32>
    %174 = arith.addf %142, %173 : vector<6x18xf32>
    %c0_45 = arith.constant 0 : index
    %c3712 = arith.constant 3712 : index
    %175 = vector.load %arg0[%c0_45, %c3712] : memref<8x36864xf32, #tpu.memory_space<vmem>>, vector<6x18xf32>
    %c0_46 = arith.constant 0 : index
    %c3840 = arith.constant 3840 : index
    %176 = vector.load %arg0[%c0_46, %c3840] : memref<8x36864xf32, #tpu.memory_space<vmem>>, vector<6x18xf32>
    %cst_47 = arith.constant dense<0.000000e+00> : vector<6xf32>
    %177 = vector.multi_reduction <add>, %174, %cst_47 [1] : vector<6x18xf32> to vector<6xf32>
    %178 = vector.shape_cast %177 : vector<6xf32> to vector<6x1xf32>
    %cst_48 = arith.constant 1.800000e+01 : f32
    %179 = vector.broadcast %cst_48 : f32 to vector<6x1xf32>
    %180 = arith.divf %178, %179 : vector<6x1xf32>
    %181 = arith.mulf %174, %174 : vector<6x18xf32>
    %cst_49 = arith.constant dense<0.000000e+00> : vector<6xf32>
    %182 = vector.multi_reduction <add>, %181, %cst_49 [1] : vector<6x18xf32> to vector<6xf32>
    %183 = vector.shape_cast %182 : vector<6xf32> to vector<6x1xf32>
    %cst_50 = arith.constant 1.800000e+01 : f32
    %184 = vector.broadcast %cst_50 : f32 to vector<6x1xf32>
    %185 = arith.divf %183, %184 : vector<6x1xf32>
    %186 = arith.mulf %180, %180 : vector<6x1xf32>
    %187 = arith.subf %185, %186 : vector<6x1xf32>
    %cst_51 = arith.constant 0.000000e+00 : f32
    %188 = vector.broadcast %cst_51 : f32 to vector<6x1xf32>
    %189 = arith.maximumf %187, %188 : vector<6x1xf32>
    %cst_52 = arith.constant 9.99999974E-6 : f32
    %190 = vector.broadcast %cst_52 : f32 to vector<6x1xf32>
    %191 = arith.addf %189, %190 : vector<6x1xf32>
    %192 = math.rsqrt %191 : vector<6x1xf32>
    %193 = vector.broadcast %192 : vector<6x1xf32> to vector<6x18xf32>
    %194 = arith.mulf %175, %193 : vector<6x18xf32>
    %195 = vector.broadcast %180 : vector<6x1xf32> to vector<6x18xf32>
    %196 = arith.mulf %195, %194 : vector<6x18xf32>
    %197 = arith.subf %176, %196 : vector<6x18xf32>
    %198 = arith.mulf %174, %194 : vector<6x18xf32>
    %199 = arith.addf %198, %197 : vector<6x18xf32>
    %cst_53 = arith.constant 0.000000e+00 : f32
    %200 = vector.broadcast %cst_53 : f32 to vector<6x18xf32>
    %201 = arith.maximumf %199, %200 : vector<6x18xf32>
    %c0_54 = arith.constant 0 : index
    %c4736 = arith.constant 4736 : index
    %202 = vector.load %arg0[%c0_54, %c4736] : memref<8x36864xf32, #tpu.memory_space<vmem>>, vector<3x18xf32>
    %c0_55 = arith.constant 0 : index
    %c3968 = arith.constant 3968 : index
    %203 = vector.load %arg0[%c0_55, %c3968] : memref<8x36864xf32, #tpu.memory_space<vmem>>, vector<3x18xf32>
    %204 = vector.extract_strided_slice %201 {offsets = [0, 0], sizes = [1, 18], strides = [1, 1]} : vector<6x18xf32> to vector<1x18xf32>
    %205 = vector.broadcast %204 : vector<1x18xf32> to vector<3x18xf32>
    %206 = arith.mulf %203, %205 : vector<3x18xf32>
    %c0_56 = arith.constant 0 : index
    %c4096 = arith.constant 4096 : index
    %207 = vector.load %arg0[%c0_56, %c4096] : memref<8x36864xf32, #tpu.memory_space<vmem>>, vector<3x18xf32>
    %208 = vector.extract_strided_slice %201 {offsets = [1, 0], sizes = [1, 18], strides = [1, 1]} : vector<6x18xf32> to vector<1x18xf32>
    %209 = vector.broadcast %208 : vector<1x18xf32> to vector<3x18xf32>
    %210 = arith.mulf %207, %209 : vector<3x18xf32>
    %c0_57 = arith.constant 0 : index
    %c4224 = arith.constant 4224 : index
    %211 = vector.load %arg0[%c0_57, %c4224] : memref<8x36864xf32, #tpu.memory_space<vmem>>, vector<3x18xf32>
    %212 = vector.extract_strided_slice %201 {offsets = [2, 0], sizes = [1, 18], strides = [1, 1]} : vector<6x18xf32> to vector<1x18xf32>
    %213 = vector.broadcast %212 : vector<1x18xf32> to vector<3x18xf32>
    %214 = arith.mulf %211, %213 : vector<3x18xf32>
    %c0_58 = arith.constant 0 : index
    %c4352 = arith.constant 4352 : index
    %215 = vector.load %arg0[%c0_58, %c4352] : memref<8x36864xf32, #tpu.memory_space<vmem>>, vector<3x18xf32>
    %216 = vector.extract_strided_slice %201 {offsets = [3, 0], sizes = [1, 18], strides = [1, 1]} : vector<6x18xf32> to vector<1x18xf32>
    %217 = vector.broadcast %216 : vector<1x18xf32> to vector<3x18xf32>
    %218 = arith.mulf %215, %217 : vector<3x18xf32>
    %c0_59 = arith.constant 0 : index
    %c4480 = arith.constant 4480 : index
    %219 = vector.load %arg0[%c0_59, %c4480] : memref<8x36864xf32, #tpu.memory_space<vmem>>, vector<3x18xf32>
    %220 = vector.extract_strided_slice %201 {offsets = [4, 0], sizes = [1, 18], strides = [1, 1]} : vector<6x18xf32> to vector<1x18xf32>
    %221 = vector.broadcast %220 : vector<1x18xf32> to vector<3x18xf32>
    %222 = arith.mulf %219, %221 : vector<3x18xf32>
    %c0_60 = arith.constant 0 : index
    %c4608 = arith.constant 4608 : index
    %223 = vector.load %arg0[%c0_60, %c4608] : memref<8x36864xf32, #tpu.memory_space<vmem>>, vector<3x18xf32>
    %224 = vector.extract_strided_slice %201 {offsets = [5, 0], sizes = [1, 18], strides = [1, 1]} : vector<6x18xf32> to vector<1x18xf32>
    %225 = vector.broadcast %224 : vector<1x18xf32> to vector<3x18xf32>
    %226 = arith.mulf %223, %225 : vector<3x18xf32>
    %227 = arith.addf %202, %206 : vector<3x18xf32>
    %228 = arith.addf %210, %214 : vector<3x18xf32>
    %229 = arith.addf %218, %222 : vector<3x18xf32>
    %230 = arith.addf %227, %228 : vector<3x18xf32>
    %231 = arith.addf %229, %226 : vector<3x18xf32>
    %232 = arith.addf %230, %231 : vector<3x18xf32>
    %c0_61 = arith.constant 0 : index
    %c4864 = arith.constant 4864 : index
    %233 = vector.load %arg0[%c0_61, %c4864] : memref<8x36864xf32, #tpu.memory_space<vmem>>, vector<3x18xf32>
    %c0_62 = arith.constant 0 : index
    %c4992 = arith.constant 4992 : index
    %234 = vector.load %arg0[%c0_62, %c4992] : memref<8x36864xf32, #tpu.memory_space<vmem>>, vector<3x18xf32>
    %235 = arith.mulf %232, %232 : vector<3x18xf32>
    %236 = tpu.concatenate %232, %235 in 0 : vector<3x18xf32>, vector<3x18xf32> -> vector<6x18xf32>
    %cst_63 = arith.constant dense<0.000000e+00> : vector<6xf32>
    %237 = vector.multi_reduction <add>, %236, %cst_63 [1] : vector<6x18xf32> to vector<6xf32>
    %238 = vector.shape_cast %237 : vector<6xf32> to vector<6x1xf32>
    %cst_64 = arith.constant 0.055555556 : f32
    %239 = vector.broadcast %cst_64 : f32 to vector<6x1xf32>
    %240 = arith.mulf %238, %239 : vector<6x1xf32>
    %241 = vector.extract_strided_slice %240 {offsets = [0, 0], sizes = [3, 1], strides = [1, 1]} : vector<6x1xf32> to vector<3x1xf32>
    %242 = vector.extract_strided_slice %240 {offsets = [3, 0], sizes = [3, 1], strides = [1, 1]} : vector<6x1xf32> to vector<3x1xf32>
    %243 = arith.mulf %241, %241 : vector<3x1xf32>
    %244 = arith.subf %242, %243 : vector<3x1xf32>
    %cst_65 = arith.constant 0.000000e+00 : f32
    %245 = vector.broadcast %cst_65 : f32 to vector<3x1xf32>
    %246 = arith.maximumf %244, %245 : vector<3x1xf32>
    %cst_66 = arith.constant 9.99999974E-6 : f32
    %247 = vector.broadcast %cst_66 : f32 to vector<3x1xf32>
    %248 = arith.addf %246, %247 : vector<3x1xf32>
    %249 = math.rsqrt %248 : vector<3x1xf32>
    %250 = vector.broadcast %249 : vector<3x1xf32> to vector<3x18xf32>
    %251 = arith.mulf %233, %250 : vector<3x18xf32>
    %252 = vector.broadcast %241 : vector<3x1xf32> to vector<3x18xf32>
    %253 = arith.mulf %252, %251 : vector<3x18xf32>
    %254 = arith.subf %234, %253 : vector<3x18xf32>
    %255 = arith.mulf %232, %251 : vector<3x18xf32>
    %256 = arith.addf %255, %254 : vector<3x18xf32>
    %cst_67 = arith.constant 0.000000e+00 : f32
    %257 = vector.broadcast %cst_67 : f32 to vector<3x18xf32>
    %258 = arith.maximumf %256, %257 : vector<3x18xf32>
    %c0_68 = arith.constant 0 : index
    %c5504 = arith.constant 5504 : index
    %259 = vector.load %arg0[%c0_68, %c5504] : memref<8x36864xf32, #tpu.memory_space<vmem>>, vector<3x18xf32>
    %c0_69 = arith.constant 0 : index
    %c5120 = arith.constant 5120 : index
    %260 = vector.load %arg0[%c0_69, %c5120] : memref<8x36864xf32, #tpu.memory_space<vmem>>, vector<3x18xf32>
    %261 = vector.extract_strided_slice %258 {offsets = [0, 0], sizes = [1, 18], strides = [1, 1]} : vector<3x18xf32> to vector<1x18xf32>
    %262 = vector.broadcast %261 : vector<1x18xf32> to vector<3x18xf32>
    %263 = arith.mulf %260, %262 : vector<3x18xf32>
    %c0_70 = arith.constant 0 : index
    %c5248 = arith.constant 5248 : index
    %264 = vector.load %arg0[%c0_70, %c5248] : memref<8x36864xf32, #tpu.memory_space<vmem>>, vector<3x18xf32>
    %265 = vector.extract_strided_slice %258 {offsets = [1, 0], sizes = [1, 18], strides = [1, 1]} : vector<3x18xf32> to vector<1x18xf32>
    %266 = vector.broadcast %265 : vector<1x18xf32> to vector<3x18xf32>
    %267 = arith.mulf %264, %266 : vector<3x18xf32>
    %c0_71 = arith.constant 0 : index
    %c5376 = arith.constant 5376 : index
    %268 = vector.load %arg0[%c0_71, %c5376] : memref<8x36864xf32, #tpu.memory_space<vmem>>, vector<3x18xf32>
    %269 = vector.extract_strided_slice %258 {offsets = [2, 0], sizes = [1, 18], strides = [1, 1]} : vector<3x18xf32> to vector<1x18xf32>
    %270 = vector.broadcast %269 : vector<1x18xf32> to vector<3x18xf32>
    %271 = arith.mulf %268, %270 : vector<3x18xf32>
    %272 = arith.addf %259, %263 : vector<3x18xf32>
    %273 = arith.addf %267, %271 : vector<3x18xf32>
    %274 = arith.addf %272, %273 : vector<3x18xf32>
    %c0_72 = arith.constant 0 : index
    %c5632 = arith.constant 5632 : index
    %275 = vector.load %arg0[%c0_72, %c5632] : memref<8x36864xf32, #tpu.memory_space<vmem>>, vector<3x18xf32>
    %c0_73 = arith.constant 0 : index
    %c5760 = arith.constant 5760 : index
    %276 = vector.load %arg0[%c0_73, %c5760] : memref<8x36864xf32, #tpu.memory_space<vmem>>, vector<3x18xf32>
    %277 = arith.mulf %274, %274 : vector<3x18xf32>
    %278 = tpu.concatenate %274, %277 in 0 : vector<3x18xf32>, vector<3x18xf32> -> vector<6x18xf32>
    %cst_74 = arith.constant dense<0.000000e+00> : vector<6xf32>
    %279 = vector.multi_reduction <add>, %278, %cst_74 [1] : vector<6x18xf32> to vector<6xf32>
    %280 = vector.shape_cast %279 : vector<6xf32> to vector<6x1xf32>
    %cst_75 = arith.constant 0.055555556 : f32
    %281 = vector.broadcast %cst_75 : f32 to vector<6x1xf32>
    %282 = arith.mulf %280, %281 : vector<6x1xf32>
    %283 = vector.extract_strided_slice %282 {offsets = [0, 0], sizes = [3, 1], strides = [1, 1]} : vector<6x1xf32> to vector<3x1xf32>
    %284 = vector.extract_strided_slice %282 {offsets = [3, 0], sizes = [3, 1], strides = [1, 1]} : vector<6x1xf32> to vector<3x1xf32>
    %285 = arith.mulf %283, %283 : vector<3x1xf32>
    %286 = arith.subf %284, %285 : vector<3x1xf32>
    %cst_76 = arith.constant 0.000000e+00 : f32
    %287 = vector.broadcast %cst_76 : f32 to vector<3x1xf32>
    %288 = arith.maximumf %286, %287 : vector<3x1xf32>
    %cst_77 = arith.constant 9.99999974E-6 : f32
    %289 = vector.broadcast %cst_77 : f32 to vector<3x1xf32>
    %290 = arith.addf %288, %289 : vector<3x1xf32>
    %291 = math.rsqrt %290 : vector<3x1xf32>
    %292 = vector.broadcast %291 : vector<3x1xf32> to vector<3x18xf32>
    %293 = arith.mulf %275, %292 : vector<3x18xf32>
    %294 = vector.broadcast %283 : vector<3x1xf32> to vector<3x18xf32>
    %295 = arith.mulf %294, %293 : vector<3x18xf32>
    %296 = arith.subf %276, %295 : vector<3x18xf32>
    %297 = arith.mulf %274, %293 : vector<3x18xf32>
    %298 = arith.addf %297, %296 : vector<3x18xf32>
    %cst_78 = arith.constant 0.000000e+00 : f32
    %299 = vector.broadcast %cst_78 : f32 to vector<3x18xf32>
    %300 = arith.maximumf %298, %299 : vector<3x18xf32>
    %c0_79 = arith.constant 0 : index
    %c6272 = arith.constant 6272 : index
    %301 = vector.load %arg0[%c0_79, %c6272] : memref<8x36864xf32, #tpu.memory_space<vmem>>, vector<6x18xf32>
    %c0_80 = arith.constant 0 : index
    %c5888 = arith.constant 5888 : index
    %302 = vector.load %arg0[%c0_80, %c5888] : memref<8x36864xf32, #tpu.memory_space<vmem>>, vector<6x18xf32>
    %303 = vector.extract_strided_slice %300 {offsets = [0, 0], sizes = [1, 18], strides = [1, 1]} : vector<3x18xf32> to vector<1x18xf32>
    %304 = vector.broadcast %303 : vector<1x18xf32> to vector<6x18xf32>
    %305 = arith.mulf %302, %304 : vector<6x18xf32>
    %c0_81 = arith.constant 0 : index
    %c6016 = arith.constant 6016 : index
    %306 = vector.load %arg0[%c0_81, %c6016] : memref<8x36864xf32, #tpu.memory_space<vmem>>, vector<6x18xf32>
    %307 = vector.extract_strided_slice %300 {offsets = [1, 0], sizes = [1, 18], strides = [1, 1]} : vector<3x18xf32> to vector<1x18xf32>
    %308 = vector.broadcast %307 : vector<1x18xf32> to vector<6x18xf32>
    %309 = arith.mulf %306, %308 : vector<6x18xf32>
    %c0_82 = arith.constant 0 : index
    %c6144 = arith.constant 6144 : index
    %310 = vector.load %arg0[%c0_82, %c6144] : memref<8x36864xf32, #tpu.memory_space<vmem>>, vector<6x18xf32>
    %311 = vector.extract_strided_slice %300 {offsets = [2, 0], sizes = [1, 18], strides = [1, 1]} : vector<3x18xf32> to vector<1x18xf32>
    %312 = vector.broadcast %311 : vector<1x18xf32> to vector<6x18xf32>
    %313 = arith.mulf %310, %312 : vector<6x18xf32>
    %314 = arith.addf %301, %305 : vector<6x18xf32>
    %315 = arith.addf %309, %313 : vector<6x18xf32>
    %316 = arith.addf %314, %315 : vector<6x18xf32>
    %317 = arith.addf %316, %174 : vector<6x18xf32>
    %c0_83 = arith.constant 0 : index
    %c6400 = arith.constant 6400 : index
    %318 = vector.load %arg0[%c0_83, %c6400] : memref<8x36864xf32, #tpu.memory_space<vmem>>, vector<6x18xf32>
    %c0_84 = arith.constant 0 : index
    %c6528 = arith.constant 6528 : index
    %319 = vector.load %arg0[%c0_84, %c6528] : memref<8x36864xf32, #tpu.memory_space<vmem>>, vector<6x18xf32>
    %cst_85 = arith.constant dense<0.000000e+00> : vector<6xf32>
    %320 = vector.multi_reduction <add>, %317, %cst_85 [1] : vector<6x18xf32> to vector<6xf32>
    %321 = vector.shape_cast %320 : vector<6xf32> to vector<6x1xf32>
    %cst_86 = arith.constant 1.800000e+01 : f32
    %322 = vector.broadcast %cst_86 : f32 to vector<6x1xf32>
    %323 = arith.divf %321, %322 : vector<6x1xf32>
    %324 = arith.mulf %317, %317 : vector<6x18xf32>
    %cst_87 = arith.constant dense<0.000000e+00> : vector<6xf32>
    %325 = vector.multi_reduction <add>, %324, %cst_87 [1] : vector<6x18xf32> to vector<6xf32>
    %326 = vector.shape_cast %325 : vector<6xf32> to vector<6x1xf32>
    %cst_88 = arith.constant 1.800000e+01 : f32
    %327 = vector.broadcast %cst_88 : f32 to vector<6x1xf32>
    %328 = arith.divf %326, %327 : vector<6x1xf32>
    %329 = arith.mulf %323, %323 : vector<6x1xf32>
    %330 = arith.subf %328, %329 : vector<6x1xf32>
    %cst_89 = arith.constant 0.000000e+00 : f32
    %331 = vector.broadcast %cst_89 : f32 to vector<6x1xf32>
    %332 = arith.maximumf %330, %331 : vector<6x1xf32>
    %cst_90 = arith.constant 9.99999974E-6 : f32
    %333 = vector.broadcast %cst_90 : f32 to vector<6x1xf32>
    %334 = arith.addf %332, %333 : vector<6x1xf32>
    %335 = math.rsqrt %334 : vector<6x1xf32>
    %336 = vector.broadcast %335 : vector<6x1xf32> to vector<6x18xf32>
    %337 = arith.mulf %318, %336 : vector<6x18xf32>
    %338 = vector.broadcast %323 : vector<6x1xf32> to vector<6x18xf32>
    %339 = arith.mulf %338, %337 : vector<6x18xf32>
    %340 = arith.subf %319, %339 : vector<6x18xf32>
    %341 = arith.mulf %317, %337 : vector<6x18xf32>
    %342 = arith.addf %341, %340 : vector<6x18xf32>
    %cst_91 = arith.constant 0.000000e+00 : f32
    %343 = vector.broadcast %cst_91 : f32 to vector<6x18xf32>
    %344 = arith.maximumf %342, %343 : vector<6x18xf32>
    %c0_92 = arith.constant 0 : index
    %c7424 = arith.constant 7424 : index
    %345 = vector.load %arg0[%c0_92, %c7424] : memref<8x36864xf32, #tpu.memory_space<vmem>>, vector<3x18xf32>
    %c0_93 = arith.constant 0 : index
    %c6656 = arith.constant 6656 : index
    %346 = vector.load %arg0[%c0_93, %c6656] : memref<8x36864xf32, #tpu.memory_space<vmem>>, vector<3x18xf32>
    %347 = vector.extract_strided_slice %344 {offsets = [0, 0], sizes = [1, 18], strides = [1, 1]} : vector<6x18xf32> to vector<1x18xf32>
    %348 = vector.broadcast %347 : vector<1x18xf32> to vector<3x18xf32>
    %349 = arith.mulf %346, %348 : vector<3x18xf32>
    %c0_94 = arith.constant 0 : index
    %c6784 = arith.constant 6784 : index
    %350 = vector.load %arg0[%c0_94, %c6784] : memref<8x36864xf32, #tpu.memory_space<vmem>>, vector<3x18xf32>
    %351 = vector.extract_strided_slice %344 {offsets = [1, 0], sizes = [1, 18], strides = [1, 1]} : vector<6x18xf32> to vector<1x18xf32>
    %352 = vector.broadcast %351 : vector<1x18xf32> to vector<3x18xf32>
    %353 = arith.mulf %350, %352 : vector<3x18xf32>
    %c0_95 = arith.constant 0 : index
    %c6912 = arith.constant 6912 : index
    %354 = vector.load %arg0[%c0_95, %c6912] : memref<8x36864xf32, #tpu.memory_space<vmem>>, vector<3x18xf32>
    %355 = vector.extract_strided_slice %344 {offsets = [2, 0], sizes = [1, 18], strides = [1, 1]} : vector<6x18xf32> to vector<1x18xf32>
    %356 = vector.broadcast %355 : vector<1x18xf32> to vector<3x18xf32>
    %357 = arith.mulf %354, %356 : vector<3x18xf32>
    %c0_96 = arith.constant 0 : index
    %c7040 = arith.constant 7040 : index
    %358 = vector.load %arg0[%c0_96, %c7040] : memref<8x36864xf32, #tpu.memory_space<vmem>>, vector<3x18xf32>
    %359 = vector.extract_strided_slice %344 {offsets = [3, 0], sizes = [1, 18], strides = [1, 1]} : vector<6x18xf32> to vector<1x18xf32>
    %360 = vector.broadcast %359 : vector<1x18xf32> to vector<3x18xf32>
    %361 = arith.mulf %358, %360 : vector<3x18xf32>
    %c0_97 = arith.constant 0 : index
    %c7168 = arith.constant 7168 : index
    %362 = vector.load %arg0[%c0_97, %c7168] : memref<8x36864xf32, #tpu.memory_space<vmem>>, vector<3x18xf32>
    %363 = vector.extract_strided_slice %344 {offsets = [4, 0], sizes = [1, 18], strides = [1, 1]} : vector<6x18xf32> to vector<1x18xf32>
    %364 = vector.broadcast %363 : vector<1x18xf32> to vector<3x18xf32>
    %365 = arith.mulf %362, %364 : vector<3x18xf32>
    %c0_98 = arith.constant 0 : index
    %c7296 = arith.constant 7296 : index
    %366 = vector.load %arg0[%c0_98, %c7296] : memref<8x36864xf32, #tpu.memory_space<vmem>>, vector<3x18xf32>
    %367 = vector.extract_strided_slice %344 {offsets = [5, 0], sizes = [1, 18], strides = [1, 1]} : vector<6x18xf32> to vector<1x18xf32>
    %368 = vector.broadcast %367 : vector<1x18xf32> to vector<3x18xf32>
    %369 = arith.mulf %366, %368 : vector<3x18xf32>
    %370 = arith.addf %345, %349 : vector<3x18xf32>
    %371 = arith.addf %353, %357 : vector<3x18xf32>
    %372 = arith.addf %361, %365 : vector<3x18xf32>
    %373 = arith.addf %370, %371 : vector<3x18xf32>
    %374 = arith.addf %372, %369 : vector<3x18xf32>
    %375 = arith.addf %373, %374 : vector<3x18xf32>
    %c0_99 = arith.constant 0 : index
    %c7552 = arith.constant 7552 : index
    %376 = vector.load %arg0[%c0_99, %c7552] : memref<8x36864xf32, #tpu.memory_space<vmem>>, vector<3x18xf32>
    %c0_100 = arith.constant 0 : index
    %c7680 = arith.constant 7680 : index
    %377 = vector.load %arg0[%c0_100, %c7680] : memref<8x36864xf32, #tpu.memory_space<vmem>>, vector<3x18xf32>
    %378 = arith.mulf %375, %375 : vector<3x18xf32>
    %379 = tpu.concatenate %375, %378 in 0 : vector<3x18xf32>, vector<3x18xf32> -> vector<6x18xf32>
    %cst_101 = arith.constant dense<0.000000e+00> : vector<6xf32>
    %380 = vector.multi_reduction <add>, %379, %cst_101 [1] : vector<6x18xf32> to vector<6xf32>
    %381 = vector.shape_cast %380 : vector<6xf32> to vector<6x1xf32>
    %cst_102 = arith.constant 0.055555556 : f32
    %382 = vector.broadcast %cst_102 : f32 to vector<6x1xf32>
    %383 = arith.mulf %381, %382 : vector<6x1xf32>
    %384 = vector.extract_strided_slice %383 {offsets = [0, 0], sizes = [3, 1], strides = [1, 1]} : vector<6x1xf32> to vector<3x1xf32>
    %385 = vector.extract_strided_slice %383 {offsets = [3, 0], sizes = [3, 1], strides = [1, 1]} : vector<6x1xf32> to vector<3x1xf32>
    %386 = arith.mulf %384, %384 : vector<3x1xf32>
    %387 = arith.subf %385, %386 : vector<3x1xf32>
    %cst_103 = arith.constant 0.000000e+00 : f32
    %388 = vector.broadcast %cst_103 : f32 to vector<3x1xf32>
    %389 = arith.maximumf %387, %388 : vector<3x1xf32>
    %cst_104 = arith.constant 9.99999974E-6 : f32
    %390 = vector.broadcast %cst_104 : f32 to vector<3x1xf32>
    %391 = arith.addf %389, %390 : vector<3x1xf32>
    %392 = math.rsqrt %391 : vector<3x1xf32>
    %393 = vector.broadcast %392 : vector<3x1xf32> to vector<3x18xf32>
    %394 = arith.mulf %376, %393 : vector<3x18xf32>
    %395 = vector.broadcast %384 : vector<3x1xf32> to vector<3x18xf32>
    %396 = arith.mulf %395, %394 : vector<3x18xf32>
    %397 = arith.subf %377, %396 : vector<3x18xf32>
    %398 = arith.mulf %375, %394 : vector<3x18xf32>
    %399 = arith.addf %398, %397 : vector<3x18xf32>
    %cst_105 = arith.constant 0.000000e+00 : f32
    %400 = vector.broadcast %cst_105 : f32 to vector<3x18xf32>
    %401 = arith.maximumf %399, %400 : vector<3x18xf32>
    %c0_106 = arith.constant 0 : index
    %c8192 = arith.constant 8192 : index
    %402 = vector.load %arg0[%c0_106, %c8192] : memref<8x36864xf32, #tpu.memory_space<vmem>>, vector<3x18xf32>
    %c0_107 = arith.constant 0 : index
    %c7808 = arith.constant 7808 : index
    %403 = vector.load %arg0[%c0_107, %c7808] : memref<8x36864xf32, #tpu.memory_space<vmem>>, vector<3x18xf32>
    %404 = vector.extract_strided_slice %401 {offsets = [0, 0], sizes = [1, 18], strides = [1, 1]} : vector<3x18xf32> to vector<1x18xf32>
    %405 = vector.broadcast %404 : vector<1x18xf32> to vector<3x18xf32>
    %406 = arith.mulf %403, %405 : vector<3x18xf32>
    %c0_108 = arith.constant 0 : index
    %c7936 = arith.constant 7936 : index
    %407 = vector.load %arg0[%c0_108, %c7936] : memref<8x36864xf32, #tpu.memory_space<vmem>>, vector<3x18xf32>
    %408 = vector.extract_strided_slice %401 {offsets = [1, 0], sizes = [1, 18], strides = [1, 1]} : vector<3x18xf32> to vector<1x18xf32>
    %409 = vector.broadcast %408 : vector<1x18xf32> to vector<3x18xf32>
    %410 = arith.mulf %407, %409 : vector<3x18xf32>
    %c0_109 = arith.constant 0 : index
    %c8064 = arith.constant 8064 : index
    %411 = vector.load %arg0[%c0_109, %c8064] : memref<8x36864xf32, #tpu.memory_space<vmem>>, vector<3x18xf32>
    %412 = vector.extract_strided_slice %401 {offsets = [2, 0], sizes = [1, 18], strides = [1, 1]} : vector<3x18xf32> to vector<1x18xf32>
    %413 = vector.broadcast %412 : vector<1x18xf32> to vector<3x18xf32>
    %414 = arith.mulf %411, %413 : vector<3x18xf32>
    %415 = arith.addf %402, %406 : vector<3x18xf32>
    %416 = arith.addf %410, %414 : vector<3x18xf32>
    %417 = arith.addf %415, %416 : vector<3x18xf32>
    %c0_110 = arith.constant 0 : index
    %c8320 = arith.constant 8320 : index
    %418 = vector.load %arg0[%c0_110, %c8320] : memref<8x36864xf32, #tpu.memory_space<vmem>>, vector<3x18xf32>
    %c0_111 = arith.constant 0 : index
    %c8448 = arith.constant 8448 : index
    %419 = vector.load %arg0[%c0_111, %c8448] : memref<8x36864xf32, #tpu.memory_space<vmem>>, vector<3x18xf32>
    %420 = arith.mulf %417, %417 : vector<3x18xf32>
    %421 = tpu.concatenate %417, %420 in 0 : vector<3x18xf32>, vector<3x18xf32> -> vector<6x18xf32>
    %cst_112 = arith.constant dense<0.000000e+00> : vector<6xf32>
    %422 = vector.multi_reduction <add>, %421, %cst_112 [1] : vector<6x18xf32> to vector<6xf32>
    %423 = vector.shape_cast %422 : vector<6xf32> to vector<6x1xf32>
    %cst_113 = arith.constant 0.055555556 : f32
    %424 = vector.broadcast %cst_113 : f32 to vector<6x1xf32>
    %425 = arith.mulf %423, %424 : vector<6x1xf32>
    %426 = vector.extract_strided_slice %425 {offsets = [0, 0], sizes = [3, 1], strides = [1, 1]} : vector<6x1xf32> to vector<3x1xf32>
    %427 = vector.extract_strided_slice %425 {offsets = [3, 0], sizes = [3, 1], strides = [1, 1]} : vector<6x1xf32> to vector<3x1xf32>
    %428 = arith.mulf %426, %426 : vector<3x1xf32>
    %429 = arith.subf %427, %428 : vector<3x1xf32>
    %cst_114 = arith.constant 0.000000e+00 : f32
    %430 = vector.broadcast %cst_114 : f32 to vector<3x1xf32>
    %431 = arith.maximumf %429, %430 : vector<3x1xf32>
    %cst_115 = arith.constant 9.99999974E-6 : f32
    %432 = vector.broadcast %cst_115 : f32 to vector<3x1xf32>
    %433 = arith.addf %431, %432 : vector<3x1xf32>
    %434 = math.rsqrt %433 : vector<3x1xf32>
    %435 = vector.broadcast %434 : vector<3x1xf32> to vector<3x18xf32>
    %436 = arith.mulf %418, %435 : vector<3x18xf32>
    %437 = vector.broadcast %426 : vector<3x1xf32> to vector<3x18xf32>
    %438 = arith.mulf %437, %436 : vector<3x18xf32>
    %439 = arith.subf %419, %438 : vector<3x18xf32>
    %440 = arith.mulf %417, %436 : vector<3x18xf32>
    %441 = arith.addf %440, %439 : vector<3x18xf32>
    %cst_116 = arith.constant 0.000000e+00 : f32
    %442 = vector.broadcast %cst_116 : f32 to vector<3x18xf32>
    %443 = arith.maximumf %441, %442 : vector<3x18xf32>
    %c0_117 = arith.constant 0 : index
    %c8960 = arith.constant 8960 : index
    %444 = vector.load %arg0[%c0_117, %c8960] : memref<8x36864xf32, #tpu.memory_space<vmem>>, vector<6x18xf32>
    %c0_118 = arith.constant 0 : index
    %c8576 = arith.constant 8576 : index
    %445 = vector.load %arg0[%c0_118, %c8576] : memref<8x36864xf32, #tpu.memory_space<vmem>>, vector<6x18xf32>
    %446 = vector.extract_strided_slice %443 {offsets = [0, 0], sizes = [1, 18], strides = [1, 1]} : vector<3x18xf32> to vector<1x18xf32>
    %447 = vector.broadcast %446 : vector<1x18xf32> to vector<6x18xf32>
    %448 = arith.mulf %445, %447 : vector<6x18xf32>
    %c0_119 = arith.constant 0 : index
    %c8704 = arith.constant 8704 : index
    %449 = vector.load %arg0[%c0_119, %c8704] : memref<8x36864xf32, #tpu.memory_space<vmem>>, vector<6x18xf32>
    %450 = vector.extract_strided_slice %443 {offsets = [1, 0], sizes = [1, 18], strides = [1, 1]} : vector<3x18xf32> to vector<1x18xf32>
    %451 = vector.broadcast %450 : vector<1x18xf32> to vector<6x18xf32>
    %452 = arith.mulf %449, %451 : vector<6x18xf32>
    %c0_120 = arith.constant 0 : index
    %c8832 = arith.constant 8832 : index
    %453 = vector.load %arg0[%c0_120, %c8832] : memref<8x36864xf32, #tpu.memory_space<vmem>>, vector<6x18xf32>
    %454 = vector.extract_strided_slice %443 {offsets = [2, 0], sizes = [1, 18], strides = [1, 1]} : vector<3x18xf32> to vector<1x18xf32>
    %455 = vector.broadcast %454 : vector<1x18xf32> to vector<6x18xf32>
    %456 = arith.mulf %453, %455 : vector<6x18xf32>
    %457 = arith.addf %444, %448 : vector<6x18xf32>
    %458 = arith.addf %452, %456 : vector<6x18xf32>
    %459 = arith.addf %457, %458 : vector<6x18xf32>
    %c0_121 = arith.constant 0 : index
    %c34944 = arith.constant 34944 : index
    %460 = vector.load %arg0[%c0_121, %c34944] : memref<8x36864xf32, #tpu.memory_space<vmem>>, vector<6x18xf32>
    %c0_122 = arith.constant 0 : index
    %c34176 = arith.constant 34176 : index
    %461 = vector.load %arg0[%c0_122, %c34176] : memref<8x36864xf32, #tpu.memory_space<vmem>>, vector<6x18xf32>
    %462 = vector.extract_strided_slice %317 {offsets = [0, 0], sizes = [1, 18], strides = [1, 1]} : vector<6x18xf32> to vector<1x18xf32>
    %463 = vector.broadcast %462 : vector<1x18xf32> to vector<6x18xf32>
    %464 = arith.mulf %461, %463 : vector<6x18xf32>
    %c0_123 = arith.constant 0 : index
    %c34304 = arith.constant 34304 : index
    %465 = vector.load %arg0[%c0_123, %c34304] : memref<8x36864xf32, #tpu.memory_space<vmem>>, vector<6x18xf32>
    %466 = vector.extract_strided_slice %317 {offsets = [1, 0], sizes = [1, 18], strides = [1, 1]} : vector<6x18xf32> to vector<1x18xf32>
    %467 = vector.broadcast %466 : vector<1x18xf32> to vector<6x18xf32>
    %468 = arith.mulf %465, %467 : vector<6x18xf32>
    %c0_124 = arith.constant 0 : index
    %c34432 = arith.constant 34432 : index
    %469 = vector.load %arg0[%c0_124, %c34432] : memref<8x36864xf32, #tpu.memory_space<vmem>>, vector<6x18xf32>
    %470 = vector.extract_strided_slice %317 {offsets = [2, 0], sizes = [1, 18], strides = [1, 1]} : vector<6x18xf32> to vector<1x18xf32>
    %471 = vector.broadcast %470 : vector<1x18xf32> to vector<6x18xf32>
    %472 = arith.mulf %469, %471 : vector<6x18xf32>
    %c0_125 = arith.constant 0 : index
    %c34560 = arith.constant 34560 : index
    %473 = vector.load %arg0[%c0_125, %c34560] : memref<8x36864xf32, #tpu.memory_space<vmem>>, vector<6x18xf32>
    %474 = vector.extract_strided_slice %317 {offsets = [3, 0], sizes = [1, 18], strides = [1, 1]} : vector<6x18xf32> to vector<1x18xf32>
    %475 = vector.broadcast %474 : vector<1x18xf32> to vector<6x18xf32>
    %476 = arith.mulf %473, %475 : vector<6x18xf32>
    %c0_126 = arith.constant 0 : index
    %c34688 = arith.constant 34688 : index
    %477 = vector.load %arg0[%c0_126, %c34688] : memref<8x36864xf32, #tpu.memory_space<vmem>>, vector<6x18xf32>
    %478 = vector.extract_strided_slice %317 {offsets = [4, 0], sizes = [1, 18], strides = [1, 1]} : vector<6x18xf32> to vector<1x18xf32>
    %479 = vector.broadcast %478 : vector<1x18xf32> to vector<6x18xf32>
    %480 = arith.mulf %477, %479 : vector<6x18xf32>
    %c0_127 = arith.constant 0 : index
    %c34816 = arith.constant 34816 : index
    %481 = vector.load %arg0[%c0_127, %c34816] : memref<8x36864xf32, #tpu.memory_space<vmem>>, vector<6x18xf32>
    %482 = vector.extract_strided_slice %317 {offsets = [5, 0], sizes = [1, 18], strides = [1, 1]} : vector<6x18xf32> to vector<1x18xf32>
    %483 = vector.broadcast %482 : vector<1x18xf32> to vector<6x18xf32>
    %484 = arith.mulf %481, %483 : vector<6x18xf32>
    %485 = arith.addf %460, %464 : vector<6x18xf32>
    %486 = arith.addf %468, %472 : vector<6x18xf32>
    %487 = arith.addf %476, %480 : vector<6x18xf32>
    %488 = arith.addf %485, %486 : vector<6x18xf32>
    %489 = arith.addf %487, %484 : vector<6x18xf32>
    %490 = arith.addf %488, %489 : vector<6x18xf32>
    %491 = arith.addf %459, %490 : vector<6x18xf32>
    %c0_128 = arith.constant 0 : index
    %c9088 = arith.constant 9088 : index
    %492 = vector.load %arg0[%c0_128, %c9088] : memref<8x36864xf32, #tpu.memory_space<vmem>>, vector<6x18xf32>
    %c0_129 = arith.constant 0 : index
    %c9216 = arith.constant 9216 : index
    %493 = vector.load %arg0[%c0_129, %c9216] : memref<8x36864xf32, #tpu.memory_space<vmem>>, vector<6x18xf32>
    %cst_130 = arith.constant dense<0.000000e+00> : vector<6xf32>
    %494 = vector.multi_reduction <add>, %491, %cst_130 [1] : vector<6x18xf32> to vector<6xf32>
    %495 = vector.shape_cast %494 : vector<6xf32> to vector<6x1xf32>
    %cst_131 = arith.constant 1.800000e+01 : f32
    %496 = vector.broadcast %cst_131 : f32 to vector<6x1xf32>
    %497 = arith.divf %495, %496 : vector<6x1xf32>
    %498 = arith.mulf %491, %491 : vector<6x18xf32>
    %cst_132 = arith.constant dense<0.000000e+00> : vector<6xf32>
    %499 = vector.multi_reduction <add>, %498, %cst_132 [1] : vector<6x18xf32> to vector<6xf32>
    %500 = vector.shape_cast %499 : vector<6xf32> to vector<6x1xf32>
    %cst_133 = arith.constant 1.800000e+01 : f32
    %501 = vector.broadcast %cst_133 : f32 to vector<6x1xf32>
    %502 = arith.divf %500, %501 : vector<6x1xf32>
    %503 = arith.mulf %497, %497 : vector<6x1xf32>
    %504 = arith.subf %502, %503 : vector<6x1xf32>
    %cst_134 = arith.constant 0.000000e+00 : f32
    %505 = vector.broadcast %cst_134 : f32 to vector<6x1xf32>
    %506 = arith.maximumf %504, %505 : vector<6x1xf32>
    %cst_135 = arith.constant 9.99999974E-6 : f32
    %507 = vector.broadcast %cst_135 : f32 to vector<6x1xf32>
    %508 = arith.addf %506, %507 : vector<6x1xf32>
    %509 = math.rsqrt %508 : vector<6x1xf32>
    %510 = vector.broadcast %509 : vector<6x1xf32> to vector<6x18xf32>
    %511 = arith.mulf %492, %510 : vector<6x18xf32>
    %512 = vector.broadcast %497 : vector<6x1xf32> to vector<6x18xf32>
    %513 = arith.mulf %512, %511 : vector<6x18xf32>
    %514 = arith.subf %493, %513 : vector<6x18xf32>
    %515 = arith.mulf %491, %511 : vector<6x18xf32>
    %516 = arith.addf %515, %514 : vector<6x18xf32>
    %cst_136 = arith.constant 0.000000e+00 : f32
    %517 = vector.broadcast %cst_136 : f32 to vector<6x18xf32>
    %518 = arith.maximumf %516, %517 : vector<6x18xf32>
    %c0_137 = arith.constant 0 : index
    %c10112 = arith.constant 10112 : index
    %519 = vector.load %arg0[%c0_137, %c10112] : memref<8x36864xf32, #tpu.memory_space<vmem>>, vector<3x18xf32>
    %c0_138 = arith.constant 0 : index
    %c9344 = arith.constant 9344 : index
    %520 = vector.load %arg0[%c0_138, %c9344] : memref<8x36864xf32, #tpu.memory_space<vmem>>, vector<3x18xf32>
    %521 = vector.extract_strided_slice %518 {offsets = [0, 0], sizes = [1, 18], strides = [1, 1]} : vector<6x18xf32> to vector<1x18xf32>
    %522 = vector.broadcast %521 : vector<1x18xf32> to vector<3x18xf32>
    %523 = arith.mulf %520, %522 : vector<3x18xf32>
    %c0_139 = arith.constant 0 : index
    %c9472 = arith.constant 9472 : index
    %524 = vector.load %arg0[%c0_139, %c9472] : memref<8x36864xf32, #tpu.memory_space<vmem>>, vector<3x18xf32>
    %525 = vector.extract_strided_slice %518 {offsets = [1, 0], sizes = [1, 18], strides = [1, 1]} : vector<6x18xf32> to vector<1x18xf32>
    %526 = vector.broadcast %525 : vector<1x18xf32> to vector<3x18xf32>
    %527 = arith.mulf %524, %526 : vector<3x18xf32>
    %c0_140 = arith.constant 0 : index
    %c9600 = arith.constant 9600 : index
    %528 = vector.load %arg0[%c0_140, %c9600] : memref<8x36864xf32, #tpu.memory_space<vmem>>, vector<3x18xf32>
    %529 = vector.extract_strided_slice %518 {offsets = [2, 0], sizes = [1, 18], strides = [1, 1]} : vector<6x18xf32> to vector<1x18xf32>
    %530 = vector.broadcast %529 : vector<1x18xf32> to vector<3x18xf32>
    %531 = arith.mulf %528, %530 : vector<3x18xf32>
    %c0_141 = arith.constant 0 : index
    %c9728 = arith.constant 9728 : index
    %532 = vector.load %arg0[%c0_141, %c9728] : memref<8x36864xf32, #tpu.memory_space<vmem>>, vector<3x18xf32>
    %533 = vector.extract_strided_slice %518 {offsets = [3, 0], sizes = [1, 18], strides = [1, 1]} : vector<6x18xf32> to vector<1x18xf32>
    %534 = vector.broadcast %533 : vector<1x18xf32> to vector<3x18xf32>
    %535 = arith.mulf %532, %534 : vector<3x18xf32>
    %c0_142 = arith.constant 0 : index
    %c9856 = arith.constant 9856 : index
    %536 = vector.load %arg0[%c0_142, %c9856] : memref<8x36864xf32, #tpu.memory_space<vmem>>, vector<3x18xf32>
    %537 = vector.extract_strided_slice %518 {offsets = [4, 0], sizes = [1, 18], strides = [1, 1]} : vector<6x18xf32> to vector<1x18xf32>
    %538 = vector.broadcast %537 : vector<1x18xf32> to vector<3x18xf32>
    %539 = arith.mulf %536, %538 : vector<3x18xf32>
    %c0_143 = arith.constant 0 : index
    %c9984 = arith.constant 9984 : index
    %540 = vector.load %arg0[%c0_143, %c9984] : memref<8x36864xf32, #tpu.memory_space<vmem>>, vector<3x18xf32>
    %541 = vector.extract_strided_slice %518 {offsets = [5, 0], sizes = [1, 18], strides = [1, 1]} : vector<6x18xf32> to vector<1x18xf32>
    %542 = vector.broadcast %541 : vector<1x18xf32> to vector<3x18xf32>
    %543 = arith.mulf %540, %542 : vector<3x18xf32>
    %544 = arith.addf %519, %523 : vector<3x18xf32>
    %545 = arith.addf %527, %531 : vector<3x18xf32>
    %546 = arith.addf %535, %539 : vector<3x18xf32>
    %547 = arith.addf %544, %545 : vector<3x18xf32>
    %548 = arith.addf %546, %543 : vector<3x18xf32>
    %549 = arith.addf %547, %548 : vector<3x18xf32>
    %c0_144 = arith.constant 0 : index
    %c10240 = arith.constant 10240 : index
    %550 = vector.load %arg0[%c0_144, %c10240] : memref<8x36864xf32, #tpu.memory_space<vmem>>, vector<3x18xf32>
    %c0_145 = arith.constant 0 : index
    %c10368 = arith.constant 10368 : index
    %551 = vector.load %arg0[%c0_145, %c10368] : memref<8x36864xf32, #tpu.memory_space<vmem>>, vector<3x18xf32>
    %552 = arith.mulf %549, %549 : vector<3x18xf32>
    %553 = tpu.concatenate %549, %552 in 0 : vector<3x18xf32>, vector<3x18xf32> -> vector<6x18xf32>
    %cst_146 = arith.constant dense<0.000000e+00> : vector<6xf32>
    %554 = vector.multi_reduction <add>, %553, %cst_146 [1] : vector<6x18xf32> to vector<6xf32>
    %555 = vector.shape_cast %554 : vector<6xf32> to vector<6x1xf32>
    %cst_147 = arith.constant 0.055555556 : f32
    %556 = vector.broadcast %cst_147 : f32 to vector<6x1xf32>
    %557 = arith.mulf %555, %556 : vector<6x1xf32>
    %558 = vector.extract_strided_slice %557 {offsets = [0, 0], sizes = [3, 1], strides = [1, 1]} : vector<6x1xf32> to vector<3x1xf32>
    %559 = vector.extract_strided_slice %557 {offsets = [3, 0], sizes = [3, 1], strides = [1, 1]} : vector<6x1xf32> to vector<3x1xf32>
    %560 = arith.mulf %558, %558 : vector<3x1xf32>
    %561 = arith.subf %559, %560 : vector<3x1xf32>
    %cst_148 = arith.constant 0.000000e+00 : f32
    %562 = vector.broadcast %cst_148 : f32 to vector<3x1xf32>
    %563 = arith.maximumf %561, %562 : vector<3x1xf32>
    %cst_149 = arith.constant 9.99999974E-6 : f32
    %564 = vector.broadcast %cst_149 : f32 to vector<3x1xf32>
    %565 = arith.addf %563, %564 : vector<3x1xf32>
    %566 = math.rsqrt %565 : vector<3x1xf32>
    %567 = vector.broadcast %566 : vector<3x1xf32> to vector<3x18xf32>
    %568 = arith.mulf %550, %567 : vector<3x18xf32>
    %569 = vector.broadcast %558 : vector<3x1xf32> to vector<3x18xf32>
    %570 = arith.mulf %569, %568 : vector<3x18xf32>
    %571 = arith.subf %551, %570 : vector<3x18xf32>
    %572 = arith.mulf %549, %568 : vector<3x18xf32>
    %573 = arith.addf %572, %571 : vector<3x18xf32>
    %cst_150 = arith.constant 0.000000e+00 : f32
    %574 = vector.broadcast %cst_150 : f32 to vector<3x18xf32>
    %575 = arith.maximumf %573, %574 : vector<3x18xf32>
    %c0_151 = arith.constant 0 : index
    %c10880 = arith.constant 10880 : index
    %576 = vector.load %arg0[%c0_151, %c10880] : memref<8x36864xf32, #tpu.memory_space<vmem>>, vector<3x18xf32>
    %c0_152 = arith.constant 0 : index
    %c10496 = arith.constant 10496 : index
    %577 = vector.load %arg0[%c0_152, %c10496] : memref<8x36864xf32, #tpu.memory_space<vmem>>, vector<3x18xf32>
    %578 = vector.extract_strided_slice %575 {offsets = [0, 0], sizes = [1, 18], strides = [1, 1]} : vector<3x18xf32> to vector<1x18xf32>
    %579 = vector.broadcast %578 : vector<1x18xf32> to vector<3x18xf32>
    %580 = arith.mulf %577, %579 : vector<3x18xf32>
    %c0_153 = arith.constant 0 : index
    %c10624 = arith.constant 10624 : index
    %581 = vector.load %arg0[%c0_153, %c10624] : memref<8x36864xf32, #tpu.memory_space<vmem>>, vector<3x18xf32>
    %582 = vector.extract_strided_slice %575 {offsets = [1, 0], sizes = [1, 18], strides = [1, 1]} : vector<3x18xf32> to vector<1x18xf32>
    %583 = vector.broadcast %582 : vector<1x18xf32> to vector<3x18xf32>
    %584 = arith.mulf %581, %583 : vector<3x18xf32>
    %c0_154 = arith.constant 0 : index
    %c10752 = arith.constant 10752 : index
    %585 = vector.load %arg0[%c0_154, %c10752] : memref<8x36864xf32, #tpu.memory_space<vmem>>, vector<3x18xf32>
    %586 = vector.extract_strided_slice %575 {offsets = [2, 0], sizes = [1, 18], strides = [1, 1]} : vector<3x18xf32> to vector<1x18xf32>
    %587 = vector.broadcast %586 : vector<1x18xf32> to vector<3x18xf32>
    %588 = arith.mulf %585, %587 : vector<3x18xf32>
    %589 = arith.addf %576, %580 : vector<3x18xf32>
    %590 = arith.addf %584, %588 : vector<3x18xf32>
    %591 = arith.addf %589, %590 : vector<3x18xf32>
    %c0_155 = arith.constant 0 : index
    %c11008 = arith.constant 11008 : index
    %592 = vector.load %arg0[%c0_155, %c11008] : memref<8x36864xf32, #tpu.memory_space<vmem>>, vector<3x18xf32>
    %c0_156 = arith.constant 0 : index
    %c11136 = arith.constant 11136 : index
    %593 = vector.load %arg0[%c0_156, %c11136] : memref<8x36864xf32, #tpu.memory_space<vmem>>, vector<3x18xf32>
    %594 = arith.mulf %591, %591 : vector<3x18xf32>
    %595 = tpu.concatenate %591, %594 in 0 : vector<3x18xf32>, vector<3x18xf32> -> vector<6x18xf32>
    %cst_157 = arith.constant dense<0.000000e+00> : vector<6xf32>
    %596 = vector.multi_reduction <add>, %595, %cst_157 [1] : vector<6x18xf32> to vector<6xf32>
    %597 = vector.shape_cast %596 : vector<6xf32> to vector<6x1xf32>
    %cst_158 = arith.constant 0.055555556 : f32
    %598 = vector.broadcast %cst_158 : f32 to vector<6x1xf32>
    %599 = arith.mulf %597, %598 : vector<6x1xf32>
    %600 = vector.extract_strided_slice %599 {offsets = [0, 0], sizes = [3, 1], strides = [1, 1]} : vector<6x1xf32> to vector<3x1xf32>
    %601 = vector.extract_strided_slice %599 {offsets = [3, 0], sizes = [3, 1], strides = [1, 1]} : vector<6x1xf32> to vector<3x1xf32>
    %602 = arith.mulf %600, %600 : vector<3x1xf32>
    %603 = arith.subf %601, %602 : vector<3x1xf32>
    %cst_159 = arith.constant 0.000000e+00 : f32
    %604 = vector.broadcast %cst_159 : f32 to vector<3x1xf32>
    %605 = arith.maximumf %603, %604 : vector<3x1xf32>
    %cst_160 = arith.constant 9.99999974E-6 : f32
    %606 = vector.broadcast %cst_160 : f32 to vector<3x1xf32>
    %607 = arith.addf %605, %606 : vector<3x1xf32>
    %608 = math.rsqrt %607 : vector<3x1xf32>
    %609 = vector.broadcast %608 : vector<3x1xf32> to vector<3x18xf32>
    %610 = arith.mulf %592, %609 : vector<3x18xf32>
    %611 = vector.broadcast %600 : vector<3x1xf32> to vector<3x18xf32>
    %612 = arith.mulf %611, %610 : vector<3x18xf32>
    %613 = arith.subf %593, %612 : vector<3x18xf32>
    %614 = arith.mulf %591, %610 : vector<3x18xf32>
    %615 = arith.addf %614, %613 : vector<3x18xf32>
    %cst_161 = arith.constant 0.000000e+00 : f32
    %616 = vector.broadcast %cst_161 : f32 to vector<3x18xf32>
    %617 = arith.maximumf %615, %616 : vector<3x18xf32>
    %c0_162 = arith.constant 0 : index
    %c11648 = arith.constant 11648 : index
    %618 = vector.load %arg0[%c0_162, %c11648] : memref<8x36864xf32, #tpu.memory_space<vmem>>, vector<6x18xf32>
    %c0_163 = arith.constant 0 : index
    %c11264 = arith.constant 11264 : index
    %619 = vector.load %arg0[%c0_163, %c11264] : memref<8x36864xf32, #tpu.memory_space<vmem>>, vector<6x18xf32>
    %620 = vector.extract_strided_slice %617 {offsets = [0, 0], sizes = [1, 18], strides = [1, 1]} : vector<3x18xf32> to vector<1x18xf32>
    %621 = vector.broadcast %620 : vector<1x18xf32> to vector<6x18xf32>
    %622 = arith.mulf %619, %621 : vector<6x18xf32>
    %c0_164 = arith.constant 0 : index
    %c11392 = arith.constant 11392 : index
    %623 = vector.load %arg0[%c0_164, %c11392] : memref<8x36864xf32, #tpu.memory_space<vmem>>, vector<6x18xf32>
    %624 = vector.extract_strided_slice %617 {offsets = [1, 0], sizes = [1, 18], strides = [1, 1]} : vector<3x18xf32> to vector<1x18xf32>
    %625 = vector.broadcast %624 : vector<1x18xf32> to vector<6x18xf32>
    %626 = arith.mulf %623, %625 : vector<6x18xf32>
    %c0_165 = arith.constant 0 : index
    %c11520 = arith.constant 11520 : index
    %627 = vector.load %arg0[%c0_165, %c11520] : memref<8x36864xf32, #tpu.memory_space<vmem>>, vector<6x18xf32>
    %628 = vector.extract_strided_slice %617 {offsets = [2, 0], sizes = [1, 18], strides = [1, 1]} : vector<3x18xf32> to vector<1x18xf32>
    %629 = vector.broadcast %628 : vector<1x18xf32> to vector<6x18xf32>
    %630 = arith.mulf %627, %629 : vector<6x18xf32>
    %631 = arith.addf %618, %622 : vector<6x18xf32>
    %632 = arith.addf %626, %630 : vector<6x18xf32>
    %633 = arith.addf %631, %632 : vector<6x18xf32>
    %634 = arith.addf %633, %491 : vector<6x18xf32>
    %c0_166 = arith.constant 0 : index
    %c11776 = arith.constant 11776 : index
    %635 = vector.load %arg0[%c0_166, %c11776] : memref<8x36864xf32, #tpu.memory_space<vmem>>, vector<6x18xf32>
    %c0_167 = arith.constant 0 : index
    %c11904 = arith.constant 11904 : index
    %636 = vector.load %arg0[%c0_167, %c11904] : memref<8x36864xf32, #tpu.memory_space<vmem>>, vector<6x18xf32>
    %cst_168 = arith.constant dense<0.000000e+00> : vector<6xf32>
    %637 = vector.multi_reduction <add>, %634, %cst_168 [1] : vector<6x18xf32> to vector<6xf32>
    %638 = vector.shape_cast %637 : vector<6xf32> to vector<6x1xf32>
    %cst_169 = arith.constant 1.800000e+01 : f32
    %639 = vector.broadcast %cst_169 : f32 to vector<6x1xf32>
    %640 = arith.divf %638, %639 : vector<6x1xf32>
    %641 = arith.mulf %634, %634 : vector<6x18xf32>
    %cst_170 = arith.constant dense<0.000000e+00> : vector<6xf32>
    %642 = vector.multi_reduction <add>, %641, %cst_170 [1] : vector<6x18xf32> to vector<6xf32>
    %643 = vector.shape_cast %642 : vector<6xf32> to vector<6x1xf32>
    %cst_171 = arith.constant 1.800000e+01 : f32
    %644 = vector.broadcast %cst_171 : f32 to vector<6x1xf32>
    %645 = arith.divf %643, %644 : vector<6x1xf32>
    %646 = arith.mulf %640, %640 : vector<6x1xf32>
    %647 = arith.subf %645, %646 : vector<6x1xf32>
    %cst_172 = arith.constant 0.000000e+00 : f32
    %648 = vector.broadcast %cst_172 : f32 to vector<6x1xf32>
    %649 = arith.maximumf %647, %648 : vector<6x1xf32>
    %cst_173 = arith.constant 9.99999974E-6 : f32
    %650 = vector.broadcast %cst_173 : f32 to vector<6x1xf32>
    %651 = arith.addf %649, %650 : vector<6x1xf32>
    %652 = math.rsqrt %651 : vector<6x1xf32>
    %653 = vector.broadcast %652 : vector<6x1xf32> to vector<6x18xf32>
    %654 = arith.mulf %635, %653 : vector<6x18xf32>
    %655 = vector.broadcast %640 : vector<6x1xf32> to vector<6x18xf32>
    %656 = arith.mulf %655, %654 : vector<6x18xf32>
    %657 = arith.subf %636, %656 : vector<6x18xf32>
    %658 = arith.mulf %634, %654 : vector<6x18xf32>
    %659 = arith.addf %658, %657 : vector<6x18xf32>
    %cst_174 = arith.constant 0.000000e+00 : f32
    %660 = vector.broadcast %cst_174 : f32 to vector<6x18xf32>
    %661 = arith.maximumf %659, %660 : vector<6x18xf32>
    %c0_175 = arith.constant 0 : index
    %c12800 = arith.constant 12800 : index
    %662 = vector.load %arg0[%c0_175, %c12800] : memref<8x36864xf32, #tpu.memory_space<vmem>>, vector<3x18xf32>
    %c0_176 = arith.constant 0 : index
    %c12032 = arith.constant 12032 : index
    %663 = vector.load %arg0[%c0_176, %c12032] : memref<8x36864xf32, #tpu.memory_space<vmem>>, vector<3x18xf32>
    %664 = vector.extract_strided_slice %661 {offsets = [0, 0], sizes = [1, 18], strides = [1, 1]} : vector<6x18xf32> to vector<1x18xf32>
    %665 = vector.broadcast %664 : vector<1x18xf32> to vector<3x18xf32>
    %666 = arith.mulf %663, %665 : vector<3x18xf32>
    %c0_177 = arith.constant 0 : index
    %c12160 = arith.constant 12160 : index
    %667 = vector.load %arg0[%c0_177, %c12160] : memref<8x36864xf32, #tpu.memory_space<vmem>>, vector<3x18xf32>
    %668 = vector.extract_strided_slice %661 {offsets = [1, 0], sizes = [1, 18], strides = [1, 1]} : vector<6x18xf32> to vector<1x18xf32>
    %669 = vector.broadcast %668 : vector<1x18xf32> to vector<3x18xf32>
    %670 = arith.mulf %667, %669 : vector<3x18xf32>
    %c0_178 = arith.constant 0 : index
    %c12288 = arith.constant 12288 : index
    %671 = vector.load %arg0[%c0_178, %c12288] : memref<8x36864xf32, #tpu.memory_space<vmem>>, vector<3x18xf32>
    %672 = vector.extract_strided_slice %661 {offsets = [2, 0], sizes = [1, 18], strides = [1, 1]} : vector<6x18xf32> to vector<1x18xf32>
    %673 = vector.broadcast %672 : vector<1x18xf32> to vector<3x18xf32>
    %674 = arith.mulf %671, %673 : vector<3x18xf32>
    %c0_179 = arith.constant 0 : index
    %c12416 = arith.constant 12416 : index
    %675 = vector.load %arg0[%c0_179, %c12416] : memref<8x36864xf32, #tpu.memory_space<vmem>>, vector<3x18xf32>
    %676 = vector.extract_strided_slice %661 {offsets = [3, 0], sizes = [1, 18], strides = [1, 1]} : vector<6x18xf32> to vector<1x18xf32>
    %677 = vector.broadcast %676 : vector<1x18xf32> to vector<3x18xf32>
    %678 = arith.mulf %675, %677 : vector<3x18xf32>
    %c0_180 = arith.constant 0 : index
    %c12544 = arith.constant 12544 : index
    %679 = vector.load %arg0[%c0_180, %c12544] : memref<8x36864xf32, #tpu.memory_space<vmem>>, vector<3x18xf32>
    %680 = vector.extract_strided_slice %661 {offsets = [4, 0], sizes = [1, 18], strides = [1, 1]} : vector<6x18xf32> to vector<1x18xf32>
    %681 = vector.broadcast %680 : vector<1x18xf32> to vector<3x18xf32>
    %682 = arith.mulf %679, %681 : vector<3x18xf32>
    %c0_181 = arith.constant 0 : index
    %c12672 = arith.constant 12672 : index
    %683 = vector.load %arg0[%c0_181, %c12672] : memref<8x36864xf32, #tpu.memory_space<vmem>>, vector<3x18xf32>
    %684 = vector.extract_strided_slice %661 {offsets = [5, 0], sizes = [1, 18], strides = [1, 1]} : vector<6x18xf32> to vector<1x18xf32>
    %685 = vector.broadcast %684 : vector<1x18xf32> to vector<3x18xf32>
    %686 = arith.mulf %683, %685 : vector<3x18xf32>
    %687 = arith.addf %662, %666 : vector<3x18xf32>
    %688 = arith.addf %670, %674 : vector<3x18xf32>
    %689 = arith.addf %678, %682 : vector<3x18xf32>
    %690 = arith.addf %687, %688 : vector<3x18xf32>
    %691 = arith.addf %689, %686 : vector<3x18xf32>
    %692 = arith.addf %690, %691 : vector<3x18xf32>
    %c0_182 = arith.constant 0 : index
    %c12928 = arith.constant 12928 : index
    %693 = vector.load %arg0[%c0_182, %c12928] : memref<8x36864xf32, #tpu.memory_space<vmem>>, vector<3x18xf32>
    %c0_183 = arith.constant 0 : index
    %c13056 = arith.constant 13056 : index
    %694 = vector.load %arg0[%c0_183, %c13056] : memref<8x36864xf32, #tpu.memory_space<vmem>>, vector<3x18xf32>
    %695 = arith.mulf %692, %692 : vector<3x18xf32>
    %696 = tpu.concatenate %692, %695 in 0 : vector<3x18xf32>, vector<3x18xf32> -> vector<6x18xf32>
    %cst_184 = arith.constant dense<0.000000e+00> : vector<6xf32>
    %697 = vector.multi_reduction <add>, %696, %cst_184 [1] : vector<6x18xf32> to vector<6xf32>
    %698 = vector.shape_cast %697 : vector<6xf32> to vector<6x1xf32>
    %cst_185 = arith.constant 0.055555556 : f32
    %699 = vector.broadcast %cst_185 : f32 to vector<6x1xf32>
    %700 = arith.mulf %698, %699 : vector<6x1xf32>
    %701 = vector.extract_strided_slice %700 {offsets = [0, 0], sizes = [3, 1], strides = [1, 1]} : vector<6x1xf32> to vector<3x1xf32>
    %702 = vector.extract_strided_slice %700 {offsets = [3, 0], sizes = [3, 1], strides = [1, 1]} : vector<6x1xf32> to vector<3x1xf32>
    %703 = arith.mulf %701, %701 : vector<3x1xf32>
    %704 = arith.subf %702, %703 : vector<3x1xf32>
    %cst_186 = arith.constant 0.000000e+00 : f32
    %705 = vector.broadcast %cst_186 : f32 to vector<3x1xf32>
    %706 = arith.maximumf %704, %705 : vector<3x1xf32>
    %cst_187 = arith.constant 9.99999974E-6 : f32
    %707 = vector.broadcast %cst_187 : f32 to vector<3x1xf32>
    %708 = arith.addf %706, %707 : vector<3x1xf32>
    %709 = math.rsqrt %708 : vector<3x1xf32>
    %710 = vector.broadcast %709 : vector<3x1xf32> to vector<3x18xf32>
    %711 = arith.mulf %693, %710 : vector<3x18xf32>
    %712 = vector.broadcast %701 : vector<3x1xf32> to vector<3x18xf32>
    %713 = arith.mulf %712, %711 : vector<3x18xf32>
    %714 = arith.subf %694, %713 : vector<3x18xf32>
    %715 = arith.mulf %692, %711 : vector<3x18xf32>
    %716 = arith.addf %715, %714 : vector<3x18xf32>
    %cst_188 = arith.constant 0.000000e+00 : f32
    %717 = vector.broadcast %cst_188 : f32 to vector<3x18xf32>
    %718 = arith.maximumf %716, %717 : vector<3x18xf32>
    %c0_189 = arith.constant 0 : index
    %c13568 = arith.constant 13568 : index
    %719 = vector.load %arg0[%c0_189, %c13568] : memref<8x36864xf32, #tpu.memory_space<vmem>>, vector<3x18xf32>
    %c0_190 = arith.constant 0 : index
    %c13184 = arith.constant 13184 : index
    %720 = vector.load %arg0[%c0_190, %c13184] : memref<8x36864xf32, #tpu.memory_space<vmem>>, vector<3x18xf32>
    %721 = vector.extract_strided_slice %718 {offsets = [0, 0], sizes = [1, 18], strides = [1, 1]} : vector<3x18xf32> to vector<1x18xf32>
    %722 = vector.broadcast %721 : vector<1x18xf32> to vector<3x18xf32>
    %723 = arith.mulf %720, %722 : vector<3x18xf32>
    %c0_191 = arith.constant 0 : index
    %c13312 = arith.constant 13312 : index
    %724 = vector.load %arg0[%c0_191, %c13312] : memref<8x36864xf32, #tpu.memory_space<vmem>>, vector<3x18xf32>
    %725 = vector.extract_strided_slice %718 {offsets = [1, 0], sizes = [1, 18], strides = [1, 1]} : vector<3x18xf32> to vector<1x18xf32>
    %726 = vector.broadcast %725 : vector<1x18xf32> to vector<3x18xf32>
    %727 = arith.mulf %724, %726 : vector<3x18xf32>
    %c0_192 = arith.constant 0 : index
    %c13440 = arith.constant 13440 : index
    %728 = vector.load %arg0[%c0_192, %c13440] : memref<8x36864xf32, #tpu.memory_space<vmem>>, vector<3x18xf32>
    %729 = vector.extract_strided_slice %718 {offsets = [2, 0], sizes = [1, 18], strides = [1, 1]} : vector<3x18xf32> to vector<1x18xf32>
    %730 = vector.broadcast %729 : vector<1x18xf32> to vector<3x18xf32>
    %731 = arith.mulf %728, %730 : vector<3x18xf32>
    %732 = arith.addf %719, %723 : vector<3x18xf32>
    %733 = arith.addf %727, %731 : vector<3x18xf32>
    %734 = arith.addf %732, %733 : vector<3x18xf32>
    %c0_193 = arith.constant 0 : index
    %c13696 = arith.constant 13696 : index
    %735 = vector.load %arg0[%c0_193, %c13696] : memref<8x36864xf32, #tpu.memory_space<vmem>>, vector<3x18xf32>
    %c0_194 = arith.constant 0 : index
    %c13824 = arith.constant 13824 : index
    %736 = vector.load %arg0[%c0_194, %c13824] : memref<8x36864xf32, #tpu.memory_space<vmem>>, vector<3x18xf32>
    %737 = arith.mulf %734, %734 : vector<3x18xf32>
    %738 = tpu.concatenate %734, %737 in 0 : vector<3x18xf32>, vector<3x18xf32> -> vector<6x18xf32>
    %cst_195 = arith.constant dense<0.000000e+00> : vector<6xf32>
    %739 = vector.multi_reduction <add>, %738, %cst_195 [1] : vector<6x18xf32> to vector<6xf32>
    %740 = vector.shape_cast %739 : vector<6xf32> to vector<6x1xf32>
    %cst_196 = arith.constant 0.055555556 : f32
    %741 = vector.broadcast %cst_196 : f32 to vector<6x1xf32>
    %742 = arith.mulf %740, %741 : vector<6x1xf32>
    %743 = vector.extract_strided_slice %742 {offsets = [0, 0], sizes = [3, 1], strides = [1, 1]} : vector<6x1xf32> to vector<3x1xf32>
    %744 = vector.extract_strided_slice %742 {offsets = [3, 0], sizes = [3, 1], strides = [1, 1]} : vector<6x1xf32> to vector<3x1xf32>
    %745 = arith.mulf %743, %743 : vector<3x1xf32>
    %746 = arith.subf %744, %745 : vector<3x1xf32>
    %cst_197 = arith.constant 0.000000e+00 : f32
    %747 = vector.broadcast %cst_197 : f32 to vector<3x1xf32>
    %748 = arith.maximumf %746, %747 : vector<3x1xf32>
    %cst_198 = arith.constant 9.99999974E-6 : f32
    %749 = vector.broadcast %cst_198 : f32 to vector<3x1xf32>
    %750 = arith.addf %748, %749 : vector<3x1xf32>
    %751 = math.rsqrt %750 : vector<3x1xf32>
    %752 = vector.broadcast %751 : vector<3x1xf32> to vector<3x18xf32>
    %753 = arith.mulf %735, %752 : vector<3x18xf32>
    %754 = vector.broadcast %743 : vector<3x1xf32> to vector<3x18xf32>
    %755 = arith.mulf %754, %753 : vector<3x18xf32>
    %756 = arith.subf %736, %755 : vector<3x18xf32>
    %757 = arith.mulf %734, %753 : vector<3x18xf32>
    %758 = arith.addf %757, %756 : vector<3x18xf32>
    %cst_199 = arith.constant 0.000000e+00 : f32
    %759 = vector.broadcast %cst_199 : f32 to vector<3x18xf32>
    %760 = arith.maximumf %758, %759 : vector<3x18xf32>
    %c0_200 = arith.constant 0 : index
    %c14336 = arith.constant 14336 : index
    %761 = vector.load %arg0[%c0_200, %c14336] : memref<8x36864xf32, #tpu.memory_space<vmem>>, vector<6x18xf32>
    %c0_201 = arith.constant 0 : index
    %c13952 = arith.constant 13952 : index
    %762 = vector.load %arg0[%c0_201, %c13952] : memref<8x36864xf32, #tpu.memory_space<vmem>>, vector<6x18xf32>
    %763 = vector.extract_strided_slice %760 {offsets = [0, 0], sizes = [1, 18], strides = [1, 1]} : vector<3x18xf32> to vector<1x18xf32>
    %764 = vector.broadcast %763 : vector<1x18xf32> to vector<6x18xf32>
    %765 = arith.mulf %762, %764 : vector<6x18xf32>
    %c0_202 = arith.constant 0 : index
    %c14080 = arith.constant 14080 : index
    %766 = vector.load %arg0[%c0_202, %c14080] : memref<8x36864xf32, #tpu.memory_space<vmem>>, vector<6x18xf32>
    %767 = vector.extract_strided_slice %760 {offsets = [1, 0], sizes = [1, 18], strides = [1, 1]} : vector<3x18xf32> to vector<1x18xf32>
    %768 = vector.broadcast %767 : vector<1x18xf32> to vector<6x18xf32>
    %769 = arith.mulf %766, %768 : vector<6x18xf32>
    %c0_203 = arith.constant 0 : index
    %c14208 = arith.constant 14208 : index
    %770 = vector.load %arg0[%c0_203, %c14208] : memref<8x36864xf32, #tpu.memory_space<vmem>>, vector<6x18xf32>
    %771 = vector.extract_strided_slice %760 {offsets = [2, 0], sizes = [1, 18], strides = [1, 1]} : vector<3x18xf32> to vector<1x18xf32>
    %772 = vector.broadcast %771 : vector<1x18xf32> to vector<6x18xf32>
    %773 = arith.mulf %770, %772 : vector<6x18xf32>
    %774 = arith.addf %761, %765 : vector<6x18xf32>
    %775 = arith.addf %769, %773 : vector<6x18xf32>
    %776 = arith.addf %774, %775 : vector<6x18xf32>
    %c0_204 = arith.constant 0 : index
    %c35840 = arith.constant 35840 : index
    %777 = vector.load %arg0[%c0_204, %c35840] : memref<8x36864xf32, #tpu.memory_space<vmem>>, vector<6x18xf32>
    %c0_205 = arith.constant 0 : index
    %c35072 = arith.constant 35072 : index
    %778 = vector.load %arg0[%c0_205, %c35072] : memref<8x36864xf32, #tpu.memory_space<vmem>>, vector<6x18xf32>
    %779 = vector.extract_strided_slice %634 {offsets = [0, 0], sizes = [1, 18], strides = [1, 1]} : vector<6x18xf32> to vector<1x18xf32>
    %780 = vector.broadcast %779 : vector<1x18xf32> to vector<6x18xf32>
    %781 = arith.mulf %778, %780 : vector<6x18xf32>
    %c0_206 = arith.constant 0 : index
    %c35200 = arith.constant 35200 : index
    %782 = vector.load %arg0[%c0_206, %c35200] : memref<8x36864xf32, #tpu.memory_space<vmem>>, vector<6x18xf32>
    %783 = vector.extract_strided_slice %634 {offsets = [1, 0], sizes = [1, 18], strides = [1, 1]} : vector<6x18xf32> to vector<1x18xf32>
    %784 = vector.broadcast %783 : vector<1x18xf32> to vector<6x18xf32>
    %785 = arith.mulf %782, %784 : vector<6x18xf32>
    %c0_207 = arith.constant 0 : index
    %c35328 = arith.constant 35328 : index
    %786 = vector.load %arg0[%c0_207, %c35328] : memref<8x36864xf32, #tpu.memory_space<vmem>>, vector<6x18xf32>
    %787 = vector.extract_strided_slice %634 {offsets = [2, 0], sizes = [1, 18], strides = [1, 1]} : vector<6x18xf32> to vector<1x18xf32>
    %788 = vector.broadcast %787 : vector<1x18xf32> to vector<6x18xf32>
    %789 = arith.mulf %786, %788 : vector<6x18xf32>
    %c0_208 = arith.constant 0 : index
    %c35456 = arith.constant 35456 : index
    %790 = vector.load %arg0[%c0_208, %c35456] : memref<8x36864xf32, #tpu.memory_space<vmem>>, vector<6x18xf32>
    %791 = vector.extract_strided_slice %634 {offsets = [3, 0], sizes = [1, 18], strides = [1, 1]} : vector<6x18xf32> to vector<1x18xf32>
    %792 = vector.broadcast %791 : vector<1x18xf32> to vector<6x18xf32>
    %793 = arith.mulf %790, %792 : vector<6x18xf32>
    %c0_209 = arith.constant 0 : index
    %c35584 = arith.constant 35584 : index
    %794 = vector.load %arg0[%c0_209, %c35584] : memref<8x36864xf32, #tpu.memory_space<vmem>>, vector<6x18xf32>
    %795 = vector.extract_strided_slice %634 {offsets = [4, 0], sizes = [1, 18], strides = [1, 1]} : vector<6x18xf32> to vector<1x18xf32>
    %796 = vector.broadcast %795 : vector<1x18xf32> to vector<6x18xf32>
    %797 = arith.mulf %794, %796 : vector<6x18xf32>
    %c0_210 = arith.constant 0 : index
    %c35712 = arith.constant 35712 : index
    %798 = vector.load %arg0[%c0_210, %c35712] : memref<8x36864xf32, #tpu.memory_space<vmem>>, vector<6x18xf32>
    %799 = vector.extract_strided_slice %634 {offsets = [5, 0], sizes = [1, 18], strides = [1, 1]} : vector<6x18xf32> to vector<1x18xf32>
    %800 = vector.broadcast %799 : vector<1x18xf32> to vector<6x18xf32>
    %801 = arith.mulf %798, %800 : vector<6x18xf32>
    %802 = arith.addf %777, %781 : vector<6x18xf32>
    %803 = arith.addf %785, %789 : vector<6x18xf32>
    %804 = arith.addf %793, %797 : vector<6x18xf32>
    %805 = arith.addf %802, %803 : vector<6x18xf32>
    %806 = arith.addf %804, %801 : vector<6x18xf32>
    %807 = arith.addf %805, %806 : vector<6x18xf32>
    %808 = arith.addf %776, %807 : vector<6x18xf32>
    %c0_211 = arith.constant 0 : index
    %c14464 = arith.constant 14464 : index
    %809 = vector.load %arg0[%c0_211, %c14464] : memref<8x36864xf32, #tpu.memory_space<vmem>>, vector<6x18xf32>
    %c0_212 = arith.constant 0 : index
    %c14592 = arith.constant 14592 : index
    %810 = vector.load %arg0[%c0_212, %c14592] : memref<8x36864xf32, #tpu.memory_space<vmem>>, vector<6x18xf32>
    %cst_213 = arith.constant dense<0.000000e+00> : vector<6xf32>
    %811 = vector.multi_reduction <add>, %808, %cst_213 [1] : vector<6x18xf32> to vector<6xf32>
    %812 = vector.shape_cast %811 : vector<6xf32> to vector<6x1xf32>
    %cst_214 = arith.constant 1.800000e+01 : f32
    %813 = vector.broadcast %cst_214 : f32 to vector<6x1xf32>
    %814 = arith.divf %812, %813 : vector<6x1xf32>
    %815 = arith.mulf %808, %808 : vector<6x18xf32>
    %cst_215 = arith.constant dense<0.000000e+00> : vector<6xf32>
    %816 = vector.multi_reduction <add>, %815, %cst_215 [1] : vector<6x18xf32> to vector<6xf32>
    %817 = vector.shape_cast %816 : vector<6xf32> to vector<6x1xf32>
    %cst_216 = arith.constant 1.800000e+01 : f32
    %818 = vector.broadcast %cst_216 : f32 to vector<6x1xf32>
    %819 = arith.divf %817, %818 : vector<6x1xf32>
    %820 = arith.mulf %814, %814 : vector<6x1xf32>
    %821 = arith.subf %819, %820 : vector<6x1xf32>
    %cst_217 = arith.constant 0.000000e+00 : f32
    %822 = vector.broadcast %cst_217 : f32 to vector<6x1xf32>
    %823 = arith.maximumf %821, %822 : vector<6x1xf32>
    %cst_218 = arith.constant 9.99999974E-6 : f32
    %824 = vector.broadcast %cst_218 : f32 to vector<6x1xf32>
    %825 = arith.addf %823, %824 : vector<6x1xf32>
    %826 = math.rsqrt %825 : vector<6x1xf32>
    %827 = vector.broadcast %826 : vector<6x1xf32> to vector<6x18xf32>
    %828 = arith.mulf %809, %827 : vector<6x18xf32>
    %829 = vector.broadcast %814 : vector<6x1xf32> to vector<6x18xf32>
    %830 = arith.mulf %829, %828 : vector<6x18xf32>
    %831 = arith.subf %810, %830 : vector<6x18xf32>
    %832 = arith.mulf %808, %828 : vector<6x18xf32>
    %833 = arith.addf %832, %831 : vector<6x18xf32>
    %cst_219 = arith.constant 0.000000e+00 : f32
    %834 = vector.broadcast %cst_219 : f32 to vector<6x18xf32>
    %835 = arith.maximumf %833, %834 : vector<6x18xf32>
    %c0_220 = arith.constant 0 : index
    %c15488 = arith.constant 15488 : index
    %836 = vector.load %arg0[%c0_220, %c15488] : memref<8x36864xf32, #tpu.memory_space<vmem>>, vector<3x18xf32>
    %c0_221 = arith.constant 0 : index
    %c14720 = arith.constant 14720 : index
    %837 = vector.load %arg0[%c0_221, %c14720] : memref<8x36864xf32, #tpu.memory_space<vmem>>, vector<3x18xf32>
    %838 = vector.extract_strided_slice %835 {offsets = [0, 0], sizes = [1, 18], strides = [1, 1]} : vector<6x18xf32> to vector<1x18xf32>
    %839 = vector.broadcast %838 : vector<1x18xf32> to vector<3x18xf32>
    %840 = arith.mulf %837, %839 : vector<3x18xf32>
    %c0_222 = arith.constant 0 : index
    %c14848 = arith.constant 14848 : index
    %841 = vector.load %arg0[%c0_222, %c14848] : memref<8x36864xf32, #tpu.memory_space<vmem>>, vector<3x18xf32>
    %842 = vector.extract_strided_slice %835 {offsets = [1, 0], sizes = [1, 18], strides = [1, 1]} : vector<6x18xf32> to vector<1x18xf32>
    %843 = vector.broadcast %842 : vector<1x18xf32> to vector<3x18xf32>
    %844 = arith.mulf %841, %843 : vector<3x18xf32>
    %c0_223 = arith.constant 0 : index
    %c14976 = arith.constant 14976 : index
    %845 = vector.load %arg0[%c0_223, %c14976] : memref<8x36864xf32, #tpu.memory_space<vmem>>, vector<3x18xf32>
    %846 = vector.extract_strided_slice %835 {offsets = [2, 0], sizes = [1, 18], strides = [1, 1]} : vector<6x18xf32> to vector<1x18xf32>
    %847 = vector.broadcast %846 : vector<1x18xf32> to vector<3x18xf32>
    %848 = arith.mulf %845, %847 : vector<3x18xf32>
    %c0_224 = arith.constant 0 : index
    %c15104 = arith.constant 15104 : index
    %849 = vector.load %arg0[%c0_224, %c15104] : memref<8x36864xf32, #tpu.memory_space<vmem>>, vector<3x18xf32>
    %850 = vector.extract_strided_slice %835 {offsets = [3, 0], sizes = [1, 18], strides = [1, 1]} : vector<6x18xf32> to vector<1x18xf32>
    %851 = vector.broadcast %850 : vector<1x18xf32> to vector<3x18xf32>
    %852 = arith.mulf %849, %851 : vector<3x18xf32>
    %c0_225 = arith.constant 0 : index
    %c15232 = arith.constant 15232 : index
    %853 = vector.load %arg0[%c0_225, %c15232] : memref<8x36864xf32, #tpu.memory_space<vmem>>, vector<3x18xf32>
    %854 = vector.extract_strided_slice %835 {offsets = [4, 0], sizes = [1, 18], strides = [1, 1]} : vector<6x18xf32> to vector<1x18xf32>
    %855 = vector.broadcast %854 : vector<1x18xf32> to vector<3x18xf32>
    %856 = arith.mulf %853, %855 : vector<3x18xf32>
    %c0_226 = arith.constant 0 : index
    %c15360 = arith.constant 15360 : index
    %857 = vector.load %arg0[%c0_226, %c15360] : memref<8x36864xf32, #tpu.memory_space<vmem>>, vector<3x18xf32>
    %858 = vector.extract_strided_slice %835 {offsets = [5, 0], sizes = [1, 18], strides = [1, 1]} : vector<6x18xf32> to vector<1x18xf32>
    %859 = vector.broadcast %858 : vector<1x18xf32> to vector<3x18xf32>
    %860 = arith.mulf %857, %859 : vector<3x18xf32>
    %861 = arith.addf %836, %840 : vector<3x18xf32>
    %862 = arith.addf %844, %848 : vector<3x18xf32>
    %863 = arith.addf %852, %856 : vector<3x18xf32>
    %864 = arith.addf %861, %862 : vector<3x18xf32>
    %865 = arith.addf %863, %860 : vector<3x18xf32>
    %866 = arith.addf %864, %865 : vector<3x18xf32>
    %c0_227 = arith.constant 0 : index
    %c15616 = arith.constant 15616 : index
    %867 = vector.load %arg0[%c0_227, %c15616] : memref<8x36864xf32, #tpu.memory_space<vmem>>, vector<3x18xf32>
    %c0_228 = arith.constant 0 : index
    %c15744 = arith.constant 15744 : index
    %868 = vector.load %arg0[%c0_228, %c15744] : memref<8x36864xf32, #tpu.memory_space<vmem>>, vector<3x18xf32>
    %869 = arith.mulf %866, %866 : vector<3x18xf32>
    %870 = tpu.concatenate %866, %869 in 0 : vector<3x18xf32>, vector<3x18xf32> -> vector<6x18xf32>
    %cst_229 = arith.constant dense<0.000000e+00> : vector<6xf32>
    %871 = vector.multi_reduction <add>, %870, %cst_229 [1] : vector<6x18xf32> to vector<6xf32>
    %872 = vector.shape_cast %871 : vector<6xf32> to vector<6x1xf32>
    %cst_230 = arith.constant 0.055555556 : f32
    %873 = vector.broadcast %cst_230 : f32 to vector<6x1xf32>
    %874 = arith.mulf %872, %873 : vector<6x1xf32>
    %875 = vector.extract_strided_slice %874 {offsets = [0, 0], sizes = [3, 1], strides = [1, 1]} : vector<6x1xf32> to vector<3x1xf32>
    %876 = vector.extract_strided_slice %874 {offsets = [3, 0], sizes = [3, 1], strides = [1, 1]} : vector<6x1xf32> to vector<3x1xf32>
    %877 = arith.mulf %875, %875 : vector<3x1xf32>
    %878 = arith.subf %876, %877 : vector<3x1xf32>
    %cst_231 = arith.constant 0.000000e+00 : f32
    %879 = vector.broadcast %cst_231 : f32 to vector<3x1xf32>
    %880 = arith.maximumf %878, %879 : vector<3x1xf32>
    %cst_232 = arith.constant 9.99999974E-6 : f32
    %881 = vector.broadcast %cst_232 : f32 to vector<3x1xf32>
    %882 = arith.addf %880, %881 : vector<3x1xf32>
    %883 = math.rsqrt %882 : vector<3x1xf32>
    %884 = vector.broadcast %883 : vector<3x1xf32> to vector<3x18xf32>
    %885 = arith.mulf %867, %884 : vector<3x18xf32>
    %886 = vector.broadcast %875 : vector<3x1xf32> to vector<3x18xf32>
    %887 = arith.mulf %886, %885 : vector<3x18xf32>
    %888 = arith.subf %868, %887 : vector<3x18xf32>
    %889 = arith.mulf %866, %885 : vector<3x18xf32>
    %890 = arith.addf %889, %888 : vector<3x18xf32>
    %cst_233 = arith.constant 0.000000e+00 : f32
    %891 = vector.broadcast %cst_233 : f32 to vector<3x18xf32>
    %892 = arith.maximumf %890, %891 : vector<3x18xf32>
    %c0_234 = arith.constant 0 : index
    %c16256 = arith.constant 16256 : index
    %893 = vector.load %arg0[%c0_234, %c16256] : memref<8x36864xf32, #tpu.memory_space<vmem>>, vector<3x18xf32>
    %c0_235 = arith.constant 0 : index
    %c15872 = arith.constant 15872 : index
    %894 = vector.load %arg0[%c0_235, %c15872] : memref<8x36864xf32, #tpu.memory_space<vmem>>, vector<3x18xf32>
    %895 = vector.extract_strided_slice %892 {offsets = [0, 0], sizes = [1, 18], strides = [1, 1]} : vector<3x18xf32> to vector<1x18xf32>
    %896 = vector.broadcast %895 : vector<1x18xf32> to vector<3x18xf32>
    %897 = arith.mulf %894, %896 : vector<3x18xf32>
    %c0_236 = arith.constant 0 : index
    %c16000 = arith.constant 16000 : index
    %898 = vector.load %arg0[%c0_236, %c16000] : memref<8x36864xf32, #tpu.memory_space<vmem>>, vector<3x18xf32>
    %899 = vector.extract_strided_slice %892 {offsets = [1, 0], sizes = [1, 18], strides = [1, 1]} : vector<3x18xf32> to vector<1x18xf32>
    %900 = vector.broadcast %899 : vector<1x18xf32> to vector<3x18xf32>
    %901 = arith.mulf %898, %900 : vector<3x18xf32>
    %c0_237 = arith.constant 0 : index
    %c16128 = arith.constant 16128 : index
    %902 = vector.load %arg0[%c0_237, %c16128] : memref<8x36864xf32, #tpu.memory_space<vmem>>, vector<3x18xf32>
    %903 = vector.extract_strided_slice %892 {offsets = [2, 0], sizes = [1, 18], strides = [1, 1]} : vector<3x18xf32> to vector<1x18xf32>
    %904 = vector.broadcast %903 : vector<1x18xf32> to vector<3x18xf32>
    %905 = arith.mulf %902, %904 : vector<3x18xf32>
    %906 = arith.addf %893, %897 : vector<3x18xf32>
    %907 = arith.addf %901, %905 : vector<3x18xf32>
    %908 = arith.addf %906, %907 : vector<3x18xf32>
    %c0_238 = arith.constant 0 : index
    %c16384 = arith.constant 16384 : index
    %909 = vector.load %arg0[%c0_238, %c16384] : memref<8x36864xf32, #tpu.memory_space<vmem>>, vector<3x18xf32>
    %c0_239 = arith.constant 0 : index
    %c16512 = arith.constant 16512 : index
    %910 = vector.load %arg0[%c0_239, %c16512] : memref<8x36864xf32, #tpu.memory_space<vmem>>, vector<3x18xf32>
    %911 = arith.mulf %908, %908 : vector<3x18xf32>
    %912 = tpu.concatenate %908, %911 in 0 : vector<3x18xf32>, vector<3x18xf32> -> vector<6x18xf32>
    %cst_240 = arith.constant dense<0.000000e+00> : vector<6xf32>
    %913 = vector.multi_reduction <add>, %912, %cst_240 [1] : vector<6x18xf32> to vector<6xf32>
    %914 = vector.shape_cast %913 : vector<6xf32> to vector<6x1xf32>
    %cst_241 = arith.constant 0.055555556 : f32
    %915 = vector.broadcast %cst_241 : f32 to vector<6x1xf32>
    %916 = arith.mulf %914, %915 : vector<6x1xf32>
    %917 = vector.extract_strided_slice %916 {offsets = [0, 0], sizes = [3, 1], strides = [1, 1]} : vector<6x1xf32> to vector<3x1xf32>
    %918 = vector.extract_strided_slice %916 {offsets = [3, 0], sizes = [3, 1], strides = [1, 1]} : vector<6x1xf32> to vector<3x1xf32>
    %919 = arith.mulf %917, %917 : vector<3x1xf32>
    %920 = arith.subf %918, %919 : vector<3x1xf32>
    %cst_242 = arith.constant 0.000000e+00 : f32
    %921 = vector.broadcast %cst_242 : f32 to vector<3x1xf32>
    %922 = arith.maximumf %920, %921 : vector<3x1xf32>
    %cst_243 = arith.constant 9.99999974E-6 : f32
    %923 = vector.broadcast %cst_243 : f32 to vector<3x1xf32>
    %924 = arith.addf %922, %923 : vector<3x1xf32>
    %925 = math.rsqrt %924 : vector<3x1xf32>
    %926 = vector.broadcast %925 : vector<3x1xf32> to vector<3x18xf32>
    %927 = arith.mulf %909, %926 : vector<3x18xf32>
    %928 = vector.broadcast %917 : vector<3x1xf32> to vector<3x18xf32>
    %929 = arith.mulf %928, %927 : vector<3x18xf32>
    %930 = arith.subf %910, %929 : vector<3x18xf32>
    %931 = arith.mulf %908, %927 : vector<3x18xf32>
    %932 = arith.addf %931, %930 : vector<3x18xf32>
    %cst_244 = arith.constant 0.000000e+00 : f32
    %933 = vector.broadcast %cst_244 : f32 to vector<3x18xf32>
    %934 = arith.maximumf %932, %933 : vector<3x18xf32>
    %c0_245 = arith.constant 0 : index
    %c17024 = arith.constant 17024 : index
    %935 = vector.load %arg0[%c0_245, %c17024] : memref<8x36864xf32, #tpu.memory_space<vmem>>, vector<6x18xf32>
    %c0_246 = arith.constant 0 : index
    %c16640 = arith.constant 16640 : index
    %936 = vector.load %arg0[%c0_246, %c16640] : memref<8x36864xf32, #tpu.memory_space<vmem>>, vector<6x18xf32>
    %937 = vector.extract_strided_slice %934 {offsets = [0, 0], sizes = [1, 18], strides = [1, 1]} : vector<3x18xf32> to vector<1x18xf32>
    %938 = vector.broadcast %937 : vector<1x18xf32> to vector<6x18xf32>
    %939 = arith.mulf %936, %938 : vector<6x18xf32>
    %c0_247 = arith.constant 0 : index
    %c16768 = arith.constant 16768 : index
    %940 = vector.load %arg0[%c0_247, %c16768] : memref<8x36864xf32, #tpu.memory_space<vmem>>, vector<6x18xf32>
    %941 = vector.extract_strided_slice %934 {offsets = [1, 0], sizes = [1, 18], strides = [1, 1]} : vector<3x18xf32> to vector<1x18xf32>
    %942 = vector.broadcast %941 : vector<1x18xf32> to vector<6x18xf32>
    %943 = arith.mulf %940, %942 : vector<6x18xf32>
    %c0_248 = arith.constant 0 : index
    %c16896 = arith.constant 16896 : index
    %944 = vector.load %arg0[%c0_248, %c16896] : memref<8x36864xf32, #tpu.memory_space<vmem>>, vector<6x18xf32>
    %945 = vector.extract_strided_slice %934 {offsets = [2, 0], sizes = [1, 18], strides = [1, 1]} : vector<3x18xf32> to vector<1x18xf32>
    %946 = vector.broadcast %945 : vector<1x18xf32> to vector<6x18xf32>
    %947 = arith.mulf %944, %946 : vector<6x18xf32>
    %948 = arith.addf %935, %939 : vector<6x18xf32>
    %949 = arith.addf %943, %947 : vector<6x18xf32>
    %950 = arith.addf %948, %949 : vector<6x18xf32>
    %951 = arith.addf %950, %808 : vector<6x18xf32>
    %c0_249 = arith.constant 0 : index
    %c17152 = arith.constant 17152 : index
    %952 = vector.load %arg0[%c0_249, %c17152] : memref<8x36864xf32, #tpu.memory_space<vmem>>, vector<6x18xf32>
    %c0_250 = arith.constant 0 : index
    %c17280 = arith.constant 17280 : index
    %953 = vector.load %arg0[%c0_250, %c17280] : memref<8x36864xf32, #tpu.memory_space<vmem>>, vector<6x18xf32>
    %cst_251 = arith.constant dense<0.000000e+00> : vector<6xf32>
    %954 = vector.multi_reduction <add>, %951, %cst_251 [1] : vector<6x18xf32> to vector<6xf32>
    %955 = vector.shape_cast %954 : vector<6xf32> to vector<6x1xf32>
    %cst_252 = arith.constant 1.800000e+01 : f32
    %956 = vector.broadcast %cst_252 : f32 to vector<6x1xf32>
    %957 = arith.divf %955, %956 : vector<6x1xf32>
    %958 = arith.mulf %951, %951 : vector<6x18xf32>
    %cst_253 = arith.constant dense<0.000000e+00> : vector<6xf32>
    %959 = vector.multi_reduction <add>, %958, %cst_253 [1] : vector<6x18xf32> to vector<6xf32>
    %960 = vector.shape_cast %959 : vector<6xf32> to vector<6x1xf32>
    %cst_254 = arith.constant 1.800000e+01 : f32
    %961 = vector.broadcast %cst_254 : f32 to vector<6x1xf32>
    %962 = arith.divf %960, %961 : vector<6x1xf32>
    %963 = arith.mulf %957, %957 : vector<6x1xf32>
    %964 = arith.subf %962, %963 : vector<6x1xf32>
    %cst_255 = arith.constant 0.000000e+00 : f32
    %965 = vector.broadcast %cst_255 : f32 to vector<6x1xf32>
    %966 = arith.maximumf %964, %965 : vector<6x1xf32>
    %cst_256 = arith.constant 9.99999974E-6 : f32
    %967 = vector.broadcast %cst_256 : f32 to vector<6x1xf32>
    %968 = arith.addf %966, %967 : vector<6x1xf32>
    %969 = math.rsqrt %968 : vector<6x1xf32>
    %970 = vector.broadcast %969 : vector<6x1xf32> to vector<6x18xf32>
    %971 = arith.mulf %952, %970 : vector<6x18xf32>
    %972 = vector.broadcast %957 : vector<6x1xf32> to vector<6x18xf32>
    %973 = arith.mulf %972, %971 : vector<6x18xf32>
    %974 = arith.subf %953, %973 : vector<6x18xf32>
    %975 = arith.mulf %951, %971 : vector<6x18xf32>
    %976 = arith.addf %975, %974 : vector<6x18xf32>
    %cst_257 = arith.constant 0.000000e+00 : f32
    %977 = vector.broadcast %cst_257 : f32 to vector<6x18xf32>
    %978 = arith.maximumf %976, %977 : vector<6x18xf32>
    %c0_258 = arith.constant 0 : index
    %c18176 = arith.constant 18176 : index
    %979 = vector.load %arg0[%c0_258, %c18176] : memref<8x36864xf32, #tpu.memory_space<vmem>>, vector<3x18xf32>
    %c0_259 = arith.constant 0 : index
    %c17408 = arith.constant 17408 : index
    %980 = vector.load %arg0[%c0_259, %c17408] : memref<8x36864xf32, #tpu.memory_space<vmem>>, vector<3x18xf32>
    %981 = vector.extract_strided_slice %978 {offsets = [0, 0], sizes = [1, 18], strides = [1, 1]} : vector<6x18xf32> to vector<1x18xf32>
    %982 = vector.broadcast %981 : vector<1x18xf32> to vector<3x18xf32>
    %983 = arith.mulf %980, %982 : vector<3x18xf32>
    %c0_260 = arith.constant 0 : index
    %c17536 = arith.constant 17536 : index
    %984 = vector.load %arg0[%c0_260, %c17536] : memref<8x36864xf32, #tpu.memory_space<vmem>>, vector<3x18xf32>
    %985 = vector.extract_strided_slice %978 {offsets = [1, 0], sizes = [1, 18], strides = [1, 1]} : vector<6x18xf32> to vector<1x18xf32>
    %986 = vector.broadcast %985 : vector<1x18xf32> to vector<3x18xf32>
    %987 = arith.mulf %984, %986 : vector<3x18xf32>
    %c0_261 = arith.constant 0 : index
    %c17664 = arith.constant 17664 : index
    %988 = vector.load %arg0[%c0_261, %c17664] : memref<8x36864xf32, #tpu.memory_space<vmem>>, vector<3x18xf32>
    %989 = vector.extract_strided_slice %978 {offsets = [2, 0], sizes = [1, 18], strides = [1, 1]} : vector<6x18xf32> to vector<1x18xf32>
    %990 = vector.broadcast %989 : vector<1x18xf32> to vector<3x18xf32>
    %991 = arith.mulf %988, %990 : vector<3x18xf32>
    %c0_262 = arith.constant 0 : index
    %c17792 = arith.constant 17792 : index
    %992 = vector.load %arg0[%c0_262, %c17792] : memref<8x36864xf32, #tpu.memory_space<vmem>>, vector<3x18xf32>
    %993 = vector.extract_strided_slice %978 {offsets = [3, 0], sizes = [1, 18], strides = [1, 1]} : vector<6x18xf32> to vector<1x18xf32>
    %994 = vector.broadcast %993 : vector<1x18xf32> to vector<3x18xf32>
    %995 = arith.mulf %992, %994 : vector<3x18xf32>
    %c0_263 = arith.constant 0 : index
    %c17920 = arith.constant 17920 : index
    %996 = vector.load %arg0[%c0_263, %c17920] : memref<8x36864xf32, #tpu.memory_space<vmem>>, vector<3x18xf32>
    %997 = vector.extract_strided_slice %978 {offsets = [4, 0], sizes = [1, 18], strides = [1, 1]} : vector<6x18xf32> to vector<1x18xf32>
    %998 = vector.broadcast %997 : vector<1x18xf32> to vector<3x18xf32>
    %999 = arith.mulf %996, %998 : vector<3x18xf32>
    %c0_264 = arith.constant 0 : index
    %c18048 = arith.constant 18048 : index
    %1000 = vector.load %arg0[%c0_264, %c18048] : memref<8x36864xf32, #tpu.memory_space<vmem>>, vector<3x18xf32>
    %1001 = vector.extract_strided_slice %978 {offsets = [5, 0], sizes = [1, 18], strides = [1, 1]} : vector<6x18xf32> to vector<1x18xf32>
    %1002 = vector.broadcast %1001 : vector<1x18xf32> to vector<3x18xf32>
    %1003 = arith.mulf %1000, %1002 : vector<3x18xf32>
    %1004 = arith.addf %979, %983 : vector<3x18xf32>
    %1005 = arith.addf %987, %991 : vector<3x18xf32>
    %1006 = arith.addf %995, %999 : vector<3x18xf32>
    %1007 = arith.addf %1004, %1005 : vector<3x18xf32>
    %1008 = arith.addf %1006, %1003 : vector<3x18xf32>
    %1009 = arith.addf %1007, %1008 : vector<3x18xf32>
    %c0_265 = arith.constant 0 : index
    %c18304 = arith.constant 18304 : index
    %1010 = vector.load %arg0[%c0_265, %c18304] : memref<8x36864xf32, #tpu.memory_space<vmem>>, vector<3x18xf32>
    %c0_266 = arith.constant 0 : index
    %c18432 = arith.constant 18432 : index
    %1011 = vector.load %arg0[%c0_266, %c18432] : memref<8x36864xf32, #tpu.memory_space<vmem>>, vector<3x18xf32>
    %1012 = arith.mulf %1009, %1009 : vector<3x18xf32>
    %1013 = tpu.concatenate %1009, %1012 in 0 : vector<3x18xf32>, vector<3x18xf32> -> vector<6x18xf32>
    %cst_267 = arith.constant dense<0.000000e+00> : vector<6xf32>
    %1014 = vector.multi_reduction <add>, %1013, %cst_267 [1] : vector<6x18xf32> to vector<6xf32>
    %1015 = vector.shape_cast %1014 : vector<6xf32> to vector<6x1xf32>
    %cst_268 = arith.constant 0.055555556 : f32
    %1016 = vector.broadcast %cst_268 : f32 to vector<6x1xf32>
    %1017 = arith.mulf %1015, %1016 : vector<6x1xf32>
    %1018 = vector.extract_strided_slice %1017 {offsets = [0, 0], sizes = [3, 1], strides = [1, 1]} : vector<6x1xf32> to vector<3x1xf32>
    %1019 = vector.extract_strided_slice %1017 {offsets = [3, 0], sizes = [3, 1], strides = [1, 1]} : vector<6x1xf32> to vector<3x1xf32>
    %1020 = arith.mulf %1018, %1018 : vector<3x1xf32>
    %1021 = arith.subf %1019, %1020 : vector<3x1xf32>
    %cst_269 = arith.constant 0.000000e+00 : f32
    %1022 = vector.broadcast %cst_269 : f32 to vector<3x1xf32>
    %1023 = arith.maximumf %1021, %1022 : vector<3x1xf32>
    %cst_270 = arith.constant 9.99999974E-6 : f32
    %1024 = vector.broadcast %cst_270 : f32 to vector<3x1xf32>
    %1025 = arith.addf %1023, %1024 : vector<3x1xf32>
    %1026 = math.rsqrt %1025 : vector<3x1xf32>
    %1027 = vector.broadcast %1026 : vector<3x1xf32> to vector<3x18xf32>
    %1028 = arith.mulf %1010, %1027 : vector<3x18xf32>
    %1029 = vector.broadcast %1018 : vector<3x1xf32> to vector<3x18xf32>
    %1030 = arith.mulf %1029, %1028 : vector<3x18xf32>
    %1031 = arith.subf %1011, %1030 : vector<3x18xf32>
    %1032 = arith.mulf %1009, %1028 : vector<3x18xf32>
    %1033 = arith.addf %1032, %1031 : vector<3x18xf32>
    %cst_271 = arith.constant 0.000000e+00 : f32
    %1034 = vector.broadcast %cst_271 : f32 to vector<3x18xf32>
    %1035 = arith.maximumf %1033, %1034 : vector<3x18xf32>
    %c0_272 = arith.constant 0 : index
    %c18944 = arith.constant 18944 : index
    %1036 = vector.load %arg0[%c0_272, %c18944] : memref<8x36864xf32, #tpu.memory_space<vmem>>, vector<3x18xf32>
    %c0_273 = arith.constant 0 : index
    %c18560 = arith.constant 18560 : index
    %1037 = vector.load %arg0[%c0_273, %c18560] : memref<8x36864xf32, #tpu.memory_space<vmem>>, vector<3x18xf32>
    %1038 = vector.extract_strided_slice %1035 {offsets = [0, 0], sizes = [1, 18], strides = [1, 1]} : vector<3x18xf32> to vector<1x18xf32>
    %1039 = vector.broadcast %1038 : vector<1x18xf32> to vector<3x18xf32>
    %1040 = arith.mulf %1037, %1039 : vector<3x18xf32>
    %c0_274 = arith.constant 0 : index
    %c18688 = arith.constant 18688 : index
    %1041 = vector.load %arg0[%c0_274, %c18688] : memref<8x36864xf32, #tpu.memory_space<vmem>>, vector<3x18xf32>
    %1042 = vector.extract_strided_slice %1035 {offsets = [1, 0], sizes = [1, 18], strides = [1, 1]} : vector<3x18xf32> to vector<1x18xf32>
    %1043 = vector.broadcast %1042 : vector<1x18xf32> to vector<3x18xf32>
    %1044 = arith.mulf %1041, %1043 : vector<3x18xf32>
    %c0_275 = arith.constant 0 : index
    %c18816 = arith.constant 18816 : index
    %1045 = vector.load %arg0[%c0_275, %c18816] : memref<8x36864xf32, #tpu.memory_space<vmem>>, vector<3x18xf32>
    %1046 = vector.extract_strided_slice %1035 {offsets = [2, 0], sizes = [1, 18], strides = [1, 1]} : vector<3x18xf32> to vector<1x18xf32>
    %1047 = vector.broadcast %1046 : vector<1x18xf32> to vector<3x18xf32>
    %1048 = arith.mulf %1045, %1047 : vector<3x18xf32>
    %1049 = arith.addf %1036, %1040 : vector<3x18xf32>
    %1050 = arith.addf %1044, %1048 : vector<3x18xf32>
    %1051 = arith.addf %1049, %1050 : vector<3x18xf32>
    %c0_276 = arith.constant 0 : index
    %c19072 = arith.constant 19072 : index
    %1052 = vector.load %arg0[%c0_276, %c19072] : memref<8x36864xf32, #tpu.memory_space<vmem>>, vector<3x18xf32>
    %c0_277 = arith.constant 0 : index
    %c19200 = arith.constant 19200 : index
    %1053 = vector.load %arg0[%c0_277, %c19200] : memref<8x36864xf32, #tpu.memory_space<vmem>>, vector<3x18xf32>
    %1054 = arith.mulf %1051, %1051 : vector<3x18xf32>
    %1055 = tpu.concatenate %1051, %1054 in 0 : vector<3x18xf32>, vector<3x18xf32> -> vector<6x18xf32>
    %cst_278 = arith.constant dense<0.000000e+00> : vector<6xf32>
    %1056 = vector.multi_reduction <add>, %1055, %cst_278 [1] : vector<6x18xf32> to vector<6xf32>
    %1057 = vector.shape_cast %1056 : vector<6xf32> to vector<6x1xf32>
    %cst_279 = arith.constant 0.055555556 : f32
    %1058 = vector.broadcast %cst_279 : f32 to vector<6x1xf32>
    %1059 = arith.mulf %1057, %1058 : vector<6x1xf32>
    %1060 = vector.extract_strided_slice %1059 {offsets = [0, 0], sizes = [3, 1], strides = [1, 1]} : vector<6x1xf32> to vector<3x1xf32>
    %1061 = vector.extract_strided_slice %1059 {offsets = [3, 0], sizes = [3, 1], strides = [1, 1]} : vector<6x1xf32> to vector<3x1xf32>
    %1062 = arith.mulf %1060, %1060 : vector<3x1xf32>
    %1063 = arith.subf %1061, %1062 : vector<3x1xf32>
    %cst_280 = arith.constant 0.000000e+00 : f32
    %1064 = vector.broadcast %cst_280 : f32 to vector<3x1xf32>
    %1065 = arith.maximumf %1063, %1064 : vector<3x1xf32>
    %cst_281 = arith.constant 9.99999974E-6 : f32
    %1066 = vector.broadcast %cst_281 : f32 to vector<3x1xf32>
    %1067 = arith.addf %1065, %1066 : vector<3x1xf32>
    %1068 = math.rsqrt %1067 : vector<3x1xf32>
    %1069 = vector.broadcast %1068 : vector<3x1xf32> to vector<3x18xf32>
    %1070 = arith.mulf %1052, %1069 : vector<3x18xf32>
    %1071 = vector.broadcast %1060 : vector<3x1xf32> to vector<3x18xf32>
    %1072 = arith.mulf %1071, %1070 : vector<3x18xf32>
    %1073 = arith.subf %1053, %1072 : vector<3x18xf32>
    %1074 = arith.mulf %1051, %1070 : vector<3x18xf32>
    %1075 = arith.addf %1074, %1073 : vector<3x18xf32>
    %cst_282 = arith.constant 0.000000e+00 : f32
    %1076 = vector.broadcast %cst_282 : f32 to vector<3x18xf32>
    %1077 = arith.maximumf %1075, %1076 : vector<3x18xf32>
    %c0_283 = arith.constant 0 : index
    %c19712 = arith.constant 19712 : index
    %1078 = vector.load %arg0[%c0_283, %c19712] : memref<8x36864xf32, #tpu.memory_space<vmem>>, vector<6x18xf32>
    %c0_284 = arith.constant 0 : index
    %c19328 = arith.constant 19328 : index
    %1079 = vector.load %arg0[%c0_284, %c19328] : memref<8x36864xf32, #tpu.memory_space<vmem>>, vector<6x18xf32>
    %1080 = vector.extract_strided_slice %1077 {offsets = [0, 0], sizes = [1, 18], strides = [1, 1]} : vector<3x18xf32> to vector<1x18xf32>
    %1081 = vector.broadcast %1080 : vector<1x18xf32> to vector<6x18xf32>
    %1082 = arith.mulf %1079, %1081 : vector<6x18xf32>
    %c0_285 = arith.constant 0 : index
    %c19456 = arith.constant 19456 : index
    %1083 = vector.load %arg0[%c0_285, %c19456] : memref<8x36864xf32, #tpu.memory_space<vmem>>, vector<6x18xf32>
    %1084 = vector.extract_strided_slice %1077 {offsets = [1, 0], sizes = [1, 18], strides = [1, 1]} : vector<3x18xf32> to vector<1x18xf32>
    %1085 = vector.broadcast %1084 : vector<1x18xf32> to vector<6x18xf32>
    %1086 = arith.mulf %1083, %1085 : vector<6x18xf32>
    %c0_286 = arith.constant 0 : index
    %c19584 = arith.constant 19584 : index
    %1087 = vector.load %arg0[%c0_286, %c19584] : memref<8x36864xf32, #tpu.memory_space<vmem>>, vector<6x18xf32>
    %1088 = vector.extract_strided_slice %1077 {offsets = [2, 0], sizes = [1, 18], strides = [1, 1]} : vector<3x18xf32> to vector<1x18xf32>
    %1089 = vector.broadcast %1088 : vector<1x18xf32> to vector<6x18xf32>
    %1090 = arith.mulf %1087, %1089 : vector<6x18xf32>
    %1091 = arith.addf %1078, %1082 : vector<6x18xf32>
    %1092 = arith.addf %1086, %1090 : vector<6x18xf32>
    %1093 = arith.addf %1091, %1092 : vector<6x18xf32>
    %c0_287 = arith.constant 0 : index
    %c36736 = arith.constant 36736 : index
    %1094 = vector.load %arg0[%c0_287, %c36736] : memref<8x36864xf32, #tpu.memory_space<vmem>>, vector<6x18xf32>
    %c0_288 = arith.constant 0 : index
    %c35968 = arith.constant 35968 : index
    %1095 = vector.load %arg0[%c0_288, %c35968] : memref<8x36864xf32, #tpu.memory_space<vmem>>, vector<6x18xf32>
    %1096 = vector.extract_strided_slice %951 {offsets = [0, 0], sizes = [1, 18], strides = [1, 1]} : vector<6x18xf32> to vector<1x18xf32>
    %1097 = vector.broadcast %1096 : vector<1x18xf32> to vector<6x18xf32>
    %1098 = arith.mulf %1095, %1097 : vector<6x18xf32>
    %c0_289 = arith.constant 0 : index
    %c36096 = arith.constant 36096 : index
    %1099 = vector.load %arg0[%c0_289, %c36096] : memref<8x36864xf32, #tpu.memory_space<vmem>>, vector<6x18xf32>
    %1100 = vector.extract_strided_slice %951 {offsets = [1, 0], sizes = [1, 18], strides = [1, 1]} : vector<6x18xf32> to vector<1x18xf32>
    %1101 = vector.broadcast %1100 : vector<1x18xf32> to vector<6x18xf32>
    %1102 = arith.mulf %1099, %1101 : vector<6x18xf32>
    %c0_290 = arith.constant 0 : index
    %c36224 = arith.constant 36224 : index
    %1103 = vector.load %arg0[%c0_290, %c36224] : memref<8x36864xf32, #tpu.memory_space<vmem>>, vector<6x18xf32>
    %1104 = vector.extract_strided_slice %951 {offsets = [2, 0], sizes = [1, 18], strides = [1, 1]} : vector<6x18xf32> to vector<1x18xf32>
    %1105 = vector.broadcast %1104 : vector<1x18xf32> to vector<6x18xf32>
    %1106 = arith.mulf %1103, %1105 : vector<6x18xf32>
    %c0_291 = arith.constant 0 : index
    %c36352 = arith.constant 36352 : index
    %1107 = vector.load %arg0[%c0_291, %c36352] : memref<8x36864xf32, #tpu.memory_space<vmem>>, vector<6x18xf32>
    %1108 = vector.extract_strided_slice %951 {offsets = [3, 0], sizes = [1, 18], strides = [1, 1]} : vector<6x18xf32> to vector<1x18xf32>
    %1109 = vector.broadcast %1108 : vector<1x18xf32> to vector<6x18xf32>
    %1110 = arith.mulf %1107, %1109 : vector<6x18xf32>
    %c0_292 = arith.constant 0 : index
    %c36480 = arith.constant 36480 : index
    %1111 = vector.load %arg0[%c0_292, %c36480] : memref<8x36864xf32, #tpu.memory_space<vmem>>, vector<6x18xf32>
    %1112 = vector.extract_strided_slice %951 {offsets = [4, 0], sizes = [1, 18], strides = [1, 1]} : vector<6x18xf32> to vector<1x18xf32>
    %1113 = vector.broadcast %1112 : vector<1x18xf32> to vector<6x18xf32>
    %1114 = arith.mulf %1111, %1113 : vector<6x18xf32>
    %c0_293 = arith.constant 0 : index
    %c36608 = arith.constant 36608 : index
    %1115 = vector.load %arg0[%c0_293, %c36608] : memref<8x36864xf32, #tpu.memory_space<vmem>>, vector<6x18xf32>
    %1116 = vector.extract_strided_slice %951 {offsets = [5, 0], sizes = [1, 18], strides = [1, 1]} : vector<6x18xf32> to vector<1x18xf32>
    %1117 = vector.broadcast %1116 : vector<1x18xf32> to vector<6x18xf32>
    %1118 = arith.mulf %1115, %1117 : vector<6x18xf32>
    %1119 = arith.addf %1094, %1098 : vector<6x18xf32>
    %1120 = arith.addf %1102, %1106 : vector<6x18xf32>
    %1121 = arith.addf %1110, %1114 : vector<6x18xf32>
    %1122 = arith.addf %1119, %1120 : vector<6x18xf32>
    %1123 = arith.addf %1121, %1118 : vector<6x18xf32>
    %1124 = arith.addf %1122, %1123 : vector<6x18xf32>
    %1125 = arith.addf %1093, %1124 : vector<6x18xf32>
    %c0_294 = arith.constant 0 : index
    %c19840 = arith.constant 19840 : index
    %1126 = vector.load %arg0[%c0_294, %c19840] : memref<8x36864xf32, #tpu.memory_space<vmem>>, vector<6x18xf32>
    %c0_295 = arith.constant 0 : index
    %c19968 = arith.constant 19968 : index
    %1127 = vector.load %arg0[%c0_295, %c19968] : memref<8x36864xf32, #tpu.memory_space<vmem>>, vector<6x18xf32>
    %cst_296 = arith.constant dense<0.000000e+00> : vector<6xf32>
    %1128 = vector.multi_reduction <add>, %1125, %cst_296 [1] : vector<6x18xf32> to vector<6xf32>
    %1129 = vector.shape_cast %1128 : vector<6xf32> to vector<6x1xf32>
    %cst_297 = arith.constant 1.800000e+01 : f32
    %1130 = vector.broadcast %cst_297 : f32 to vector<6x1xf32>
    %1131 = arith.divf %1129, %1130 : vector<6x1xf32>
    %1132 = arith.mulf %1125, %1125 : vector<6x18xf32>
    %cst_298 = arith.constant dense<0.000000e+00> : vector<6xf32>
    %1133 = vector.multi_reduction <add>, %1132, %cst_298 [1] : vector<6x18xf32> to vector<6xf32>
    %1134 = vector.shape_cast %1133 : vector<6xf32> to vector<6x1xf32>
    %cst_299 = arith.constant 1.800000e+01 : f32
    %1135 = vector.broadcast %cst_299 : f32 to vector<6x1xf32>
    %1136 = arith.divf %1134, %1135 : vector<6x1xf32>
    %1137 = arith.mulf %1131, %1131 : vector<6x1xf32>
    %1138 = arith.subf %1136, %1137 : vector<6x1xf32>
    %cst_300 = arith.constant 0.000000e+00 : f32
    %1139 = vector.broadcast %cst_300 : f32 to vector<6x1xf32>
    %1140 = arith.maximumf %1138, %1139 : vector<6x1xf32>
    %cst_301 = arith.constant 9.99999974E-6 : f32
    %1141 = vector.broadcast %cst_301 : f32 to vector<6x1xf32>
    %1142 = arith.addf %1140, %1141 : vector<6x1xf32>
    %1143 = math.rsqrt %1142 : vector<6x1xf32>
    %1144 = vector.broadcast %1143 : vector<6x1xf32> to vector<6x18xf32>
    %1145 = arith.mulf %1126, %1144 : vector<6x18xf32>
    %1146 = vector.broadcast %1131 : vector<6x1xf32> to vector<6x18xf32>
    %1147 = arith.mulf %1146, %1145 : vector<6x18xf32>
    %1148 = arith.subf %1127, %1147 : vector<6x18xf32>
    %1149 = arith.mulf %1125, %1145 : vector<6x18xf32>
    %1150 = arith.addf %1149, %1148 : vector<6x18xf32>
    %cst_302 = arith.constant 0.000000e+00 : f32
    %1151 = vector.broadcast %cst_302 : f32 to vector<6x18xf32>
    %1152 = arith.maximumf %1150, %1151 : vector<6x18xf32>
    %c0_303 = arith.constant 0 : index
    %c20864 = arith.constant 20864 : index
    %1153 = vector.load %arg0[%c0_303, %c20864] : memref<8x36864xf32, #tpu.memory_space<vmem>>, vector<3x18xf32>
    %c0_304 = arith.constant 0 : index
    %c20096 = arith.constant 20096 : index
    %1154 = vector.load %arg0[%c0_304, %c20096] : memref<8x36864xf32, #tpu.memory_space<vmem>>, vector<3x18xf32>
    %1155 = vector.extract_strided_slice %1152 {offsets = [0, 0], sizes = [1, 18], strides = [1, 1]} : vector<6x18xf32> to vector<1x18xf32>
    %1156 = vector.broadcast %1155 : vector<1x18xf32> to vector<3x18xf32>
    %1157 = arith.mulf %1154, %1156 : vector<3x18xf32>
    %c0_305 = arith.constant 0 : index
    %c20224 = arith.constant 20224 : index
    %1158 = vector.load %arg0[%c0_305, %c20224] : memref<8x36864xf32, #tpu.memory_space<vmem>>, vector<3x18xf32>
    %1159 = vector.extract_strided_slice %1152 {offsets = [1, 0], sizes = [1, 18], strides = [1, 1]} : vector<6x18xf32> to vector<1x18xf32>
    %1160 = vector.broadcast %1159 : vector<1x18xf32> to vector<3x18xf32>
    %1161 = arith.mulf %1158, %1160 : vector<3x18xf32>
    %c0_306 = arith.constant 0 : index
    %c20352 = arith.constant 20352 : index
    %1162 = vector.load %arg0[%c0_306, %c20352] : memref<8x36864xf32, #tpu.memory_space<vmem>>, vector<3x18xf32>
    %1163 = vector.extract_strided_slice %1152 {offsets = [2, 0], sizes = [1, 18], strides = [1, 1]} : vector<6x18xf32> to vector<1x18xf32>
    %1164 = vector.broadcast %1163 : vector<1x18xf32> to vector<3x18xf32>
    %1165 = arith.mulf %1162, %1164 : vector<3x18xf32>
    %c0_307 = arith.constant 0 : index
    %c20480 = arith.constant 20480 : index
    %1166 = vector.load %arg0[%c0_307, %c20480] : memref<8x36864xf32, #tpu.memory_space<vmem>>, vector<3x18xf32>
    %1167 = vector.extract_strided_slice %1152 {offsets = [3, 0], sizes = [1, 18], strides = [1, 1]} : vector<6x18xf32> to vector<1x18xf32>
    %1168 = vector.broadcast %1167 : vector<1x18xf32> to vector<3x18xf32>
    %1169 = arith.mulf %1166, %1168 : vector<3x18xf32>
    %c0_308 = arith.constant 0 : index
    %c20608 = arith.constant 20608 : index
    %1170 = vector.load %arg0[%c0_308, %c20608] : memref<8x36864xf32, #tpu.memory_space<vmem>>, vector<3x18xf32>
    %1171 = vector.extract_strided_slice %1152 {offsets = [4, 0], sizes = [1, 18], strides = [1, 1]} : vector<6x18xf32> to vector<1x18xf32>
    %1172 = vector.broadcast %1171 : vector<1x18xf32> to vector<3x18xf32>
    %1173 = arith.mulf %1170, %1172 : vector<3x18xf32>
    %c0_309 = arith.constant 0 : index
    %c20736 = arith.constant 20736 : index
    %1174 = vector.load %arg0[%c0_309, %c20736] : memref<8x36864xf32, #tpu.memory_space<vmem>>, vector<3x18xf32>
    %1175 = vector.extract_strided_slice %1152 {offsets = [5, 0], sizes = [1, 18], strides = [1, 1]} : vector<6x18xf32> to vector<1x18xf32>
    %1176 = vector.broadcast %1175 : vector<1x18xf32> to vector<3x18xf32>
    %1177 = arith.mulf %1174, %1176 : vector<3x18xf32>
    %1178 = arith.addf %1153, %1157 : vector<3x18xf32>
    %1179 = arith.addf %1161, %1165 : vector<3x18xf32>
    %1180 = arith.addf %1169, %1173 : vector<3x18xf32>
    %1181 = arith.addf %1178, %1179 : vector<3x18xf32>
    %1182 = arith.addf %1180, %1177 : vector<3x18xf32>
    %1183 = arith.addf %1181, %1182 : vector<3x18xf32>
    %c0_310 = arith.constant 0 : index
    %c20992 = arith.constant 20992 : index
    %1184 = vector.load %arg0[%c0_310, %c20992] : memref<8x36864xf32, #tpu.memory_space<vmem>>, vector<3x18xf32>
    %c0_311 = arith.constant 0 : index
    %c21120 = arith.constant 21120 : index
    %1185 = vector.load %arg0[%c0_311, %c21120] : memref<8x36864xf32, #tpu.memory_space<vmem>>, vector<3x18xf32>
    %1186 = arith.mulf %1183, %1183 : vector<3x18xf32>
    %1187 = tpu.concatenate %1183, %1186 in 0 : vector<3x18xf32>, vector<3x18xf32> -> vector<6x18xf32>
    %cst_312 = arith.constant dense<0.000000e+00> : vector<6xf32>
    %1188 = vector.multi_reduction <add>, %1187, %cst_312 [1] : vector<6x18xf32> to vector<6xf32>
    %1189 = vector.shape_cast %1188 : vector<6xf32> to vector<6x1xf32>
    %cst_313 = arith.constant 0.055555556 : f32
    %1190 = vector.broadcast %cst_313 : f32 to vector<6x1xf32>
    %1191 = arith.mulf %1189, %1190 : vector<6x1xf32>
    %1192 = vector.extract_strided_slice %1191 {offsets = [0, 0], sizes = [3, 1], strides = [1, 1]} : vector<6x1xf32> to vector<3x1xf32>
    %1193 = vector.extract_strided_slice %1191 {offsets = [3, 0], sizes = [3, 1], strides = [1, 1]} : vector<6x1xf32> to vector<3x1xf32>
    %1194 = arith.mulf %1192, %1192 : vector<3x1xf32>
    %1195 = arith.subf %1193, %1194 : vector<3x1xf32>
    %cst_314 = arith.constant 0.000000e+00 : f32
    %1196 = vector.broadcast %cst_314 : f32 to vector<3x1xf32>
    %1197 = arith.maximumf %1195, %1196 : vector<3x1xf32>
    %cst_315 = arith.constant 9.99999974E-6 : f32
    %1198 = vector.broadcast %cst_315 : f32 to vector<3x1xf32>
    %1199 = arith.addf %1197, %1198 : vector<3x1xf32>
    %1200 = math.rsqrt %1199 : vector<3x1xf32>
    %1201 = vector.broadcast %1200 : vector<3x1xf32> to vector<3x18xf32>
    %1202 = arith.mulf %1184, %1201 : vector<3x18xf32>
    %1203 = vector.broadcast %1192 : vector<3x1xf32> to vector<3x18xf32>
    %1204 = arith.mulf %1203, %1202 : vector<3x18xf32>
    %1205 = arith.subf %1185, %1204 : vector<3x18xf32>
    %1206 = arith.mulf %1183, %1202 : vector<3x18xf32>
    %1207 = arith.addf %1206, %1205 : vector<3x18xf32>
    %cst_316 = arith.constant 0.000000e+00 : f32
    %1208 = vector.broadcast %cst_316 : f32 to vector<3x18xf32>
    %1209 = arith.maximumf %1207, %1208 : vector<3x18xf32>
    %c0_317 = arith.constant 0 : index
    %c21632 = arith.constant 21632 : index
    %1210 = vector.load %arg0[%c0_317, %c21632] : memref<8x36864xf32, #tpu.memory_space<vmem>>, vector<3x18xf32>
    %c0_318 = arith.constant 0 : index
    %c21248 = arith.constant 21248 : index
    %1211 = vector.load %arg0[%c0_318, %c21248] : memref<8x36864xf32, #tpu.memory_space<vmem>>, vector<3x18xf32>
    %1212 = vector.extract_strided_slice %1209 {offsets = [0, 0], sizes = [1, 18], strides = [1, 1]} : vector<3x18xf32> to vector<1x18xf32>
    %1213 = vector.broadcast %1212 : vector<1x18xf32> to vector<3x18xf32>
    %1214 = arith.mulf %1211, %1213 : vector<3x18xf32>
    %c0_319 = arith.constant 0 : index
    %c21376 = arith.constant 21376 : index
    %1215 = vector.load %arg0[%c0_319, %c21376] : memref<8x36864xf32, #tpu.memory_space<vmem>>, vector<3x18xf32>
    %1216 = vector.extract_strided_slice %1209 {offsets = [1, 0], sizes = [1, 18], strides = [1, 1]} : vector<3x18xf32> to vector<1x18xf32>
    %1217 = vector.broadcast %1216 : vector<1x18xf32> to vector<3x18xf32>
    %1218 = arith.mulf %1215, %1217 : vector<3x18xf32>
    %c0_320 = arith.constant 0 : index
    %c21504 = arith.constant 21504 : index
    %1219 = vector.load %arg0[%c0_320, %c21504] : memref<8x36864xf32, #tpu.memory_space<vmem>>, vector<3x18xf32>
    %1220 = vector.extract_strided_slice %1209 {offsets = [2, 0], sizes = [1, 18], strides = [1, 1]} : vector<3x18xf32> to vector<1x18xf32>
    %1221 = vector.broadcast %1220 : vector<1x18xf32> to vector<3x18xf32>
    %1222 = arith.mulf %1219, %1221 : vector<3x18xf32>
    %1223 = arith.addf %1210, %1214 : vector<3x18xf32>
    %1224 = arith.addf %1218, %1222 : vector<3x18xf32>
    %1225 = arith.addf %1223, %1224 : vector<3x18xf32>
    %c0_321 = arith.constant 0 : index
    %c21760 = arith.constant 21760 : index
    %1226 = vector.load %arg0[%c0_321, %c21760] : memref<8x36864xf32, #tpu.memory_space<vmem>>, vector<3x18xf32>
    %c0_322 = arith.constant 0 : index
    %c21888 = arith.constant 21888 : index
    %1227 = vector.load %arg0[%c0_322, %c21888] : memref<8x36864xf32, #tpu.memory_space<vmem>>, vector<3x18xf32>
    %1228 = arith.mulf %1225, %1225 : vector<3x18xf32>
    %1229 = tpu.concatenate %1225, %1228 in 0 : vector<3x18xf32>, vector<3x18xf32> -> vector<6x18xf32>
    %cst_323 = arith.constant dense<0.000000e+00> : vector<6xf32>
    %1230 = vector.multi_reduction <add>, %1229, %cst_323 [1] : vector<6x18xf32> to vector<6xf32>
    %1231 = vector.shape_cast %1230 : vector<6xf32> to vector<6x1xf32>
    %cst_324 = arith.constant 0.055555556 : f32
    %1232 = vector.broadcast %cst_324 : f32 to vector<6x1xf32>
    %1233 = arith.mulf %1231, %1232 : vector<6x1xf32>
    %1234 = vector.extract_strided_slice %1233 {offsets = [0, 0], sizes = [3, 1], strides = [1, 1]} : vector<6x1xf32> to vector<3x1xf32>
    %1235 = vector.extract_strided_slice %1233 {offsets = [3, 0], sizes = [3, 1], strides = [1, 1]} : vector<6x1xf32> to vector<3x1xf32>
    %1236 = arith.mulf %1234, %1234 : vector<3x1xf32>
    %1237 = arith.subf %1235, %1236 : vector<3x1xf32>
    %cst_325 = arith.constant 0.000000e+00 : f32
    %1238 = vector.broadcast %cst_325 : f32 to vector<3x1xf32>
    %1239 = arith.maximumf %1237, %1238 : vector<3x1xf32>
    %cst_326 = arith.constant 9.99999974E-6 : f32
    %1240 = vector.broadcast %cst_326 : f32 to vector<3x1xf32>
    %1241 = arith.addf %1239, %1240 : vector<3x1xf32>
    %1242 = math.rsqrt %1241 : vector<3x1xf32>
    %1243 = vector.broadcast %1242 : vector<3x1xf32> to vector<3x18xf32>
    %1244 = arith.mulf %1226, %1243 : vector<3x18xf32>
    %1245 = vector.broadcast %1234 : vector<3x1xf32> to vector<3x18xf32>
    %1246 = arith.mulf %1245, %1244 : vector<3x18xf32>
    %1247 = arith.subf %1227, %1246 : vector<3x18xf32>
    %1248 = arith.mulf %1225, %1244 : vector<3x18xf32>
    %1249 = arith.addf %1248, %1247 : vector<3x18xf32>
    %cst_327 = arith.constant 0.000000e+00 : f32
    %1250 = vector.broadcast %cst_327 : f32 to vector<3x18xf32>
    %1251 = arith.maximumf %1249, %1250 : vector<3x18xf32>
    %c0_328 = arith.constant 0 : index
    %c22400 = arith.constant 22400 : index
    %1252 = vector.load %arg0[%c0_328, %c22400] : memref<8x36864xf32, #tpu.memory_space<vmem>>, vector<6x18xf32>
    %c0_329 = arith.constant 0 : index
    %c22016 = arith.constant 22016 : index
    %1253 = vector.load %arg0[%c0_329, %c22016] : memref<8x36864xf32, #tpu.memory_space<vmem>>, vector<6x18xf32>
    %1254 = vector.extract_strided_slice %1251 {offsets = [0, 0], sizes = [1, 18], strides = [1, 1]} : vector<3x18xf32> to vector<1x18xf32>
    %1255 = vector.broadcast %1254 : vector<1x18xf32> to vector<6x18xf32>
    %1256 = arith.mulf %1253, %1255 : vector<6x18xf32>
    %c0_330 = arith.constant 0 : index
    %c22144 = arith.constant 22144 : index
    %1257 = vector.load %arg0[%c0_330, %c22144] : memref<8x36864xf32, #tpu.memory_space<vmem>>, vector<6x18xf32>
    %1258 = vector.extract_strided_slice %1251 {offsets = [1, 0], sizes = [1, 18], strides = [1, 1]} : vector<3x18xf32> to vector<1x18xf32>
    %1259 = vector.broadcast %1258 : vector<1x18xf32> to vector<6x18xf32>
    %1260 = arith.mulf %1257, %1259 : vector<6x18xf32>
    %c0_331 = arith.constant 0 : index
    %c22272 = arith.constant 22272 : index
    %1261 = vector.load %arg0[%c0_331, %c22272] : memref<8x36864xf32, #tpu.memory_space<vmem>>, vector<6x18xf32>
    %1262 = vector.extract_strided_slice %1251 {offsets = [2, 0], sizes = [1, 18], strides = [1, 1]} : vector<3x18xf32> to vector<1x18xf32>
    %1263 = vector.broadcast %1262 : vector<1x18xf32> to vector<6x18xf32>
    %1264 = arith.mulf %1261, %1263 : vector<6x18xf32>
    %1265 = arith.addf %1252, %1256 : vector<6x18xf32>
    %1266 = arith.addf %1260, %1264 : vector<6x18xf32>
    %1267 = arith.addf %1265, %1266 : vector<6x18xf32>
    %1268 = arith.addf %1267, %1125 : vector<6x18xf32>
    %c0_332 = arith.constant 0 : index
    %c22528 = arith.constant 22528 : index
    %1269 = vector.load %arg0[%c0_332, %c22528] : memref<8x36864xf32, #tpu.memory_space<vmem>>, vector<6x18xf32>
    %c0_333 = arith.constant 0 : index
    %c22656 = arith.constant 22656 : index
    %1270 = vector.load %arg0[%c0_333, %c22656] : memref<8x36864xf32, #tpu.memory_space<vmem>>, vector<6x18xf32>
    %cst_334 = arith.constant dense<0.000000e+00> : vector<6xf32>
    %1271 = vector.multi_reduction <add>, %1268, %cst_334 [1] : vector<6x18xf32> to vector<6xf32>
    %1272 = vector.shape_cast %1271 : vector<6xf32> to vector<6x1xf32>
    %cst_335 = arith.constant 1.800000e+01 : f32
    %1273 = vector.broadcast %cst_335 : f32 to vector<6x1xf32>
    %1274 = arith.divf %1272, %1273 : vector<6x1xf32>
    %1275 = arith.mulf %1268, %1268 : vector<6x18xf32>
    %cst_336 = arith.constant dense<0.000000e+00> : vector<6xf32>
    %1276 = vector.multi_reduction <add>, %1275, %cst_336 [1] : vector<6x18xf32> to vector<6xf32>
    %1277 = vector.shape_cast %1276 : vector<6xf32> to vector<6x1xf32>
    %cst_337 = arith.constant 1.800000e+01 : f32
    %1278 = vector.broadcast %cst_337 : f32 to vector<6x1xf32>
    %1279 = arith.divf %1277, %1278 : vector<6x1xf32>
    %1280 = arith.mulf %1274, %1274 : vector<6x1xf32>
    %1281 = arith.subf %1279, %1280 : vector<6x1xf32>
    %cst_338 = arith.constant 0.000000e+00 : f32
    %1282 = vector.broadcast %cst_338 : f32 to vector<6x1xf32>
    %1283 = arith.maximumf %1281, %1282 : vector<6x1xf32>
    %cst_339 = arith.constant 9.99999974E-6 : f32
    %1284 = vector.broadcast %cst_339 : f32 to vector<6x1xf32>
    %1285 = arith.addf %1283, %1284 : vector<6x1xf32>
    %1286 = math.rsqrt %1285 : vector<6x1xf32>
    %1287 = vector.broadcast %1286 : vector<6x1xf32> to vector<6x18xf32>
    %1288 = arith.mulf %1269, %1287 : vector<6x18xf32>
    %1289 = vector.broadcast %1274 : vector<6x1xf32> to vector<6x18xf32>
    %1290 = arith.mulf %1289, %1288 : vector<6x18xf32>
    %1291 = arith.subf %1270, %1290 : vector<6x18xf32>
    %1292 = arith.mulf %1268, %1288 : vector<6x18xf32>
    %1293 = arith.addf %1292, %1291 : vector<6x18xf32>
    %cst_340 = arith.constant 0.000000e+00 : f32
    %1294 = vector.broadcast %cst_340 : f32 to vector<6x18xf32>
    %1295 = arith.maximumf %1293, %1294 : vector<6x18xf32>
    %c0_341 = arith.constant 0 : index
    %c23552 = arith.constant 23552 : index
    %1296 = vector.load %arg0[%c0_341, %c23552] : memref<8x36864xf32, #tpu.memory_space<vmem>>, vector<3x18xf32>
    %c0_342 = arith.constant 0 : index
    %c22784 = arith.constant 22784 : index
    %1297 = vector.load %arg0[%c0_342, %c22784] : memref<8x36864xf32, #tpu.memory_space<vmem>>, vector<3x18xf32>
    %1298 = vector.extract_strided_slice %1295 {offsets = [0, 0], sizes = [1, 18], strides = [1, 1]} : vector<6x18xf32> to vector<1x18xf32>
    %1299 = vector.broadcast %1298 : vector<1x18xf32> to vector<3x18xf32>
    %1300 = arith.mulf %1297, %1299 : vector<3x18xf32>
    %c0_343 = arith.constant 0 : index
    %c22912 = arith.constant 22912 : index
    %1301 = vector.load %arg0[%c0_343, %c22912] : memref<8x36864xf32, #tpu.memory_space<vmem>>, vector<3x18xf32>
    %1302 = vector.extract_strided_slice %1295 {offsets = [1, 0], sizes = [1, 18], strides = [1, 1]} : vector<6x18xf32> to vector<1x18xf32>
    %1303 = vector.broadcast %1302 : vector<1x18xf32> to vector<3x18xf32>
    %1304 = arith.mulf %1301, %1303 : vector<3x18xf32>
    %c0_344 = arith.constant 0 : index
    %c23040 = arith.constant 23040 : index
    %1305 = vector.load %arg0[%c0_344, %c23040] : memref<8x36864xf32, #tpu.memory_space<vmem>>, vector<3x18xf32>
    %1306 = vector.extract_strided_slice %1295 {offsets = [2, 0], sizes = [1, 18], strides = [1, 1]} : vector<6x18xf32> to vector<1x18xf32>
    %1307 = vector.broadcast %1306 : vector<1x18xf32> to vector<3x18xf32>
    %1308 = arith.mulf %1305, %1307 : vector<3x18xf32>
    %c0_345 = arith.constant 0 : index
    %c23168 = arith.constant 23168 : index
    %1309 = vector.load %arg0[%c0_345, %c23168] : memref<8x36864xf32, #tpu.memory_space<vmem>>, vector<3x18xf32>
    %1310 = vector.extract_strided_slice %1295 {offsets = [3, 0], sizes = [1, 18], strides = [1, 1]} : vector<6x18xf32> to vector<1x18xf32>
    %1311 = vector.broadcast %1310 : vector<1x18xf32> to vector<3x18xf32>
    %1312 = arith.mulf %1309, %1311 : vector<3x18xf32>
    %c0_346 = arith.constant 0 : index
    %c23296 = arith.constant 23296 : index
    %1313 = vector.load %arg0[%c0_346, %c23296] : memref<8x36864xf32, #tpu.memory_space<vmem>>, vector<3x18xf32>
    %1314 = vector.extract_strided_slice %1295 {offsets = [4, 0], sizes = [1, 18], strides = [1, 1]} : vector<6x18xf32> to vector<1x18xf32>
    %1315 = vector.broadcast %1314 : vector<1x18xf32> to vector<3x18xf32>
    %1316 = arith.mulf %1313, %1315 : vector<3x18xf32>
    %c0_347 = arith.constant 0 : index
    %c23424 = arith.constant 23424 : index
    %1317 = vector.load %arg0[%c0_347, %c23424] : memref<8x36864xf32, #tpu.memory_space<vmem>>, vector<3x18xf32>
    %1318 = vector.extract_strided_slice %1295 {offsets = [5, 0], sizes = [1, 18], strides = [1, 1]} : vector<6x18xf32> to vector<1x18xf32>
    %1319 = vector.broadcast %1318 : vector<1x18xf32> to vector<3x18xf32>
    %1320 = arith.mulf %1317, %1319 : vector<3x18xf32>
    %1321 = arith.addf %1296, %1300 : vector<3x18xf32>
    %1322 = arith.addf %1304, %1308 : vector<3x18xf32>
    %1323 = arith.addf %1312, %1316 : vector<3x18xf32>
    %1324 = arith.addf %1321, %1322 : vector<3x18xf32>
    %1325 = arith.addf %1323, %1320 : vector<3x18xf32>
    %1326 = arith.addf %1324, %1325 : vector<3x18xf32>
    %c0_348 = arith.constant 0 : index
    %c23680 = arith.constant 23680 : index
    %1327 = vector.load %arg0[%c0_348, %c23680] : memref<8x36864xf32, #tpu.memory_space<vmem>>, vector<3x18xf32>
    %c0_349 = arith.constant 0 : index
    %c23808 = arith.constant 23808 : index
    %1328 = vector.load %arg0[%c0_349, %c23808] : memref<8x36864xf32, #tpu.memory_space<vmem>>, vector<3x18xf32>
    %1329 = arith.mulf %1326, %1326 : vector<3x18xf32>
    %1330 = tpu.concatenate %1326, %1329 in 0 : vector<3x18xf32>, vector<3x18xf32> -> vector<6x18xf32>
    %cst_350 = arith.constant dense<0.000000e+00> : vector<6xf32>
    %1331 = vector.multi_reduction <add>, %1330, %cst_350 [1] : vector<6x18xf32> to vector<6xf32>
    %1332 = vector.shape_cast %1331 : vector<6xf32> to vector<6x1xf32>
    %cst_351 = arith.constant 0.055555556 : f32
    %1333 = vector.broadcast %cst_351 : f32 to vector<6x1xf32>
    %1334 = arith.mulf %1332, %1333 : vector<6x1xf32>
    %1335 = vector.extract_strided_slice %1334 {offsets = [0, 0], sizes = [3, 1], strides = [1, 1]} : vector<6x1xf32> to vector<3x1xf32>
    %1336 = vector.extract_strided_slice %1334 {offsets = [3, 0], sizes = [3, 1], strides = [1, 1]} : vector<6x1xf32> to vector<3x1xf32>
    %1337 = arith.mulf %1335, %1335 : vector<3x1xf32>
    %1338 = arith.subf %1336, %1337 : vector<3x1xf32>
    %cst_352 = arith.constant 0.000000e+00 : f32
    %1339 = vector.broadcast %cst_352 : f32 to vector<3x1xf32>
    %1340 = arith.maximumf %1338, %1339 : vector<3x1xf32>
    %cst_353 = arith.constant 9.99999974E-6 : f32
    %1341 = vector.broadcast %cst_353 : f32 to vector<3x1xf32>
    %1342 = arith.addf %1340, %1341 : vector<3x1xf32>
    %1343 = math.rsqrt %1342 : vector<3x1xf32>
    %1344 = vector.broadcast %1343 : vector<3x1xf32> to vector<3x18xf32>
    %1345 = arith.mulf %1327, %1344 : vector<3x18xf32>
    %1346 = vector.broadcast %1335 : vector<3x1xf32> to vector<3x18xf32>
    %1347 = arith.mulf %1346, %1345 : vector<3x18xf32>
    %1348 = arith.subf %1328, %1347 : vector<3x18xf32>
    %1349 = arith.mulf %1326, %1345 : vector<3x18xf32>
    %1350 = arith.addf %1349, %1348 : vector<3x18xf32>
    %cst_354 = arith.constant 0.000000e+00 : f32
    %1351 = vector.broadcast %cst_354 : f32 to vector<3x18xf32>
    %1352 = arith.maximumf %1350, %1351 : vector<3x18xf32>
    %c0_355 = arith.constant 0 : index
    %c24320 = arith.constant 24320 : index
    %1353 = vector.load %arg0[%c0_355, %c24320] : memref<8x36864xf32, #tpu.memory_space<vmem>>, vector<3x18xf32>
    %c0_356 = arith.constant 0 : index
    %c23936 = arith.constant 23936 : index
    %1354 = vector.load %arg0[%c0_356, %c23936] : memref<8x36864xf32, #tpu.memory_space<vmem>>, vector<3x18xf32>
    %1355 = vector.extract_strided_slice %1352 {offsets = [0, 0], sizes = [1, 18], strides = [1, 1]} : vector<3x18xf32> to vector<1x18xf32>
    %1356 = vector.broadcast %1355 : vector<1x18xf32> to vector<3x18xf32>
    %1357 = arith.mulf %1354, %1356 : vector<3x18xf32>
    %c0_357 = arith.constant 0 : index
    %c24064 = arith.constant 24064 : index
    %1358 = vector.load %arg0[%c0_357, %c24064] : memref<8x36864xf32, #tpu.memory_space<vmem>>, vector<3x18xf32>
    %1359 = vector.extract_strided_slice %1352 {offsets = [1, 0], sizes = [1, 18], strides = [1, 1]} : vector<3x18xf32> to vector<1x18xf32>
    %1360 = vector.broadcast %1359 : vector<1x18xf32> to vector<3x18xf32>
    %1361 = arith.mulf %1358, %1360 : vector<3x18xf32>
    %c0_358 = arith.constant 0 : index
    %c24192 = arith.constant 24192 : index
    %1362 = vector.load %arg0[%c0_358, %c24192] : memref<8x36864xf32, #tpu.memory_space<vmem>>, vector<3x18xf32>
    %1363 = vector.extract_strided_slice %1352 {offsets = [2, 0], sizes = [1, 18], strides = [1, 1]} : vector<3x18xf32> to vector<1x18xf32>
    %1364 = vector.broadcast %1363 : vector<1x18xf32> to vector<3x18xf32>
    %1365 = arith.mulf %1362, %1364 : vector<3x18xf32>
    %1366 = arith.addf %1353, %1357 : vector<3x18xf32>
    %1367 = arith.addf %1361, %1365 : vector<3x18xf32>
    %1368 = arith.addf %1366, %1367 : vector<3x18xf32>
    %c0_359 = arith.constant 0 : index
    %c24448 = arith.constant 24448 : index
    %1369 = vector.load %arg0[%c0_359, %c24448] : memref<8x36864xf32, #tpu.memory_space<vmem>>, vector<3x18xf32>
    %c0_360 = arith.constant 0 : index
    %c24576 = arith.constant 24576 : index
    %1370 = vector.load %arg0[%c0_360, %c24576] : memref<8x36864xf32, #tpu.memory_space<vmem>>, vector<3x18xf32>
    %1371 = arith.mulf %1368, %1368 : vector<3x18xf32>
    %1372 = tpu.concatenate %1368, %1371 in 0 : vector<3x18xf32>, vector<3x18xf32> -> vector<6x18xf32>
    %cst_361 = arith.constant dense<0.000000e+00> : vector<6xf32>
    %1373 = vector.multi_reduction <add>, %1372, %cst_361 [1] : vector<6x18xf32> to vector<6xf32>
    %1374 = vector.shape_cast %1373 : vector<6xf32> to vector<6x1xf32>
    %cst_362 = arith.constant 0.055555556 : f32
    %1375 = vector.broadcast %cst_362 : f32 to vector<6x1xf32>
    %1376 = arith.mulf %1374, %1375 : vector<6x1xf32>
    %1377 = vector.extract_strided_slice %1376 {offsets = [0, 0], sizes = [3, 1], strides = [1, 1]} : vector<6x1xf32> to vector<3x1xf32>
    %1378 = vector.extract_strided_slice %1376 {offsets = [3, 0], sizes = [3, 1], strides = [1, 1]} : vector<6x1xf32> to vector<3x1xf32>
    %1379 = arith.mulf %1377, %1377 : vector<3x1xf32>
    %1380 = arith.subf %1378, %1379 : vector<3x1xf32>
    %cst_363 = arith.constant 0.000000e+00 : f32
    %1381 = vector.broadcast %cst_363 : f32 to vector<3x1xf32>
    %1382 = arith.maximumf %1380, %1381 : vector<3x1xf32>
    %cst_364 = arith.constant 9.99999974E-6 : f32
    %1383 = vector.broadcast %cst_364 : f32 to vector<3x1xf32>
    %1384 = arith.addf %1382, %1383 : vector<3x1xf32>
    %1385 = math.rsqrt %1384 : vector<3x1xf32>
    %1386 = vector.broadcast %1385 : vector<3x1xf32> to vector<3x18xf32>
    %1387 = arith.mulf %1369, %1386 : vector<3x18xf32>
    %1388 = vector.broadcast %1377 : vector<3x1xf32> to vector<3x18xf32>
    %1389 = arith.mulf %1388, %1387 : vector<3x18xf32>
    %1390 = arith.subf %1370, %1389 : vector<3x18xf32>
    %1391 = arith.mulf %1368, %1387 : vector<3x18xf32>
    %1392 = arith.addf %1391, %1390 : vector<3x18xf32>
    %cst_365 = arith.constant 0.000000e+00 : f32
    %1393 = vector.broadcast %cst_365 : f32 to vector<3x18xf32>
    %1394 = arith.maximumf %1392, %1393 : vector<3x18xf32>
    %c0_366 = arith.constant 0 : index
    %c25088 = arith.constant 25088 : index
    %1395 = vector.load %arg0[%c0_366, %c25088] : memref<8x36864xf32, #tpu.memory_space<vmem>>, vector<6x18xf32>
    %c0_367 = arith.constant 0 : index
    %c24704 = arith.constant 24704 : index
    %1396 = vector.load %arg0[%c0_367, %c24704] : memref<8x36864xf32, #tpu.memory_space<vmem>>, vector<6x18xf32>
    %1397 = vector.extract_strided_slice %1394 {offsets = [0, 0], sizes = [1, 18], strides = [1, 1]} : vector<3x18xf32> to vector<1x18xf32>
    %1398 = vector.broadcast %1397 : vector<1x18xf32> to vector<6x18xf32>
    %1399 = arith.mulf %1396, %1398 : vector<6x18xf32>
    %c0_368 = arith.constant 0 : index
    %c24832 = arith.constant 24832 : index
    %1400 = vector.load %arg0[%c0_368, %c24832] : memref<8x36864xf32, #tpu.memory_space<vmem>>, vector<6x18xf32>
    %1401 = vector.extract_strided_slice %1394 {offsets = [1, 0], sizes = [1, 18], strides = [1, 1]} : vector<3x18xf32> to vector<1x18xf32>
    %1402 = vector.broadcast %1401 : vector<1x18xf32> to vector<6x18xf32>
    %1403 = arith.mulf %1400, %1402 : vector<6x18xf32>
    %c0_369 = arith.constant 0 : index
    %c24960 = arith.constant 24960 : index
    %1404 = vector.load %arg0[%c0_369, %c24960] : memref<8x36864xf32, #tpu.memory_space<vmem>>, vector<6x18xf32>
    %1405 = vector.extract_strided_slice %1394 {offsets = [2, 0], sizes = [1, 18], strides = [1, 1]} : vector<3x18xf32> to vector<1x18xf32>
    %1406 = vector.broadcast %1405 : vector<1x18xf32> to vector<6x18xf32>
    %1407 = arith.mulf %1404, %1406 : vector<6x18xf32>
    %1408 = arith.addf %1395, %1399 : vector<6x18xf32>
    %1409 = arith.addf %1403, %1407 : vector<6x18xf32>
    %1410 = arith.addf %1408, %1409 : vector<6x18xf32>
    %c0_370 = arith.constant 0 : index
    %c25216 = arith.constant 25216 : index
    %1411 = vector.load %arg0[%c0_370, %c25216] : memref<8x36864xf32, #tpu.memory_space<vmem>>, vector<6x18xf32>
    %c0_371 = arith.constant 0 : index
    %c25344 = arith.constant 25344 : index
    %1412 = vector.load %arg0[%c0_371, %c25344] : memref<8x36864xf32, #tpu.memory_space<vmem>>, vector<6x18xf32>
    %cst_372 = arith.constant dense<0.000000e+00> : vector<6xf32>
    %1413 = vector.multi_reduction <add>, %1410, %cst_372 [1] : vector<6x18xf32> to vector<6xf32>
    %1414 = vector.shape_cast %1413 : vector<6xf32> to vector<6x1xf32>
    %cst_373 = arith.constant 1.800000e+01 : f32
    %1415 = vector.broadcast %cst_373 : f32 to vector<6x1xf32>
    %1416 = arith.divf %1414, %1415 : vector<6x1xf32>
    %1417 = arith.mulf %1410, %1410 : vector<6x18xf32>
    %cst_374 = arith.constant dense<0.000000e+00> : vector<6xf32>
    %1418 = vector.multi_reduction <add>, %1417, %cst_374 [1] : vector<6x18xf32> to vector<6xf32>
    %1419 = vector.shape_cast %1418 : vector<6xf32> to vector<6x1xf32>
    %cst_375 = arith.constant 1.800000e+01 : f32
    %1420 = vector.broadcast %cst_375 : f32 to vector<6x1xf32>
    %1421 = arith.divf %1419, %1420 : vector<6x1xf32>
    %1422 = arith.mulf %1416, %1416 : vector<6x1xf32>
    %1423 = arith.subf %1421, %1422 : vector<6x1xf32>
    %cst_376 = arith.constant 0.000000e+00 : f32
    %1424 = vector.broadcast %cst_376 : f32 to vector<6x1xf32>
    %1425 = arith.maximumf %1423, %1424 : vector<6x1xf32>
    %cst_377 = arith.constant 9.99999974E-6 : f32
    %1426 = vector.broadcast %cst_377 : f32 to vector<6x1xf32>
    %1427 = arith.addf %1425, %1426 : vector<6x1xf32>
    %1428 = math.rsqrt %1427 : vector<6x1xf32>
    %1429 = vector.broadcast %1428 : vector<6x1xf32> to vector<6x18xf32>
    %1430 = arith.mulf %1411, %1429 : vector<6x18xf32>
    %1431 = vector.broadcast %1416 : vector<6x1xf32> to vector<6x18xf32>
    %1432 = arith.mulf %1431, %1430 : vector<6x18xf32>
    %1433 = arith.subf %1412, %1432 : vector<6x18xf32>
    %1434 = arith.mulf %1410, %1430 : vector<6x18xf32>
    %1435 = arith.addf %1434, %1433 : vector<6x18xf32>
    %cst_378 = arith.constant 0.000000e+00 : f32
    %1436 = vector.broadcast %cst_378 : f32 to vector<6x18xf32>
    %1437 = arith.maximumf %1435, %1436 : vector<6x18xf32>
    %c0_379 = arith.constant 0 : index
    %c26240 = arith.constant 26240 : index
    %1438 = vector.load %arg0[%c0_379, %c26240] : memref<8x36864xf32, #tpu.memory_space<vmem>>, vector<3x18xf32>
    %c0_380 = arith.constant 0 : index
    %c25472 = arith.constant 25472 : index
    %1439 = vector.load %arg0[%c0_380, %c25472] : memref<8x36864xf32, #tpu.memory_space<vmem>>, vector<3x18xf32>
    %1440 = vector.extract_strided_slice %1437 {offsets = [0, 0], sizes = [1, 18], strides = [1, 1]} : vector<6x18xf32> to vector<1x18xf32>
    %1441 = vector.broadcast %1440 : vector<1x18xf32> to vector<3x18xf32>
    %1442 = arith.mulf %1439, %1441 : vector<3x18xf32>
    %c0_381 = arith.constant 0 : index
    %c25600 = arith.constant 25600 : index
    %1443 = vector.load %arg0[%c0_381, %c25600] : memref<8x36864xf32, #tpu.memory_space<vmem>>, vector<3x18xf32>
    %1444 = vector.extract_strided_slice %1437 {offsets = [1, 0], sizes = [1, 18], strides = [1, 1]} : vector<6x18xf32> to vector<1x18xf32>
    %1445 = vector.broadcast %1444 : vector<1x18xf32> to vector<3x18xf32>
    %1446 = arith.mulf %1443, %1445 : vector<3x18xf32>
    %c0_382 = arith.constant 0 : index
    %c25728 = arith.constant 25728 : index
    %1447 = vector.load %arg0[%c0_382, %c25728] : memref<8x36864xf32, #tpu.memory_space<vmem>>, vector<3x18xf32>
    %1448 = vector.extract_strided_slice %1437 {offsets = [2, 0], sizes = [1, 18], strides = [1, 1]} : vector<6x18xf32> to vector<1x18xf32>
    %1449 = vector.broadcast %1448 : vector<1x18xf32> to vector<3x18xf32>
    %1450 = arith.mulf %1447, %1449 : vector<3x18xf32>
    %c0_383 = arith.constant 0 : index
    %c25856 = arith.constant 25856 : index
    %1451 = vector.load %arg0[%c0_383, %c25856] : memref<8x36864xf32, #tpu.memory_space<vmem>>, vector<3x18xf32>
    %1452 = vector.extract_strided_slice %1437 {offsets = [3, 0], sizes = [1, 18], strides = [1, 1]} : vector<6x18xf32> to vector<1x18xf32>
    %1453 = vector.broadcast %1452 : vector<1x18xf32> to vector<3x18xf32>
    %1454 = arith.mulf %1451, %1453 : vector<3x18xf32>
    %c0_384 = arith.constant 0 : index
    %c25984 = arith.constant 25984 : index
    %1455 = vector.load %arg0[%c0_384, %c25984] : memref<8x36864xf32, #tpu.memory_space<vmem>>, vector<3x18xf32>
    %1456 = vector.extract_strided_slice %1437 {offsets = [4, 0], sizes = [1, 18], strides = [1, 1]} : vector<6x18xf32> to vector<1x18xf32>
    %1457 = vector.broadcast %1456 : vector<1x18xf32> to vector<3x18xf32>
    %1458 = arith.mulf %1455, %1457 : vector<3x18xf32>
    %c0_385 = arith.constant 0 : index
    %c26112 = arith.constant 26112 : index
    %1459 = vector.load %arg0[%c0_385, %c26112] : memref<8x36864xf32, #tpu.memory_space<vmem>>, vector<3x18xf32>
    %1460 = vector.extract_strided_slice %1437 {offsets = [5, 0], sizes = [1, 18], strides = [1, 1]} : vector<6x18xf32> to vector<1x18xf32>
    %1461 = vector.broadcast %1460 : vector<1x18xf32> to vector<3x18xf32>
    %1462 = arith.mulf %1459, %1461 : vector<3x18xf32>
    %1463 = arith.addf %1438, %1442 : vector<3x18xf32>
    %1464 = arith.addf %1446, %1450 : vector<3x18xf32>
    %1465 = arith.addf %1454, %1458 : vector<3x18xf32>
    %1466 = arith.addf %1463, %1464 : vector<3x18xf32>
    %1467 = arith.addf %1465, %1462 : vector<3x18xf32>
    %1468 = arith.addf %1466, %1467 : vector<3x18xf32>
    %c0_386 = arith.constant 0 : index
    %c26368 = arith.constant 26368 : index
    %1469 = vector.load %arg0[%c0_386, %c26368] : memref<8x36864xf32, #tpu.memory_space<vmem>>, vector<3x18xf32>
    %c0_387 = arith.constant 0 : index
    %c26496 = arith.constant 26496 : index
    %1470 = vector.load %arg0[%c0_387, %c26496] : memref<8x36864xf32, #tpu.memory_space<vmem>>, vector<3x18xf32>
    %1471 = arith.mulf %1468, %1468 : vector<3x18xf32>
    %1472 = tpu.concatenate %1468, %1471 in 0 : vector<3x18xf32>, vector<3x18xf32> -> vector<6x18xf32>
    %cst_388 = arith.constant dense<0.000000e+00> : vector<6xf32>
    %1473 = vector.multi_reduction <add>, %1472, %cst_388 [1] : vector<6x18xf32> to vector<6xf32>
    %1474 = vector.shape_cast %1473 : vector<6xf32> to vector<6x1xf32>
    %cst_389 = arith.constant 0.055555556 : f32
    %1475 = vector.broadcast %cst_389 : f32 to vector<6x1xf32>
    %1476 = arith.mulf %1474, %1475 : vector<6x1xf32>
    %1477 = vector.extract_strided_slice %1476 {offsets = [0, 0], sizes = [3, 1], strides = [1, 1]} : vector<6x1xf32> to vector<3x1xf32>
    %1478 = vector.extract_strided_slice %1476 {offsets = [3, 0], sizes = [3, 1], strides = [1, 1]} : vector<6x1xf32> to vector<3x1xf32>
    %1479 = arith.mulf %1477, %1477 : vector<3x1xf32>
    %1480 = arith.subf %1478, %1479 : vector<3x1xf32>
    %cst_390 = arith.constant 0.000000e+00 : f32
    %1481 = vector.broadcast %cst_390 : f32 to vector<3x1xf32>
    %1482 = arith.maximumf %1480, %1481 : vector<3x1xf32>
    %cst_391 = arith.constant 9.99999974E-6 : f32
    %1483 = vector.broadcast %cst_391 : f32 to vector<3x1xf32>
    %1484 = arith.addf %1482, %1483 : vector<3x1xf32>
    %1485 = math.rsqrt %1484 : vector<3x1xf32>
    %1486 = vector.broadcast %1485 : vector<3x1xf32> to vector<3x18xf32>
    %1487 = arith.mulf %1469, %1486 : vector<3x18xf32>
    %1488 = vector.broadcast %1477 : vector<3x1xf32> to vector<3x18xf32>
    %1489 = arith.mulf %1488, %1487 : vector<3x18xf32>
    %1490 = arith.subf %1470, %1489 : vector<3x18xf32>
    %1491 = arith.mulf %1468, %1487 : vector<3x18xf32>
    %1492 = arith.addf %1491, %1490 : vector<3x18xf32>
    %cst_392 = arith.constant 0.000000e+00 : f32
    %1493 = vector.broadcast %cst_392 : f32 to vector<3x18xf32>
    %1494 = arith.maximumf %1492, %1493 : vector<3x18xf32>
    %c0_393 = arith.constant 0 : index
    %c27008 = arith.constant 27008 : index
    %1495 = vector.load %arg0[%c0_393, %c27008] : memref<8x36864xf32, #tpu.memory_space<vmem>>, vector<3x18xf32>
    %c0_394 = arith.constant 0 : index
    %c26624 = arith.constant 26624 : index
    %1496 = vector.load %arg0[%c0_394, %c26624] : memref<8x36864xf32, #tpu.memory_space<vmem>>, vector<3x18xf32>
    %1497 = vector.extract_strided_slice %1494 {offsets = [0, 0], sizes = [1, 18], strides = [1, 1]} : vector<3x18xf32> to vector<1x18xf32>
    %1498 = vector.broadcast %1497 : vector<1x18xf32> to vector<3x18xf32>
    %1499 = arith.mulf %1496, %1498 : vector<3x18xf32>
    %c0_395 = arith.constant 0 : index
    %c26752 = arith.constant 26752 : index
    %1500 = vector.load %arg0[%c0_395, %c26752] : memref<8x36864xf32, #tpu.memory_space<vmem>>, vector<3x18xf32>
    %1501 = vector.extract_strided_slice %1494 {offsets = [1, 0], sizes = [1, 18], strides = [1, 1]} : vector<3x18xf32> to vector<1x18xf32>
    %1502 = vector.broadcast %1501 : vector<1x18xf32> to vector<3x18xf32>
    %1503 = arith.mulf %1500, %1502 : vector<3x18xf32>
    %c0_396 = arith.constant 0 : index
    %c26880 = arith.constant 26880 : index
    %1504 = vector.load %arg0[%c0_396, %c26880] : memref<8x36864xf32, #tpu.memory_space<vmem>>, vector<3x18xf32>
    %1505 = vector.extract_strided_slice %1494 {offsets = [2, 0], sizes = [1, 18], strides = [1, 1]} : vector<3x18xf32> to vector<1x18xf32>
    %1506 = vector.broadcast %1505 : vector<1x18xf32> to vector<3x18xf32>
    %1507 = arith.mulf %1504, %1506 : vector<3x18xf32>
    %1508 = arith.addf %1495, %1499 : vector<3x18xf32>
    %1509 = arith.addf %1503, %1507 : vector<3x18xf32>
    %1510 = arith.addf %1508, %1509 : vector<3x18xf32>
    %c0_397 = arith.constant 0 : index
    %c27136 = arith.constant 27136 : index
    %1511 = vector.load %arg0[%c0_397, %c27136] : memref<8x36864xf32, #tpu.memory_space<vmem>>, vector<3x18xf32>
    %c0_398 = arith.constant 0 : index
    %c27264 = arith.constant 27264 : index
    %1512 = vector.load %arg0[%c0_398, %c27264] : memref<8x36864xf32, #tpu.memory_space<vmem>>, vector<3x18xf32>
    %1513 = arith.mulf %1510, %1510 : vector<3x18xf32>
    %1514 = tpu.concatenate %1510, %1513 in 0 : vector<3x18xf32>, vector<3x18xf32> -> vector<6x18xf32>
    %cst_399 = arith.constant dense<0.000000e+00> : vector<6xf32>
    %1515 = vector.multi_reduction <add>, %1514, %cst_399 [1] : vector<6x18xf32> to vector<6xf32>
    %1516 = vector.shape_cast %1515 : vector<6xf32> to vector<6x1xf32>
    %cst_400 = arith.constant 0.055555556 : f32
    %1517 = vector.broadcast %cst_400 : f32 to vector<6x1xf32>
    %1518 = arith.mulf %1516, %1517 : vector<6x1xf32>
    %1519 = vector.extract_strided_slice %1518 {offsets = [0, 0], sizes = [3, 1], strides = [1, 1]} : vector<6x1xf32> to vector<3x1xf32>
    %1520 = vector.extract_strided_slice %1518 {offsets = [3, 0], sizes = [3, 1], strides = [1, 1]} : vector<6x1xf32> to vector<3x1xf32>
    %1521 = arith.mulf %1519, %1519 : vector<3x1xf32>
    %1522 = arith.subf %1520, %1521 : vector<3x1xf32>
    %cst_401 = arith.constant 0.000000e+00 : f32
    %1523 = vector.broadcast %cst_401 : f32 to vector<3x1xf32>
    %1524 = arith.maximumf %1522, %1523 : vector<3x1xf32>
    %cst_402 = arith.constant 9.99999974E-6 : f32
    %1525 = vector.broadcast %cst_402 : f32 to vector<3x1xf32>
    %1526 = arith.addf %1524, %1525 : vector<3x1xf32>
    %1527 = math.rsqrt %1526 : vector<3x1xf32>
    %1528 = vector.broadcast %1527 : vector<3x1xf32> to vector<3x18xf32>
    %1529 = arith.mulf %1511, %1528 : vector<3x18xf32>
    %1530 = vector.broadcast %1519 : vector<3x1xf32> to vector<3x18xf32>
    %1531 = arith.mulf %1530, %1529 : vector<3x18xf32>
    %1532 = arith.subf %1512, %1531 : vector<3x18xf32>
    %1533 = arith.mulf %1510, %1529 : vector<3x18xf32>
    %1534 = arith.addf %1533, %1532 : vector<3x18xf32>
    %cst_403 = arith.constant 0.000000e+00 : f32
    %1535 = vector.broadcast %cst_403 : f32 to vector<3x18xf32>
    %1536 = arith.maximumf %1534, %1535 : vector<3x18xf32>
    %c0_404 = arith.constant 0 : index
    %c27776 = arith.constant 27776 : index
    %1537 = vector.load %arg0[%c0_404, %c27776] : memref<8x36864xf32, #tpu.memory_space<vmem>>, vector<6x18xf32>
    %c0_405 = arith.constant 0 : index
    %c27392 = arith.constant 27392 : index
    %1538 = vector.load %arg0[%c0_405, %c27392] : memref<8x36864xf32, #tpu.memory_space<vmem>>, vector<6x18xf32>
    %1539 = vector.extract_strided_slice %1536 {offsets = [0, 0], sizes = [1, 18], strides = [1, 1]} : vector<3x18xf32> to vector<1x18xf32>
    %1540 = vector.broadcast %1539 : vector<1x18xf32> to vector<6x18xf32>
    %1541 = arith.mulf %1538, %1540 : vector<6x18xf32>
    %c0_406 = arith.constant 0 : index
    %c27520 = arith.constant 27520 : index
    %1542 = vector.load %arg0[%c0_406, %c27520] : memref<8x36864xf32, #tpu.memory_space<vmem>>, vector<6x18xf32>
    %1543 = vector.extract_strided_slice %1536 {offsets = [1, 0], sizes = [1, 18], strides = [1, 1]} : vector<3x18xf32> to vector<1x18xf32>
    %1544 = vector.broadcast %1543 : vector<1x18xf32> to vector<6x18xf32>
    %1545 = arith.mulf %1542, %1544 : vector<6x18xf32>
    %c0_407 = arith.constant 0 : index
    %c27648 = arith.constant 27648 : index
    %1546 = vector.load %arg0[%c0_407, %c27648] : memref<8x36864xf32, #tpu.memory_space<vmem>>, vector<6x18xf32>
    %1547 = vector.extract_strided_slice %1536 {offsets = [2, 0], sizes = [1, 18], strides = [1, 1]} : vector<3x18xf32> to vector<1x18xf32>
    %1548 = vector.broadcast %1547 : vector<1x18xf32> to vector<6x18xf32>
    %1549 = arith.mulf %1546, %1548 : vector<6x18xf32>
    %1550 = arith.addf %1537, %1541 : vector<6x18xf32>
    %1551 = arith.addf %1545, %1549 : vector<6x18xf32>
    %1552 = arith.addf %1550, %1551 : vector<6x18xf32>
    %c0_408 = arith.constant 0 : index
    %c27904 = arith.constant 27904 : index
    %1553 = vector.load %arg0[%c0_408, %c27904] : memref<8x36864xf32, #tpu.memory_space<vmem>>, vector<6x18xf32>
    %c0_409 = arith.constant 0 : index
    %c28032 = arith.constant 28032 : index
    %1554 = vector.load %arg0[%c0_409, %c28032] : memref<8x36864xf32, #tpu.memory_space<vmem>>, vector<6x18xf32>
    %cst_410 = arith.constant dense<0.000000e+00> : vector<6xf32>
    %1555 = vector.multi_reduction <add>, %1552, %cst_410 [1] : vector<6x18xf32> to vector<6xf32>
    %1556 = vector.shape_cast %1555 : vector<6xf32> to vector<6x1xf32>
    %cst_411 = arith.constant 1.800000e+01 : f32
    %1557 = vector.broadcast %cst_411 : f32 to vector<6x1xf32>
    %1558 = arith.divf %1556, %1557 : vector<6x1xf32>
    %1559 = arith.mulf %1552, %1552 : vector<6x18xf32>
    %cst_412 = arith.constant dense<0.000000e+00> : vector<6xf32>
    %1560 = vector.multi_reduction <add>, %1559, %cst_412 [1] : vector<6x18xf32> to vector<6xf32>
    %1561 = vector.shape_cast %1560 : vector<6xf32> to vector<6x1xf32>
    %cst_413 = arith.constant 1.800000e+01 : f32
    %1562 = vector.broadcast %cst_413 : f32 to vector<6x1xf32>
    %1563 = arith.divf %1561, %1562 : vector<6x1xf32>
    %1564 = arith.mulf %1558, %1558 : vector<6x1xf32>
    %1565 = arith.subf %1563, %1564 : vector<6x1xf32>
    %cst_414 = arith.constant 0.000000e+00 : f32
    %1566 = vector.broadcast %cst_414 : f32 to vector<6x1xf32>
    %1567 = arith.maximumf %1565, %1566 : vector<6x1xf32>
    %cst_415 = arith.constant 9.99999974E-6 : f32
    %1568 = vector.broadcast %cst_415 : f32 to vector<6x1xf32>
    %1569 = arith.addf %1567, %1568 : vector<6x1xf32>
    %1570 = math.rsqrt %1569 : vector<6x1xf32>
    %1571 = vector.broadcast %1570 : vector<6x1xf32> to vector<6x18xf32>
    %1572 = arith.mulf %1553, %1571 : vector<6x18xf32>
    %1573 = vector.broadcast %1558 : vector<6x1xf32> to vector<6x18xf32>
    %1574 = arith.mulf %1573, %1572 : vector<6x18xf32>
    %1575 = arith.subf %1554, %1574 : vector<6x18xf32>
    %1576 = arith.mulf %1552, %1572 : vector<6x18xf32>
    %1577 = arith.addf %1576, %1575 : vector<6x18xf32>
    %cst_416 = arith.constant 0.000000e+00 : f32
    %1578 = vector.broadcast %cst_416 : f32 to vector<6x18xf32>
    %1579 = arith.maximumf %1577, %1578 : vector<6x18xf32>
    %c0_417 = arith.constant 0 : index
    %c28928 = arith.constant 28928 : index
    %1580 = vector.load %arg0[%c0_417, %c28928] : memref<8x36864xf32, #tpu.memory_space<vmem>>, vector<3x18xf32>
    %c0_418 = arith.constant 0 : index
    %c28160 = arith.constant 28160 : index
    %1581 = vector.load %arg0[%c0_418, %c28160] : memref<8x36864xf32, #tpu.memory_space<vmem>>, vector<3x18xf32>
    %1582 = vector.extract_strided_slice %1579 {offsets = [0, 0], sizes = [1, 18], strides = [1, 1]} : vector<6x18xf32> to vector<1x18xf32>
    %1583 = vector.broadcast %1582 : vector<1x18xf32> to vector<3x18xf32>
    %1584 = arith.mulf %1581, %1583 : vector<3x18xf32>
    %c0_419 = arith.constant 0 : index
    %c28288 = arith.constant 28288 : index
    %1585 = vector.load %arg0[%c0_419, %c28288] : memref<8x36864xf32, #tpu.memory_space<vmem>>, vector<3x18xf32>
    %1586 = vector.extract_strided_slice %1579 {offsets = [1, 0], sizes = [1, 18], strides = [1, 1]} : vector<6x18xf32> to vector<1x18xf32>
    %1587 = vector.broadcast %1586 : vector<1x18xf32> to vector<3x18xf32>
    %1588 = arith.mulf %1585, %1587 : vector<3x18xf32>
    %c0_420 = arith.constant 0 : index
    %c28416 = arith.constant 28416 : index
    %1589 = vector.load %arg0[%c0_420, %c28416] : memref<8x36864xf32, #tpu.memory_space<vmem>>, vector<3x18xf32>
    %1590 = vector.extract_strided_slice %1579 {offsets = [2, 0], sizes = [1, 18], strides = [1, 1]} : vector<6x18xf32> to vector<1x18xf32>
    %1591 = vector.broadcast %1590 : vector<1x18xf32> to vector<3x18xf32>
    %1592 = arith.mulf %1589, %1591 : vector<3x18xf32>
    %c0_421 = arith.constant 0 : index
    %c28544 = arith.constant 28544 : index
    %1593 = vector.load %arg0[%c0_421, %c28544] : memref<8x36864xf32, #tpu.memory_space<vmem>>, vector<3x18xf32>
    %1594 = vector.extract_strided_slice %1579 {offsets = [3, 0], sizes = [1, 18], strides = [1, 1]} : vector<6x18xf32> to vector<1x18xf32>
    %1595 = vector.broadcast %1594 : vector<1x18xf32> to vector<3x18xf32>
    %1596 = arith.mulf %1593, %1595 : vector<3x18xf32>
    %c0_422 = arith.constant 0 : index
    %c28672 = arith.constant 28672 : index
    %1597 = vector.load %arg0[%c0_422, %c28672] : memref<8x36864xf32, #tpu.memory_space<vmem>>, vector<3x18xf32>
    %1598 = vector.extract_strided_slice %1579 {offsets = [4, 0], sizes = [1, 18], strides = [1, 1]} : vector<6x18xf32> to vector<1x18xf32>
    %1599 = vector.broadcast %1598 : vector<1x18xf32> to vector<3x18xf32>
    %1600 = arith.mulf %1597, %1599 : vector<3x18xf32>
    %c0_423 = arith.constant 0 : index
    %c28800 = arith.constant 28800 : index
    %1601 = vector.load %arg0[%c0_423, %c28800] : memref<8x36864xf32, #tpu.memory_space<vmem>>, vector<3x18xf32>
    %1602 = vector.extract_strided_slice %1579 {offsets = [5, 0], sizes = [1, 18], strides = [1, 1]} : vector<6x18xf32> to vector<1x18xf32>
    %1603 = vector.broadcast %1602 : vector<1x18xf32> to vector<3x18xf32>
    %1604 = arith.mulf %1601, %1603 : vector<3x18xf32>
    %1605 = arith.addf %1580, %1584 : vector<3x18xf32>
    %1606 = arith.addf %1588, %1592 : vector<3x18xf32>
    %1607 = arith.addf %1596, %1600 : vector<3x18xf32>
    %1608 = arith.addf %1605, %1606 : vector<3x18xf32>
    %1609 = arith.addf %1607, %1604 : vector<3x18xf32>
    %1610 = arith.addf %1608, %1609 : vector<3x18xf32>
    %c0_424 = arith.constant 0 : index
    %c29056 = arith.constant 29056 : index
    %1611 = vector.load %arg0[%c0_424, %c29056] : memref<8x36864xf32, #tpu.memory_space<vmem>>, vector<3x18xf32>
    %c0_425 = arith.constant 0 : index
    %c29184 = arith.constant 29184 : index
    %1612 = vector.load %arg0[%c0_425, %c29184] : memref<8x36864xf32, #tpu.memory_space<vmem>>, vector<3x18xf32>
    %1613 = arith.mulf %1610, %1610 : vector<3x18xf32>
    %1614 = tpu.concatenate %1610, %1613 in 0 : vector<3x18xf32>, vector<3x18xf32> -> vector<6x18xf32>
    %cst_426 = arith.constant dense<0.000000e+00> : vector<6xf32>
    %1615 = vector.multi_reduction <add>, %1614, %cst_426 [1] : vector<6x18xf32> to vector<6xf32>
    %1616 = vector.shape_cast %1615 : vector<6xf32> to vector<6x1xf32>
    %cst_427 = arith.constant 0.055555556 : f32
    %1617 = vector.broadcast %cst_427 : f32 to vector<6x1xf32>
    %1618 = arith.mulf %1616, %1617 : vector<6x1xf32>
    %1619 = vector.extract_strided_slice %1618 {offsets = [0, 0], sizes = [3, 1], strides = [1, 1]} : vector<6x1xf32> to vector<3x1xf32>
    %1620 = vector.extract_strided_slice %1618 {offsets = [3, 0], sizes = [3, 1], strides = [1, 1]} : vector<6x1xf32> to vector<3x1xf32>
    %1621 = arith.mulf %1619, %1619 : vector<3x1xf32>
    %1622 = arith.subf %1620, %1621 : vector<3x1xf32>
    %cst_428 = arith.constant 0.000000e+00 : f32
    %1623 = vector.broadcast %cst_428 : f32 to vector<3x1xf32>
    %1624 = arith.maximumf %1622, %1623 : vector<3x1xf32>
    %cst_429 = arith.constant 9.99999974E-6 : f32
    %1625 = vector.broadcast %cst_429 : f32 to vector<3x1xf32>
    %1626 = arith.addf %1624, %1625 : vector<3x1xf32>
    %1627 = math.rsqrt %1626 : vector<3x1xf32>
    %1628 = vector.broadcast %1627 : vector<3x1xf32> to vector<3x18xf32>
    %1629 = arith.mulf %1611, %1628 : vector<3x18xf32>
    %1630 = vector.broadcast %1619 : vector<3x1xf32> to vector<3x18xf32>
    %1631 = arith.mulf %1630, %1629 : vector<3x18xf32>
    %1632 = arith.subf %1612, %1631 : vector<3x18xf32>
    %1633 = arith.mulf %1610, %1629 : vector<3x18xf32>
    %1634 = arith.addf %1633, %1632 : vector<3x18xf32>
    %cst_430 = arith.constant 0.000000e+00 : f32
    %1635 = vector.broadcast %cst_430 : f32 to vector<3x18xf32>
    %1636 = arith.maximumf %1634, %1635 : vector<3x18xf32>
    %c0_431 = arith.constant 0 : index
    %c29696 = arith.constant 29696 : index
    %1637 = vector.load %arg0[%c0_431, %c29696] : memref<8x36864xf32, #tpu.memory_space<vmem>>, vector<3x18xf32>
    %c0_432 = arith.constant 0 : index
    %c29312 = arith.constant 29312 : index
    %1638 = vector.load %arg0[%c0_432, %c29312] : memref<8x36864xf32, #tpu.memory_space<vmem>>, vector<3x18xf32>
    %1639 = vector.extract_strided_slice %1636 {offsets = [0, 0], sizes = [1, 18], strides = [1, 1]} : vector<3x18xf32> to vector<1x18xf32>
    %1640 = vector.broadcast %1639 : vector<1x18xf32> to vector<3x18xf32>
    %1641 = arith.mulf %1638, %1640 : vector<3x18xf32>
    %c0_433 = arith.constant 0 : index
    %c29440 = arith.constant 29440 : index
    %1642 = vector.load %arg0[%c0_433, %c29440] : memref<8x36864xf32, #tpu.memory_space<vmem>>, vector<3x18xf32>
    %1643 = vector.extract_strided_slice %1636 {offsets = [1, 0], sizes = [1, 18], strides = [1, 1]} : vector<3x18xf32> to vector<1x18xf32>
    %1644 = vector.broadcast %1643 : vector<1x18xf32> to vector<3x18xf32>
    %1645 = arith.mulf %1642, %1644 : vector<3x18xf32>
    %c0_434 = arith.constant 0 : index
    %c29568 = arith.constant 29568 : index
    %1646 = vector.load %arg0[%c0_434, %c29568] : memref<8x36864xf32, #tpu.memory_space<vmem>>, vector<3x18xf32>
    %1647 = vector.extract_strided_slice %1636 {offsets = [2, 0], sizes = [1, 18], strides = [1, 1]} : vector<3x18xf32> to vector<1x18xf32>
    %1648 = vector.broadcast %1647 : vector<1x18xf32> to vector<3x18xf32>
    %1649 = arith.mulf %1646, %1648 : vector<3x18xf32>
    %1650 = arith.addf %1637, %1641 : vector<3x18xf32>
    %1651 = arith.addf %1645, %1649 : vector<3x18xf32>
    %1652 = arith.addf %1650, %1651 : vector<3x18xf32>
    %c0_435 = arith.constant 0 : index
    %c29824 = arith.constant 29824 : index
    %1653 = vector.load %arg0[%c0_435, %c29824] : memref<8x36864xf32, #tpu.memory_space<vmem>>, vector<3x18xf32>
    %c0_436 = arith.constant 0 : index
    %c29952 = arith.constant 29952 : index
    %1654 = vector.load %arg0[%c0_436, %c29952] : memref<8x36864xf32, #tpu.memory_space<vmem>>, vector<3x18xf32>
    %1655 = arith.mulf %1652, %1652 : vector<3x18xf32>
    %1656 = tpu.concatenate %1652, %1655 in 0 : vector<3x18xf32>, vector<3x18xf32> -> vector<6x18xf32>
    %cst_437 = arith.constant dense<0.000000e+00> : vector<6xf32>
    %1657 = vector.multi_reduction <add>, %1656, %cst_437 [1] : vector<6x18xf32> to vector<6xf32>
    %1658 = vector.shape_cast %1657 : vector<6xf32> to vector<6x1xf32>
    %cst_438 = arith.constant 0.055555556 : f32
    %1659 = vector.broadcast %cst_438 : f32 to vector<6x1xf32>
    %1660 = arith.mulf %1658, %1659 : vector<6x1xf32>
    %1661 = vector.extract_strided_slice %1660 {offsets = [0, 0], sizes = [3, 1], strides = [1, 1]} : vector<6x1xf32> to vector<3x1xf32>
    %1662 = vector.extract_strided_slice %1660 {offsets = [3, 0], sizes = [3, 1], strides = [1, 1]} : vector<6x1xf32> to vector<3x1xf32>
    %1663 = arith.mulf %1661, %1661 : vector<3x1xf32>
    %1664 = arith.subf %1662, %1663 : vector<3x1xf32>
    %cst_439 = arith.constant 0.000000e+00 : f32
    %1665 = vector.broadcast %cst_439 : f32 to vector<3x1xf32>
    %1666 = arith.maximumf %1664, %1665 : vector<3x1xf32>
    %cst_440 = arith.constant 9.99999974E-6 : f32
    %1667 = vector.broadcast %cst_440 : f32 to vector<3x1xf32>
    %1668 = arith.addf %1666, %1667 : vector<3x1xf32>
    %1669 = math.rsqrt %1668 : vector<3x1xf32>
    %1670 = vector.broadcast %1669 : vector<3x1xf32> to vector<3x18xf32>
    %1671 = arith.mulf %1653, %1670 : vector<3x18xf32>
    %1672 = vector.broadcast %1661 : vector<3x1xf32> to vector<3x18xf32>
    %1673 = arith.mulf %1672, %1671 : vector<3x18xf32>
    %1674 = arith.subf %1654, %1673 : vector<3x18xf32>
    %1675 = arith.mulf %1652, %1671 : vector<3x18xf32>
    %1676 = arith.addf %1675, %1674 : vector<3x18xf32>
    %cst_441 = arith.constant 0.000000e+00 : f32
    %1677 = vector.broadcast %cst_441 : f32 to vector<3x18xf32>
    %1678 = arith.maximumf %1676, %1677 : vector<3x18xf32>
    %c0_442 = arith.constant 0 : index
    %c30464 = arith.constant 30464 : index
    %1679 = vector.load %arg0[%c0_442, %c30464] : memref<8x36864xf32, #tpu.memory_space<vmem>>, vector<6x18xf32>
    %c0_443 = arith.constant 0 : index
    %c30080 = arith.constant 30080 : index
    %1680 = vector.load %arg0[%c0_443, %c30080] : memref<8x36864xf32, #tpu.memory_space<vmem>>, vector<6x18xf32>
    %1681 = vector.extract_strided_slice %1678 {offsets = [0, 0], sizes = [1, 18], strides = [1, 1]} : vector<3x18xf32> to vector<1x18xf32>
    %1682 = vector.broadcast %1681 : vector<1x18xf32> to vector<6x18xf32>
    %1683 = arith.mulf %1680, %1682 : vector<6x18xf32>
    %c0_444 = arith.constant 0 : index
    %c30208 = arith.constant 30208 : index
    %1684 = vector.load %arg0[%c0_444, %c30208] : memref<8x36864xf32, #tpu.memory_space<vmem>>, vector<6x18xf32>
    %1685 = vector.extract_strided_slice %1678 {offsets = [1, 0], sizes = [1, 18], strides = [1, 1]} : vector<3x18xf32> to vector<1x18xf32>
    %1686 = vector.broadcast %1685 : vector<1x18xf32> to vector<6x18xf32>
    %1687 = arith.mulf %1684, %1686 : vector<6x18xf32>
    %c0_445 = arith.constant 0 : index
    %c30336 = arith.constant 30336 : index
    %1688 = vector.load %arg0[%c0_445, %c30336] : memref<8x36864xf32, #tpu.memory_space<vmem>>, vector<6x18xf32>
    %1689 = vector.extract_strided_slice %1678 {offsets = [2, 0], sizes = [1, 18], strides = [1, 1]} : vector<3x18xf32> to vector<1x18xf32>
    %1690 = vector.broadcast %1689 : vector<1x18xf32> to vector<6x18xf32>
    %1691 = arith.mulf %1688, %1690 : vector<6x18xf32>
    %1692 = arith.addf %1679, %1683 : vector<6x18xf32>
    %1693 = arith.addf %1687, %1691 : vector<6x18xf32>
    %1694 = arith.addf %1692, %1693 : vector<6x18xf32>
    %c0_446 = arith.constant 0 : index
    %c30592 = arith.constant 30592 : index
    %1695 = vector.load %arg0[%c0_446, %c30592] : memref<8x36864xf32, #tpu.memory_space<vmem>>, vector<6x18xf32>
    %c0_447 = arith.constant 0 : index
    %c30720 = arith.constant 30720 : index
    %1696 = vector.load %arg0[%c0_447, %c30720] : memref<8x36864xf32, #tpu.memory_space<vmem>>, vector<6x18xf32>
    %cst_448 = arith.constant dense<0.000000e+00> : vector<6xf32>
    %1697 = vector.multi_reduction <add>, %1694, %cst_448 [1] : vector<6x18xf32> to vector<6xf32>
    %1698 = vector.shape_cast %1697 : vector<6xf32> to vector<6x1xf32>
    %cst_449 = arith.constant 1.800000e+01 : f32
    %1699 = vector.broadcast %cst_449 : f32 to vector<6x1xf32>
    %1700 = arith.divf %1698, %1699 : vector<6x1xf32>
    %1701 = arith.mulf %1694, %1694 : vector<6x18xf32>
    %cst_450 = arith.constant dense<0.000000e+00> : vector<6xf32>
    %1702 = vector.multi_reduction <add>, %1701, %cst_450 [1] : vector<6x18xf32> to vector<6xf32>
    %1703 = vector.shape_cast %1702 : vector<6xf32> to vector<6x1xf32>
    %cst_451 = arith.constant 1.800000e+01 : f32
    %1704 = vector.broadcast %cst_451 : f32 to vector<6x1xf32>
    %1705 = arith.divf %1703, %1704 : vector<6x1xf32>
    %1706 = arith.mulf %1700, %1700 : vector<6x1xf32>
    %1707 = arith.subf %1705, %1706 : vector<6x1xf32>
    %cst_452 = arith.constant 0.000000e+00 : f32
    %1708 = vector.broadcast %cst_452 : f32 to vector<6x1xf32>
    %1709 = arith.maximumf %1707, %1708 : vector<6x1xf32>
    %cst_453 = arith.constant 9.99999974E-6 : f32
    %1710 = vector.broadcast %cst_453 : f32 to vector<6x1xf32>
    %1711 = arith.addf %1709, %1710 : vector<6x1xf32>
    %1712 = math.rsqrt %1711 : vector<6x1xf32>
    %1713 = vector.broadcast %1712 : vector<6x1xf32> to vector<6x18xf32>
    %1714 = arith.mulf %1695, %1713 : vector<6x18xf32>
    %1715 = vector.broadcast %1700 : vector<6x1xf32> to vector<6x18xf32>
    %1716 = arith.mulf %1715, %1714 : vector<6x18xf32>
    %1717 = arith.subf %1696, %1716 : vector<6x18xf32>
    %1718 = arith.mulf %1694, %1714 : vector<6x18xf32>
    %1719 = arith.addf %1718, %1717 : vector<6x18xf32>
    %cst_454 = arith.constant 0.000000e+00 : f32
    %1720 = vector.broadcast %cst_454 : f32 to vector<6x18xf32>
    %1721 = arith.maximumf %1719, %1720 : vector<6x18xf32>
    %c0_455 = arith.constant 0 : index
    %c31616 = arith.constant 31616 : index
    %1722 = vector.load %arg0[%c0_455, %c31616] : memref<8x36864xf32, #tpu.memory_space<vmem>>, vector<3x18xf32>
    %c0_456 = arith.constant 0 : index
    %c30848 = arith.constant 30848 : index
    %1723 = vector.load %arg0[%c0_456, %c30848] : memref<8x36864xf32, #tpu.memory_space<vmem>>, vector<3x18xf32>
    %1724 = vector.extract_strided_slice %1721 {offsets = [0, 0], sizes = [1, 18], strides = [1, 1]} : vector<6x18xf32> to vector<1x18xf32>
    %1725 = vector.broadcast %1724 : vector<1x18xf32> to vector<3x18xf32>
    %1726 = arith.mulf %1723, %1725 : vector<3x18xf32>
    %c0_457 = arith.constant 0 : index
    %c30976 = arith.constant 30976 : index
    %1727 = vector.load %arg0[%c0_457, %c30976] : memref<8x36864xf32, #tpu.memory_space<vmem>>, vector<3x18xf32>
    %1728 = vector.extract_strided_slice %1721 {offsets = [1, 0], sizes = [1, 18], strides = [1, 1]} : vector<6x18xf32> to vector<1x18xf32>
    %1729 = vector.broadcast %1728 : vector<1x18xf32> to vector<3x18xf32>
    %1730 = arith.mulf %1727, %1729 : vector<3x18xf32>
    %c0_458 = arith.constant 0 : index
    %c31104 = arith.constant 31104 : index
    %1731 = vector.load %arg0[%c0_458, %c31104] : memref<8x36864xf32, #tpu.memory_space<vmem>>, vector<3x18xf32>
    %1732 = vector.extract_strided_slice %1721 {offsets = [2, 0], sizes = [1, 18], strides = [1, 1]} : vector<6x18xf32> to vector<1x18xf32>
    %1733 = vector.broadcast %1732 : vector<1x18xf32> to vector<3x18xf32>
    %1734 = arith.mulf %1731, %1733 : vector<3x18xf32>
    %c0_459 = arith.constant 0 : index
    %c31232 = arith.constant 31232 : index
    %1735 = vector.load %arg0[%c0_459, %c31232] : memref<8x36864xf32, #tpu.memory_space<vmem>>, vector<3x18xf32>
    %1736 = vector.extract_strided_slice %1721 {offsets = [3, 0], sizes = [1, 18], strides = [1, 1]} : vector<6x18xf32> to vector<1x18xf32>
    %1737 = vector.broadcast %1736 : vector<1x18xf32> to vector<3x18xf32>
    %1738 = arith.mulf %1735, %1737 : vector<3x18xf32>
    %c0_460 = arith.constant 0 : index
    %c31360 = arith.constant 31360 : index
    %1739 = vector.load %arg0[%c0_460, %c31360] : memref<8x36864xf32, #tpu.memory_space<vmem>>, vector<3x18xf32>
    %1740 = vector.extract_strided_slice %1721 {offsets = [4, 0], sizes = [1, 18], strides = [1, 1]} : vector<6x18xf32> to vector<1x18xf32>
    %1741 = vector.broadcast %1740 : vector<1x18xf32> to vector<3x18xf32>
    %1742 = arith.mulf %1739, %1741 : vector<3x18xf32>
    %c0_461 = arith.constant 0 : index
    %c31488 = arith.constant 31488 : index
    %1743 = vector.load %arg0[%c0_461, %c31488] : memref<8x36864xf32, #tpu.memory_space<vmem>>, vector<3x18xf32>
    %1744 = vector.extract_strided_slice %1721 {offsets = [5, 0], sizes = [1, 18], strides = [1, 1]} : vector<6x18xf32> to vector<1x18xf32>
    %1745 = vector.broadcast %1744 : vector<1x18xf32> to vector<3x18xf32>
    %1746 = arith.mulf %1743, %1745 : vector<3x18xf32>
    %1747 = arith.addf %1722, %1726 : vector<3x18xf32>
    %1748 = arith.addf %1730, %1734 : vector<3x18xf32>
    %1749 = arith.addf %1738, %1742 : vector<3x18xf32>
    %1750 = arith.addf %1747, %1748 : vector<3x18xf32>
    %1751 = arith.addf %1749, %1746 : vector<3x18xf32>
    %1752 = arith.addf %1750, %1751 : vector<3x18xf32>
    %c0_462 = arith.constant 0 : index
    %c31744 = arith.constant 31744 : index
    %1753 = vector.load %arg0[%c0_462, %c31744] : memref<8x36864xf32, #tpu.memory_space<vmem>>, vector<3x18xf32>
    %c0_463 = arith.constant 0 : index
    %c31872 = arith.constant 31872 : index
    %1754 = vector.load %arg0[%c0_463, %c31872] : memref<8x36864xf32, #tpu.memory_space<vmem>>, vector<3x18xf32>
    %1755 = arith.mulf %1752, %1752 : vector<3x18xf32>
    %1756 = tpu.concatenate %1752, %1755 in 0 : vector<3x18xf32>, vector<3x18xf32> -> vector<6x18xf32>
    %cst_464 = arith.constant dense<0.000000e+00> : vector<6xf32>
    %1757 = vector.multi_reduction <add>, %1756, %cst_464 [1] : vector<6x18xf32> to vector<6xf32>
    %1758 = vector.shape_cast %1757 : vector<6xf32> to vector<6x1xf32>
    %cst_465 = arith.constant 0.055555556 : f32
    %1759 = vector.broadcast %cst_465 : f32 to vector<6x1xf32>
    %1760 = arith.mulf %1758, %1759 : vector<6x1xf32>
    %1761 = vector.extract_strided_slice %1760 {offsets = [0, 0], sizes = [3, 1], strides = [1, 1]} : vector<6x1xf32> to vector<3x1xf32>
    %1762 = vector.extract_strided_slice %1760 {offsets = [3, 0], sizes = [3, 1], strides = [1, 1]} : vector<6x1xf32> to vector<3x1xf32>
    %1763 = arith.mulf %1761, %1761 : vector<3x1xf32>
    %1764 = arith.subf %1762, %1763 : vector<3x1xf32>
    %cst_466 = arith.constant 0.000000e+00 : f32
    %1765 = vector.broadcast %cst_466 : f32 to vector<3x1xf32>
    %1766 = arith.maximumf %1764, %1765 : vector<3x1xf32>
    %cst_467 = arith.constant 9.99999974E-6 : f32
    %1767 = vector.broadcast %cst_467 : f32 to vector<3x1xf32>
    %1768 = arith.addf %1766, %1767 : vector<3x1xf32>
    %1769 = math.rsqrt %1768 : vector<3x1xf32>
    %1770 = vector.broadcast %1769 : vector<3x1xf32> to vector<3x18xf32>
    %1771 = arith.mulf %1753, %1770 : vector<3x18xf32>
    %1772 = vector.broadcast %1761 : vector<3x1xf32> to vector<3x18xf32>
    %1773 = arith.mulf %1772, %1771 : vector<3x18xf32>
    %1774 = arith.subf %1754, %1773 : vector<3x18xf32>
    %1775 = arith.mulf %1752, %1771 : vector<3x18xf32>
    %1776 = arith.addf %1775, %1774 : vector<3x18xf32>
    %cst_468 = arith.constant 0.000000e+00 : f32
    %1777 = vector.broadcast %cst_468 : f32 to vector<3x18xf32>
    %1778 = arith.maximumf %1776, %1777 : vector<3x18xf32>
    %c0_469 = arith.constant 0 : index
    %c32384 = arith.constant 32384 : index
    %1779 = vector.load %arg0[%c0_469, %c32384] : memref<8x36864xf32, #tpu.memory_space<vmem>>, vector<3x18xf32>
    %c0_470 = arith.constant 0 : index
    %c32000 = arith.constant 32000 : index
    %1780 = vector.load %arg0[%c0_470, %c32000] : memref<8x36864xf32, #tpu.memory_space<vmem>>, vector<3x18xf32>
    %1781 = vector.extract_strided_slice %1778 {offsets = [0, 0], sizes = [1, 18], strides = [1, 1]} : vector<3x18xf32> to vector<1x18xf32>
    %1782 = vector.broadcast %1781 : vector<1x18xf32> to vector<3x18xf32>
    %1783 = arith.mulf %1780, %1782 : vector<3x18xf32>
    %c0_471 = arith.constant 0 : index
    %c32128 = arith.constant 32128 : index
    %1784 = vector.load %arg0[%c0_471, %c32128] : memref<8x36864xf32, #tpu.memory_space<vmem>>, vector<3x18xf32>
    %1785 = vector.extract_strided_slice %1778 {offsets = [1, 0], sizes = [1, 18], strides = [1, 1]} : vector<3x18xf32> to vector<1x18xf32>
    %1786 = vector.broadcast %1785 : vector<1x18xf32> to vector<3x18xf32>
    %1787 = arith.mulf %1784, %1786 : vector<3x18xf32>
    %c0_472 = arith.constant 0 : index
    %c32256 = arith.constant 32256 : index
    %1788 = vector.load %arg0[%c0_472, %c32256] : memref<8x36864xf32, #tpu.memory_space<vmem>>, vector<3x18xf32>
    %1789 = vector.extract_strided_slice %1778 {offsets = [2, 0], sizes = [1, 18], strides = [1, 1]} : vector<3x18xf32> to vector<1x18xf32>
    %1790 = vector.broadcast %1789 : vector<1x18xf32> to vector<3x18xf32>
    %1791 = arith.mulf %1788, %1790 : vector<3x18xf32>
    %1792 = arith.addf %1779, %1783 : vector<3x18xf32>
    %1793 = arith.addf %1787, %1791 : vector<3x18xf32>
    %1794 = arith.addf %1792, %1793 : vector<3x18xf32>
    %c0_473 = arith.constant 0 : index
    %c32512 = arith.constant 32512 : index
    %1795 = vector.load %arg0[%c0_473, %c32512] : memref<8x36864xf32, #tpu.memory_space<vmem>>, vector<3x18xf32>
    %c0_474 = arith.constant 0 : index
    %c32640 = arith.constant 32640 : index
    %1796 = vector.load %arg0[%c0_474, %c32640] : memref<8x36864xf32, #tpu.memory_space<vmem>>, vector<3x18xf32>
    %1797 = arith.mulf %1794, %1794 : vector<3x18xf32>
    %1798 = tpu.concatenate %1794, %1797 in 0 : vector<3x18xf32>, vector<3x18xf32> -> vector<6x18xf32>
    %cst_475 = arith.constant dense<0.000000e+00> : vector<6xf32>
    %1799 = vector.multi_reduction <add>, %1798, %cst_475 [1] : vector<6x18xf32> to vector<6xf32>
    %1800 = vector.shape_cast %1799 : vector<6xf32> to vector<6x1xf32>
    %cst_476 = arith.constant 0.055555556 : f32
    %1801 = vector.broadcast %cst_476 : f32 to vector<6x1xf32>
    %1802 = arith.mulf %1800, %1801 : vector<6x1xf32>
    %1803 = vector.extract_strided_slice %1802 {offsets = [0, 0], sizes = [3, 1], strides = [1, 1]} : vector<6x1xf32> to vector<3x1xf32>
    %1804 = vector.extract_strided_slice %1802 {offsets = [3, 0], sizes = [3, 1], strides = [1, 1]} : vector<6x1xf32> to vector<3x1xf32>
    %1805 = arith.mulf %1803, %1803 : vector<3x1xf32>
    %1806 = arith.subf %1804, %1805 : vector<3x1xf32>
    %cst_477 = arith.constant 0.000000e+00 : f32
    %1807 = vector.broadcast %cst_477 : f32 to vector<3x1xf32>
    %1808 = arith.maximumf %1806, %1807 : vector<3x1xf32>
    %cst_478 = arith.constant 9.99999974E-6 : f32
    %1809 = vector.broadcast %cst_478 : f32 to vector<3x1xf32>
    %1810 = arith.addf %1808, %1809 : vector<3x1xf32>
    %1811 = math.rsqrt %1810 : vector<3x1xf32>
    %1812 = vector.broadcast %1811 : vector<3x1xf32> to vector<3x18xf32>
    %1813 = arith.mulf %1795, %1812 : vector<3x18xf32>
    %1814 = vector.broadcast %1803 : vector<3x1xf32> to vector<3x18xf32>
    %1815 = arith.mulf %1814, %1813 : vector<3x18xf32>
    %1816 = arith.subf %1796, %1815 : vector<3x18xf32>
    %1817 = arith.mulf %1794, %1813 : vector<3x18xf32>
    %1818 = arith.addf %1817, %1816 : vector<3x18xf32>
    %cst_479 = arith.constant 0.000000e+00 : f32
    %1819 = vector.broadcast %cst_479 : f32 to vector<3x18xf32>
    %1820 = arith.maximumf %1818, %1819 : vector<3x18xf32>
    %c0_480 = arith.constant 0 : index
    %c33152 = arith.constant 33152 : index
    %1821 = vector.load %arg0[%c0_480, %c33152] : memref<8x36864xf32, #tpu.memory_space<vmem>>, vector<6x18xf32>
    %c0_481 = arith.constant 0 : index
    %c32768 = arith.constant 32768 : index
    %1822 = vector.load %arg0[%c0_481, %c32768] : memref<8x36864xf32, #tpu.memory_space<vmem>>, vector<6x18xf32>
    %1823 = vector.extract_strided_slice %1820 {offsets = [0, 0], sizes = [1, 18], strides = [1, 1]} : vector<3x18xf32> to vector<1x18xf32>
    %1824 = vector.broadcast %1823 : vector<1x18xf32> to vector<6x18xf32>
    %1825 = arith.mulf %1822, %1824 : vector<6x18xf32>
    %c0_482 = arith.constant 0 : index
    %c32896 = arith.constant 32896 : index
    %1826 = vector.load %arg0[%c0_482, %c32896] : memref<8x36864xf32, #tpu.memory_space<vmem>>, vector<6x18xf32>
    %1827 = vector.extract_strided_slice %1820 {offsets = [1, 0], sizes = [1, 18], strides = [1, 1]} : vector<3x18xf32> to vector<1x18xf32>
    %1828 = vector.broadcast %1827 : vector<1x18xf32> to vector<6x18xf32>
    %1829 = arith.mulf %1826, %1828 : vector<6x18xf32>
    %c0_483 = arith.constant 0 : index
    %c33024 = arith.constant 33024 : index
    %1830 = vector.load %arg0[%c0_483, %c33024] : memref<8x36864xf32, #tpu.memory_space<vmem>>, vector<6x18xf32>
    %1831 = vector.extract_strided_slice %1820 {offsets = [2, 0], sizes = [1, 18], strides = [1, 1]} : vector<3x18xf32> to vector<1x18xf32>
    %1832 = vector.broadcast %1831 : vector<1x18xf32> to vector<6x18xf32>
    %1833 = arith.mulf %1830, %1832 : vector<6x18xf32>
    %1834 = arith.addf %1821, %1825 : vector<6x18xf32>
    %1835 = arith.addf %1829, %1833 : vector<6x18xf32>
    %1836 = arith.addf %1834, %1835 : vector<6x18xf32>
    %c0_484 = arith.constant 0 : index
    %c896 = arith.constant 896 : index
    %1837 = vector.load %arg0[%c0_484, %c896] : memref<8x36864xf32, #tpu.memory_space<vmem>>, vector<2x18xf32>
    %c0_485 = arith.constant 0 : index
    %c128 = arith.constant 128 : index
    %1838 = vector.load %arg0[%c0_485, %c128] : memref<8x36864xf32, #tpu.memory_space<vmem>>, vector<2x18xf32>
    %1839 = vector.extract_strided_slice %1836 {offsets = [0, 0], sizes = [1, 18], strides = [1, 1]} : vector<6x18xf32> to vector<1x18xf32>
    %1840 = vector.broadcast %1839 : vector<1x18xf32> to vector<2x18xf32>
    %1841 = arith.mulf %1838, %1840 : vector<2x18xf32>
    %c0_486 = arith.constant 0 : index
    %c256 = arith.constant 256 : index
    %1842 = vector.load %arg0[%c0_486, %c256] : memref<8x36864xf32, #tpu.memory_space<vmem>>, vector<2x18xf32>
    %1843 = vector.extract_strided_slice %1836 {offsets = [1, 0], sizes = [1, 18], strides = [1, 1]} : vector<6x18xf32> to vector<1x18xf32>
    %1844 = vector.broadcast %1843 : vector<1x18xf32> to vector<2x18xf32>
    %1845 = arith.mulf %1842, %1844 : vector<2x18xf32>
    %c0_487 = arith.constant 0 : index
    %c384 = arith.constant 384 : index
    %1846 = vector.load %arg0[%c0_487, %c384] : memref<8x36864xf32, #tpu.memory_space<vmem>>, vector<2x18xf32>
    %1847 = vector.extract_strided_slice %1836 {offsets = [2, 0], sizes = [1, 18], strides = [1, 1]} : vector<6x18xf32> to vector<1x18xf32>
    %1848 = vector.broadcast %1847 : vector<1x18xf32> to vector<2x18xf32>
    %1849 = arith.mulf %1846, %1848 : vector<2x18xf32>
    %c0_488 = arith.constant 0 : index
    %c512 = arith.constant 512 : index
    %1850 = vector.load %arg0[%c0_488, %c512] : memref<8x36864xf32, #tpu.memory_space<vmem>>, vector<2x18xf32>
    %1851 = vector.extract_strided_slice %1836 {offsets = [3, 0], sizes = [1, 18], strides = [1, 1]} : vector<6x18xf32> to vector<1x18xf32>
    %1852 = vector.broadcast %1851 : vector<1x18xf32> to vector<2x18xf32>
    %1853 = arith.mulf %1850, %1852 : vector<2x18xf32>
    %c0_489 = arith.constant 0 : index
    %c640 = arith.constant 640 : index
    %1854 = vector.load %arg0[%c0_489, %c640] : memref<8x36864xf32, #tpu.memory_space<vmem>>, vector<2x18xf32>
    %1855 = vector.extract_strided_slice %1836 {offsets = [4, 0], sizes = [1, 18], strides = [1, 1]} : vector<6x18xf32> to vector<1x18xf32>
    %1856 = vector.broadcast %1855 : vector<1x18xf32> to vector<2x18xf32>
    %1857 = arith.mulf %1854, %1856 : vector<2x18xf32>
    %c0_490 = arith.constant 0 : index
    %c768 = arith.constant 768 : index
    %1858 = vector.load %arg0[%c0_490, %c768] : memref<8x36864xf32, #tpu.memory_space<vmem>>, vector<2x18xf32>
    %1859 = vector.extract_strided_slice %1836 {offsets = [5, 0], sizes = [1, 18], strides = [1, 1]} : vector<6x18xf32> to vector<1x18xf32>
    %1860 = vector.broadcast %1859 : vector<1x18xf32> to vector<2x18xf32>
    %1861 = arith.mulf %1858, %1860 : vector<2x18xf32>
    %1862 = arith.addf %1837, %1841 : vector<2x18xf32>
    %1863 = arith.addf %1845, %1849 : vector<2x18xf32>
    %1864 = arith.addf %1853, %1857 : vector<2x18xf32>
    %1865 = arith.addf %1862, %1863 : vector<2x18xf32>
    %1866 = arith.addf %1864, %1861 : vector<2x18xf32>
    %1867 = arith.addf %1865, %1866 : vector<2x18xf32>
    %c0_491 = arith.constant 0 : index
    %c0_492 = arith.constant 0 : index
    %1868 = vector.load %arg1[%c0_491, %c0_492] : memref<2x18xf32, #tpu.memory_space<vmem>>, vector<2x18xf32>
    tpu.vector_store %arg1[%c0_491, %c0_492], %1867 {strides = array<i32>} : memref<2x18xf32, #tpu.memory_space<vmem>>, vector<2x18xf32>,
    return
  }
}

</mosaic_0001>

<llo_original>
// kernel: tpu_custom_call.1
$region0: #{tpu_custom_call.1}
  #allocation0 [shape = 'u32[]', space=smem, size = 0x4, offset = 0x4, fixed_abs, tag = 'smem constant byte address 0x4 - core index']
  #allocation1 [shape = 'u32[144,128]{1,0:T(1,128)}', space=vmem, size = 0x12000, scoped, tag = 'internal scratch']
  %s0 = inlined_call_operand.hbm [shape: f32[8,36864], index: 0, kind: input, shape index: {}]
  %s1 = inlined_call_operand.hbm [shape: f32[2,18], index: 1, kind: output, shape index: {}]
  %s2 = sld [smem:[#allocation0]]
  $region18: #{tpu_custom_call.1} parent=0
    _
  %s4 = ssub.s32 1, %s2
  %s5 = scalar_select 0, %s4, %s2
  $region1: #{tpu_custom_call.1} parent=0
    #allocation2 [shape = 'u8[1179648]{0}', space=vmem, size = 0x120000, scoped, tag = 'input window, operand 0, single buffered']
    #allocation3 [shape = 's32[1]{0}', space=sflag, size = 0x4, scoped, tag = 'scoped memory for tpu_custom_call.1']
    #allocation4 [shape = 's32[1]{0}', space=sflag, size = 0x4, scoped, tag = 'scoped memory for tpu_custom_call.1']
    #allocation5 [shape = 'u8[1024]{0}', space=vmem, size = 0x400, scoped, tag = 'output window, operand 0, single buffered']
    %6 = vsyncpa [#allocation3], 0
    %7 = vsyncpa [#allocation4], 0
    // Predicated region
    $region2: #{tpu_custom_call.1} parent=1 // pred_check
      _
    $region3: #{tpu_custom_call.1} parent=1 // pred_check_branch
      %9 = sbr.rel (0) target = $region5
    $region4: #{tpu_custom_call.1} parent=1 // pred_region
      %s11 = ssub.s32 36864, 36864
      %12 = vsyncadd [#allocation3], %s11
      %s14 = sshll.u32 [#allocation2], 4
      %s15 = int_to_ptr.vmem [resolvable:$true] %s14
      %17 = dma.hbm_to_vmem [thread:$0]  %s0, 36864, %s15, [#allocation3]
    $region5: #{tpu_custom_call.1} parent=1 // pred_fallthru
      _
    // Predicated region
    $region6: #{tpu_custom_call.1} parent=1 // pred_check
      _
    $region7: #{tpu_custom_call.1} parent=1 // pred_check_branch
      %19 = sbr.rel (0) target = $region9
    $region8: #{tpu_custom_call.1} parent=1 // pred_region
      %20 = dma.done [#allocation3], 36864
    $region9: #{tpu_custom_call.1} parent=1 // pred_fallthru
      _
    %v21 = vld [vmem:[#allocation2] sm:$0x3f]
    %v22 = vld [vmem:[#allocation2 + $0x40] sm:$0x3f]
    %v23 = vld [vmem:[#allocation2 + $0x48] sm:$0x3f]
    %vm24 = vcmask 144384
    %v25 = vsel %vm24, %v21, 0.0
    %26 = vadd.xlane.f32.xlu0 %v25
    %v27 = vpop.xlane.xlu0 %26
    %v28 = vrcp.pop 18.0
    %v29 = vmul.f32 %v27, %v28
    %v30 = vmul.f32 %v21, %v21
    %v31 = vsel %vm24, %v30, 0.0
    %32 = vadd.xlane.f32.xlu0 %v31
    %v33 = vpop.xlane.xlu0 %32
    %v34 = vmul.f32 %v33, %v28
    %v35 = vmul.f32 %v29, %v29
    %v36 = vsub.f32 %v34, %v35
    %v37 = vmax.f32 %v36, 0.0
    %v38 = vadd.f32 %v37, 1e-05
    %v39 = vrsqrt.pop %v38
    %v40 = vmul.f32 %v22, %v39
    %v41 = vmul.f32 %v29, %v40
    %v42 = vsub.f32 %v23, %v41
    %v43 = vmul.f32 %v21, %v40
    %v44 = vadd.f32 %v43, %v42
    %v45 = vmax.f32 %v44, 0.0
    %v46 = vld [vmem:[#allocation2 + $0x80] sm:$0x7]
    %v47 = vld [vmem:[#allocation2 + $0x50] sm:$0x7]
    %v48 = vlaneseq
    %v49 = vshrl.u32 %v48, 7
    %v50 = vsub.s32 0, %v49
    %v51 = vrot.slane %v45, %v50
    %v52 = vmul.f32 %v47, %v51
    %v53 = vld [vmem:[#allocation2 + $0x58] sm:$0x7]
    %v54 = vlaneseq
    %v55 = vshrl.u32 %v54, 7
    %v56 = vsub.s32 1, %v55
    %v57 = vrot.slane %v45, %v56
    %v58 = vmul.f32 %v53, %v57
    %v59 = vld [vmem:[#allocation2 + $0x60] sm:$0x7]
    %v60 = vlaneseq
    %v61 = vshrl.u32 %v60, 7
    %v62 = vsub.s32 2, %v61
    %v63 = vrot.slane %v45, %v62
    %v64 = vmul.f32 %v59, %v63
    %v65 = vld [vmem:[#allocation2 + $0x68] sm:$0x7]
    %v66 = vlaneseq
    %v67 = vshrl.u32 %v66, 7
    %v68 = vsub.s32 3, %v67
    %v69 = vrot.slane %v45, %v68
    %v70 = vmul.f32 %v65, %v69
    %v71 = vld [vmem:[#allocation2 + $0x70] sm:$0x7]
    %v72 = vlaneseq
    %v73 = vshrl.u32 %v72, 7
    %v74 = vsub.s32 4, %v73
    %v75 = vrot.slane %v45, %v74
    %v76 = vmul.f32 %v71, %v75
    %v77 = vld [vmem:[#allocation2 + $0x78] sm:$0x7]
    %v78 = vlaneseq
    %v79 = vshrl.u32 %v78, 7
    %v80 = vsub.s32 5, %v79
    %v81 = vrot.slane %v45, %v80
    %v82 = vmul.f32 %v77, %v81
    %v83 = vadd.f32 %v46, %v52
    %v84 = vadd.f32 %v58, %v64
    %v85 = vadd.f32 %v70, %v76
    %v86 = vadd.f32 %v83, %v84
    %v87 = vadd.f32 %v85, %v82
    %v88 = vadd.f32 %v86, %v87
    %v89 = vld [vmem:[#allocation2 + $0x88] sm:$0x7]
    %v90 = vld [vmem:[#allocation2 + $0x90] sm:$0x7]
    %v91 = vmul.f32 %v88, %v88
    %v93 = vrot.slane %v91, 5
    %vm95 = vcmask 1042432
    %v96 = vsel %vm95, %v88, %v93
    %v97 = vsel %vm24, %v96, 0.0
    %98 = vadd.xlane.f32.xlu0 %v97
    %v99 = vpop.xlane.xlu0 %98
    %v100 = vmul.f32 %v99, 0.055555556
    %v101 = vmul.f32 %v100, %v100
    %v103 = vrot.slane %v101, 5
    %v105 = vsub.f32 %v100, %v103
    %v106 = vmax.f32 %v105, 0.0
    %v107 = vadd.f32 %v106, 1e-05
    %v108 = vrsqrt.pop %v107
    %110 = vset.pattern.permute.xlu0 0
    %111 = vperm.xlu0 %110, %v108
    %v112 = vpop.permute.xlu0 %111
    %v113 = vrot.slane %v112, 3
    %v115 = vmul.f32 %v89, %v113
    %v116 = vmul.f32 %v100, %v115
    %v117 = vsub.f32 %v90, %v116
    %v118 = vmul.f32 %v88, %v115
    %v119 = vadd.f32 %v118, %v117
    %v120 = vmax.f32 %v119, 0.0
    %v121 = vld [vmem:[#allocation2 + $0xb0] sm:$0x7]
    %v122 = vld [vmem:[#allocation2 + $0x98] sm:$0x7]
    %v123 = vlaneseq
    %v124 = vshrl.u32 %v123, 7
    %v125 = vsub.s32 0, %v124
    %v126 = vrot.slane %v120, %v125
    %v127 = vmul.f32 %v122, %v126
    %v128 = vld [vmem:[#allocation2 + $0xa0] sm:$0x7]
    %v129 = vlaneseq
    %v130 = vshrl.u32 %v129, 7
    %v131 = vsub.s32 1, %v130
    %v132 = vrot.slane %v120, %v131
    %v133 = vmul.f32 %v128, %v132
    %v134 = vld [vmem:[#allocation2 + $0xa8] sm:$0x7]
    %v135 = vlaneseq
    %v136 = vshrl.u32 %v135, 7
    %v137 = vsub.s32 2, %v136
    %v138 = vrot.slane %v120, %v137
    %v139 = vmul.f32 %v134, %v138
    %v140 = vadd.f32 %v121, %v127
    %v141 = vadd.f32 %v133, %v139
    %v142 = vadd.f32 %v140, %v141
    %v143 = vld [vmem:[#allocation2 + $0xb8] sm:$0x7]
    %v144 = vld [vmem:[#allocation2 + $0xc0] sm:$0x7]
    %v145 = vmul.f32 %v142, %v142
    %v147 = vrot.slane %v145, 5
    %v149 = vsel %vm95, %v142, %v147
    %v150 = vsel %vm24, %v149, 0.0
    %151 = vadd.xlane.f32.xlu0 %v150
    %v152 = vpop.xlane.xlu0 %151
    %v153 = vmul.f32 %v152, 0.055555556
    %v154 = vmul.f32 %v153, %v153
    %v156 = vrot.slane %v154, 5
    %v158 = vsub.f32 %v153, %v156
    %v159 = vmax.f32 %v158, 0.0
    %v160 = vadd.f32 %v159, 1e-05
    %v161 = vrsqrt.pop %v160
    %163 = vset.pattern.permute.xlu0 0
    %164 = vperm.xlu0 %163, %v161
    %v165 = vpop.permute.xlu0 %164
    %v166 = vrot.slane %v165, 3
    %v168 = vmul.f32 %v143, %v166
    %v169 = vmul.f32 %v153, %v168
    %v170 = vsub.f32 %v144, %v169
    %v171 = vmul.f32 %v142, %v168
    %v172 = vadd.f32 %v171, %v170
    %v173 = vmax.f32 %v172, 0.0
    %v174 = vld [vmem:[#allocation2 + $0xe0] sm:$0x3f]
    %v175 = vld [vmem:[#allocation2 + $0xc8] sm:$0x3f]
    %v176 = vlaneseq
    %v177 = vshrl.u32 %v176, 7
    %v178 = vsub.s32 0, %v177
    %v179 = vrot.slane %v173, %v178
    %v180 = vmul.f32 %v175, %v179
    %v181 = vld [vmem:[#allocation2 + $0xd0] sm:$0x3f]
    %v182 = vlaneseq
    %v183 = vshrl.u32 %v182, 7
    %v184 = vsub.s32 1, %v183
    %v185 = vrot.slane %v173, %v184
    %v186 = vmul.f32 %v181, %v185
    %v187 = vld [vmem:[#allocation2 + $0xd8] sm:$0x3f]
    %v188 = vlaneseq
    %v189 = vshrl.u32 %v188, 7
    %v190 = vsub.s32 2, %v189
    %v191 = vrot.slane %v173, %v190
    %v192 = vmul.f32 %v187, %v191
    %v193 = vadd.f32 %v174, %v180
    %v194 = vadd.f32 %v186, %v192
    %v195 = vadd.f32 %v193, %v194
    %v196 = vld [vmem:[#allocation2 + $0x850] sm:$0x3f]
    %v197 = vld [vmem:[#allocation2 + $0x820] sm:$0x3f]
    %v198 = vlaneseq
    %v199 = vshrl.u32 %v198, 7
    %v200 = vsub.s32 0, %v199
    %v201 = vrot.slane %v21, %v200
    %v202 = vmul.f32 %v197, %v201
    %v203 = vld [vmem:[#allocation2 + $0x828] sm:$0x3f]
    %v204 = vlaneseq
    %v205 = vshrl.u32 %v204, 7
    %v206 = vsub.s32 1, %v205
    %v207 = vrot.slane %v21, %v206
    %v208 = vmul.f32 %v203, %v207
    %v209 = vld [vmem:[#allocation2 + $0x830] sm:$0x3f]
    %v210 = vlaneseq
    %v211 = vshrl.u32 %v210, 7
    %v212 = vsub.s32 2, %v211
    %v213 = vrot.slane %v21, %v212
    %v214 = vmul.f32 %v209, %v213
    %v215 = vld [vmem:[#allocation2 + $0x838] sm:$0x3f]
    %v216 = vlaneseq
    %v217 = vshrl.u32 %v216, 7
    %v218 = vsub.s32 3, %v217
    %v219 = vrot.slane %v21, %v218
    %v220 = vmul.f32 %v215, %v219
    %v221 = vld [vmem:[#allocation2 + $0x840] sm:$0x3f]
    %v222 = vlaneseq
    %v223 = vshrl.u32 %v222, 7
    %v224 = vsub.s32 4, %v223
    %v225 = vrot.slane %v21, %v224
    %v226 = vmul.f32 %v221, %v225
    %v227 = vld [vmem:[#allocation2 + $0x848] sm:$0x3f]
    %v228 = vlaneseq
    %v229 = vshrl.u32 %v228, 7
    %v230 = vsub.s32 5, %v229
    %v231 = vrot.slane %v21, %v230
    %v232 = vmul.f32 %v227, %v231
    %v233 = vadd.f32 %v196, %v202
    %v234 = vadd.f32 %v208, %v214
    %v235 = vadd.f32 %v220, %v226
    %v236 = vadd.f32 %v233, %v234
    %v237 = vadd.f32 %v235, %v232
    %v238 = vadd.f32 %v236, %v237
    %v239 = vadd.f32 %v195, %v238
    %v240 = vld [vmem:[#allocation2 + $0xe8] sm:$0x3f]
    %v241 = vld [vmem:[#allocation2 + $0xf0] sm:$0x3f]
    %v242 = vsel %vm24, %v239, 0.0
    %243 = vadd.xlane.f32.xlu0 %v242
    %v244 = vpop.xlane.xlu0 %243
    %v245 = vmul.f32 %v244, %v28
    %v246 = vmul.f32 %v239, %v239
    %v247 = vsel %vm24, %v246, 0.0
    %248 = vadd.xlane.f32.xlu0 %v247
    %v249 = vpop.xlane.xlu0 %248
    %v250 = vmul.f32 %v249, %v28
    %v251 = vmul.f32 %v245, %v245
    %v252 = vsub.f32 %v250, %v251
    %v253 = vmax.f32 %v252, 0.0
    %v254 = vadd.f32 %v253, 1e-05
    %v255 = vrsqrt.pop %v254
    %v256 = vmul.f32 %v240, %v255
    %v257 = vmul.f32 %v245, %v256
    %v258 = vsub.f32 %v241, %v257
    %v259 = vmul.f32 %v239, %v256
    %v260 = vadd.f32 %v259, %v258
    %v261 = vmax.f32 %v260, 0.0
    %v262 = vld [vmem:[#allocation2 + $0x128] sm:$0x7]
    %v263 = vld [vmem:[#allocation2 + $0xf8] sm:$0x7]
    %v264 = vlaneseq
    %v265 = vshrl.u32 %v264, 7
    %v266 = vsub.s32 0, %v265
    %v267 = vrot.slane %v261, %v266
    %v268 = vmul.f32 %v263, %v267
    %v269 = vld [vmem:[#allocation2 + $0x100] sm:$0x7]
    %v270 = vlaneseq
    %v271 = vshrl.u32 %v270, 7
    %v272 = vsub.s32 1, %v271
    %v273 = vrot.slane %v261, %v272
    %v274 = vmul.f32 %v269, %v273
    %v275 = vld [vmem:[#allocation2 + $0x108] sm:$0x7]
    %v276 = vlaneseq
    %v277 = vshrl.u32 %v276, 7
    %v278 = vsub.s32 2, %v277
    %v279 = vrot.slane %v261, %v278
    %v280 = vmul.f32 %v275, %v279
    %v281 = vld [vmem:[#allocation2 + $0x110] sm:$0x7]
    %v282 = vlaneseq
    %v283 = vshrl.u32 %v282, 7
    %v284 = vsub.s32 3, %v283
    %v285 = vrot.slane %v261, %v284
    %v286 = vmul.f32 %v281, %v285
    %v287 = vld [vmem:[#allocation2 + $0x118] sm:$0x7]
    %v288 = vlaneseq
    %v289 = vshrl.u32 %v288, 7
    %v290 = vsub.s32 4, %v289
    %v291 = vrot.slane %v261, %v290
    %v292 = vmul.f32 %v287, %v291
    %v293 = vld [vmem:[#allocation2 + $0x120] sm:$0x7]
    %v294 = vlaneseq
    %v295 = vshrl.u32 %v294, 7
    %v296 = vsub.s32 5, %v295
    %v297 = vrot.slane %v261, %v296
    %v298 = vmul.f32 %v293, %v297
    %v299 = vadd.f32 %v262, %v268
    %v300 = vadd.f32 %v274, %v280
    %v301 = vadd.f32 %v286, %v292
    %v302 = vadd.f32 %v299, %v300
    %v303 = vadd.f32 %v301, %v298
    %v304 = vadd.f32 %v302, %v303
    %v305 = vld [vmem:[#allocation2 + $0x130] sm:$0x7]
    %v306 = vld [vmem:[#allocation2 + $0x138] sm:$0x7]
    %v307 = vmul.f32 %v304, %v304
    %v309 = vrot.slane %v307, 5
    %v311 = vsel %vm95, %v304, %v309
    %v312 = vsel %vm24, %v311, 0.0
    %313 = vadd.xlane.f32.xlu0 %v312
    %v314 = vpop.xlane.xlu0 %313
    %v315 = vmul.f32 %v314, 0.055555556
    %v316 = vmul.f32 %v315, %v315
    %v318 = vrot.slane %v316, 5
    %v320 = vsub.f32 %v315, %v318
    %v321 = vmax.f32 %v320, 0.0
    %v322 = vadd.f32 %v321, 1e-05
    %v323 = vrsqrt.pop %v322
    %325 = vset.pattern.permute.xlu0 0
    %326 = vperm.xlu0 %325, %v323
    %v327 = vpop.permute.xlu0 %326
    %v328 = vrot.slane %v327, 3
    %v330 = vmul.f32 %v305, %v328
    %v331 = vmul.f32 %v315, %v330
    %v332 = vsub.f32 %v306, %v331
    %v333 = vmul.f32 %v304, %v330
    %v334 = vadd.f32 %v333, %v332
    %v335 = vmax.f32 %v334, 0.0
    %v336 = vld [vmem:[#allocation2 + $0x158] sm:$0x7]
    %v337 = vld [vmem:[#allocation2 + $0x140] sm:$0x7]
    %v338 = vlaneseq
    %v339 = vshrl.u32 %v338, 7
    %v340 = vsub.s32 0, %v339
    %v341 = vrot.slane %v335, %v340
    %v342 = vmul.f32 %v337, %v341
    %v343 = vld [vmem:[#allocation2 + $0x148] sm:$0x7]
    %v344 = vlaneseq
    %v345 = vshrl.u32 %v344, 7
    %v346 = vsub.s32 1, %v345
    %v347 = vrot.slane %v335, %v346
    %v348 = vmul.f32 %v343, %v347
    %v349 = vld [vmem:[#allocation2 + $0x150] sm:$0x7]
    %v350 = vlaneseq
    %v351 = vshrl.u32 %v350, 7
    %v352 = vsub.s32 2, %v351
    %v353 = vrot.slane %v335, %v352
    %v354 = vmul.f32 %v349, %v353
    %v355 = vadd.f32 %v336, %v342
    %v356 = vadd.f32 %v348, %v354
    %v357 = vadd.f32 %v355, %v356
    %v358 = vld [vmem:[#allocation2 + $0x160] sm:$0x7]
    %v359 = vld [vmem:[#allocation2 + $0x168] sm:$0x7]
    %v360 = vmul.f32 %v357, %v357
    %v362 = vrot.slane %v360, 5
    %v364 = vsel %vm95, %v357, %v362
    %v365 = vsel %vm24, %v364, 0.0
    %366 = vadd.xlane.f32.xlu0 %v365
    %v367 = vpop.xlane.xlu0 %366
    %v368 = vmul.f32 %v367, 0.055555556
    %v369 = vmul.f32 %v368, %v368
    %v371 = vrot.slane %v369, 5
    %v373 = vsub.f32 %v368, %v371
    %v374 = vmax.f32 %v373, 0.0
    %v375 = vadd.f32 %v374, 1e-05
    %v376 = vrsqrt.pop %v375
    %378 = vset.pattern.permute.xlu0 0
    %379 = vperm.xlu0 %378, %v376
    %v380 = vpop.permute.xlu0 %379
    %v381 = vrot.slane %v380, 3
    %v383 = vmul.f32 %v358, %v381
    %v384 = vmul.f32 %v368, %v383
    %v385 = vsub.f32 %v359, %v384
    %v386 = vmul.f32 %v357, %v383
    %v387 = vadd.f32 %v386, %v385
    %v388 = vmax.f32 %v387, 0.0
    %v389 = vld [vmem:[#allocation2 + $0x188] sm:$0x3f]
    %v390 = vld [vmem:[#allocation2 + $0x170] sm:$0x3f]
    %v391 = vlaneseq
    %v392 = vshrl.u32 %v391, 7
    %v393 = vsub.s32 0, %v392
    %v394 = vrot.slane %v388, %v393
    %v395 = vmul.f32 %v390, %v394
    %v396 = vld [vmem:[#allocation2 + $0x178] sm:$0x3f]
    %v397 = vlaneseq
    %v398 = vshrl.u32 %v397, 7
    %v399 = vsub.s32 1, %v398
    %v400 = vrot.slane %v388, %v399
    %v401 = vmul.f32 %v396, %v400
    %v402 = vld [vmem:[#allocation2 + $0x180] sm:$0x3f]
    %v403 = vlaneseq
    %v404 = vshrl.u32 %v403, 7
    %v405 = vsub.s32 2, %v404
    %v406 = vrot.slane %v388, %v405
    %v407 = vmul.f32 %v402, %v406
    %v408 = vadd.f32 %v389, %v395
    %v409 = vadd.f32 %v401, %v407
    %v410 = vadd.f32 %v408, %v409
    %v411 = vadd.f32 %v410, %v239
    %v412 = vld [vmem:[#allocation2 + $0x190] sm:$0x3f]
    %v413 = vld [vmem:[#allocation2 + $0x198] sm:$0x3f]
    %v414 = vsel %vm24, %v411, 0.0
    %415 = vadd.xlane.f32.xlu0 %v414
    %v416 = vpop.xlane.xlu0 %415
    %v417 = vmul.f32 %v416, %v28
    %v418 = vmul.f32 %v411, %v411
    %v419 = vsel %vm24, %v418, 0.0
    %420 = vadd.xlane.f32.xlu0 %v419
    %v421 = vpop.xlane.xlu0 %420
    %v422 = vmul.f32 %v421, %v28
    %v423 = vmul.f32 %v417, %v417
    %v424 = vsub.f32 %v422, %v423
    %v425 = vmax.f32 %v424, 0.0
    %v426 = vadd.f32 %v425, 1e-05
    %v427 = vrsqrt.pop %v426
    %v428 = vmul.f32 %v412, %v427
    %v429 = vmul.f32 %v417, %v428
    %v430 = vsub.f32 %v413, %v429
    %v431 = vmul.f32 %v411, %v428
    %v432 = vadd.f32 %v431, %v430
    %v433 = vmax.f32 %v432, 0.0
    %v434 = vld [vmem:[#allocation2 + $0x1d0] sm:$0x7]
    %v435 = vld [vmem:[#allocation2 + $0x1a0] sm:$0x7]
    %v436 = vlaneseq
    %v437 = vshrl.u32 %v436, 7
    %v438 = vsub.s32 0, %v437
    %v439 = vrot.slane %v433, %v438
    %v440 = vmul.f32 %v435, %v439
    %v441 = vld [vmem:[#allocation2 + $0x1a8] sm:$0x7]
    %v442 = vlaneseq
    %v443 = vshrl.u32 %v442, 7
    %v444 = vsub.s32 1, %v443
    %v445 = vrot.slane %v433, %v444
    %v446 = vmul.f32 %v441, %v445
    %v447 = vld [vmem:[#allocation2 + $0x1b0] sm:$0x7]
    %v448 = vlaneseq
    %v449 = vshrl.u32 %v448, 7
    %v450 = vsub.s32 2, %v449
    %v451 = vrot.slane %v433, %v450
    %v452 = vmul.f32 %v447, %v451
    %v453 = vld [vmem:[#allocation2 + $0x1b8] sm:$0x7]
    %v454 = vlaneseq
    %v455 = vshrl.u32 %v454, 7
    %v456 = vsub.s32 3, %v455
    %v457 = vrot.slane %v433, %v456
    %v458 = vmul.f32 %v453, %v457
    %v459 = vld [vmem:[#allocation2 + $0x1c0] sm:$0x7]
    %v460 = vlaneseq
    %v461 = vshrl.u32 %v460, 7
    %v462 = vsub.s32 4, %v461
    %v463 = vrot.slane %v433, %v462
    %v464 = vmul.f32 %v459, %v463
    %v465 = vld [vmem:[#allocation2 + $0x1c8] sm:$0x7]
    %v466 = vlaneseq
    %v467 = vshrl.u32 %v466, 7
    %v468 = vsub.s32 5, %v467
    %v469 = vrot.slane %v433, %v468
    %v470 = vmul.f32 %v465, %v469
    %v471 = vadd.f32 %v434, %v440
    %v472 = vadd.f32 %v446, %v452
    %v473 = vadd.f32 %v458, %v464
    %v474 = vadd.f32 %v471, %v472
    %v475 = vadd.f32 %v473, %v470
    %v476 = vadd.f32 %v474, %v475
    %v477 = vld [vmem:[#allocation2 + $0x1d8] sm:$0x7]
    %v478 = vld [vmem:[#allocation2 + $0x1e0] sm:$0x7]
    %v479 = vmul.f32 %v476, %v476
    %v481 = vrot.slane %v479, 5
    %v483 = vsel %vm95, %v476, %v481
    %v484 = vsel %vm24, %v483, 0.0
    %485 = vadd.xlane.f32.xlu0 %v484
    %v486 = vpop.xlane.xlu0 %485
    %v487 = vmul.f32 %v486, 0.055555556
    %v488 = vmul.f32 %v487, %v487
    %v490 = vrot.slane %v488, 5
    %v492 = vsub.f32 %v487, %v490
    %v493 = vmax.f32 %v492, 0.0
    %v494 = vadd.f32 %v493, 1e-05
    %v495 = vrsqrt.pop %v494
    %497 = vset.pattern.permute.xlu0 0
    %498 = vperm.xlu0 %497, %v495
    %v499 = vpop.permute.xlu0 %498
    %v500 = vrot.slane %v499, 3
    %v502 = vmul.f32 %v477, %v500
    %v503 = vmul.f32 %v487, %v502
    %v504 = vsub.f32 %v478, %v503
    %v505 = vmul.f32 %v476, %v502
    %v506 = vadd.f32 %v505, %v504
    %v507 = vmax.f32 %v506, 0.0
    %v508 = vld [vmem:[#allocation2 + $0x200] sm:$0x7]
    %v509 = vld [vmem:[#allocation2 + $0x1e8] sm:$0x7]
    %v510 = vlaneseq
    %v511 = vshrl.u32 %v510, 7
    %v512 = vsub.s32 0, %v511
    %v513 = vrot.slane %v507, %v512
    %v514 = vmul.f32 %v509, %v513
    %v515 = vld [vmem:[#allocation2 + $0x1f0] sm:$0x7]
    %v516 = vlaneseq
    %v517 = vshrl.u32 %v516, 7
    %v518 = vsub.s32 1, %v517
    %v519 = vrot.slane %v507, %v518
    %v520 = vmul.f32 %v515, %v519
    %v521 = vld [vmem:[#allocation2 + $0x1f8] sm:$0x7]
    %v522 = vlaneseq
    %v523 = vshrl.u32 %v522, 7
    %v524 = vsub.s32 2, %v523
    %v525 = vrot.slane %v507, %v524
    %v526 = vmul.f32 %v521, %v525
    %v527 = vadd.f32 %v508, %v514
    %v528 = vadd.f32 %v520, %v526
    %v529 = vadd.f32 %v527, %v528
    %v530 = vld [vmem:[#allocation2 + $0x208] sm:$0x7]
    %v531 = vld [vmem:[#allocation2 + $0x210] sm:$0x7]
    %v532 = vmul.f32 %v529, %v529
    %v534 = vrot.slane %v532, 5
    %v536 = vsel %vm95, %v529, %v534
    %v537 = vsel %vm24, %v536, 0.0
    %538 = vadd.xlane.f32.xlu0 %v537
    %v539 = vpop.xlane.xlu0 %538
    %v540 = vmul.f32 %v539, 0.055555556
    %v541 = vmul.f32 %v540, %v540
    %v543 = vrot.slane %v541, 5
    %v545 = vsub.f32 %v540, %v543
    %v546 = vmax.f32 %v545, 0.0
    %v547 = vadd.f32 %v546, 1e-05
    %v548 = vrsqrt.pop %v547
    %550 = vset.pattern.permute.xlu0 0
    %551 = vperm.xlu0 %550, %v548
    %v552 = vpop.permute.xlu0 %551
    %v553 = vrot.slane %v552, 3
    %v555 = vmul.f32 %v530, %v553
    %v556 = vmul.f32 %v540, %v555
    %v557 = vsub.f32 %v531, %v556
    %v558 = vmul.f32 %v529, %v555
    %v559 = vadd.f32 %v558, %v557
    %v560 = vmax.f32 %v559, 0.0
    %v561 = vld [vmem:[#allocation2 + $0x230] sm:$0x3f]
    %v562 = vld [vmem:[#allocation2 + $0x218] sm:$0x3f]
    %v563 = vlaneseq
    %v564 = vshrl.u32 %v563, 7
    %v565 = vsub.s32 0, %v564
    %v566 = vrot.slane %v560, %v565
    %v567 = vmul.f32 %v562, %v566
    %v568 = vld [vmem:[#allocation2 + $0x220] sm:$0x3f]
    %v569 = vlaneseq
    %v570 = vshrl.u32 %v569, 7
    %v571 = vsub.s32 1, %v570
    %v572 = vrot.slane %v560, %v571
    %v573 = vmul.f32 %v568, %v572
    %v574 = vld [vmem:[#allocation2 + $0x228] sm:$0x3f]
    %v575 = vlaneseq
    %v576 = vshrl.u32 %v575, 7
    %v577 = vsub.s32 2, %v576
    %v578 = vrot.slane %v560, %v577
    %v579 = vmul.f32 %v574, %v578
    %v580 = vadd.f32 %v561, %v567
    %v581 = vadd.f32 %v573, %v579
    %v582 = vadd.f32 %v580, %v581
    %v583 = vld [vmem:[#allocation2 + $0x888] sm:$0x3f]
    %v584 = vld [vmem:[#allocation2 + $0x858] sm:$0x3f]
    %v585 = vlaneseq
    %v586 = vshrl.u32 %v585, 7
    %v587 = vsub.s32 0, %v586
    %v588 = vrot.slane %v411, %v587
    %v589 = vmul.f32 %v584, %v588
    %v590 = vld [vmem:[#allocation2 + $0x860] sm:$0x3f]
    %v591 = vlaneseq
    %v592 = vshrl.u32 %v591, 7
    %v593 = vsub.s32 1, %v592
    %v594 = vrot.slane %v411, %v593
    %v595 = vmul.f32 %v590, %v594
    %v596 = vld [vmem:[#allocation2 + $0x868] sm:$0x3f]
    %v597 = vlaneseq
    %v598 = vshrl.u32 %v597, 7
    %v599 = vsub.s32 2, %v598
    %v600 = vrot.slane %v411, %v599
    %v601 = vmul.f32 %v596, %v600
    %v602 = vld [vmem:[#allocation2 + $0x870] sm:$0x3f]
    %v603 = vlaneseq
    %v604 = vshrl.u32 %v603, 7
    %v605 = vsub.s32 3, %v604
    %v606 = vrot.slane %v411, %v605
    %v607 = vmul.f32 %v602, %v606
    %v608 = vld [vmem:[#allocation2 + $0x878] sm:$0x3f]
    %v609 = vlaneseq
    %v610 = vshrl.u32 %v609, 7
    %v611 = vsub.s32 4, %v610
    %v612 = vrot.slane %v411, %v611
    %v613 = vmul.f32 %v608, %v612
    %v614 = vld [vmem:[#allocation2 + $0x880] sm:$0x3f]
    %v615 = vlaneseq
    %v616 = vshrl.u32 %v615, 7
    %v617 = vsub.s32 5, %v616
    %v618 = vrot.slane %v411, %v617
    %v619 = vmul.f32 %v614, %v618
    %v620 = vadd.f32 %v583, %v589
    %v621 = vadd.f32 %v595, %v601
    %v622 = vadd.f32 %v607, %v613
    %v623 = vadd.f32 %v620, %v621
    %v624 = vadd.f32 %v622, %v619
    %v625 = vadd.f32 %v623, %v624
    %v626 = vadd.f32 %v582, %v625
    %v627 = vld [vmem:[#allocation2 + $0x238] sm:$0x3f]
    %v628 = vld [vmem:[#allocation2 + $0x240] sm:$0x3f]
    %v629 = vsel %vm24, %v626, 0.0
    %630 = vadd.xlane.f32.xlu0 %v629
    %v631 = vpop.xlane.xlu0 %630
    %v632 = vmul.f32 %v631, %v28
    %v633 = vmul.f32 %v626, %v626
    %v634 = vsel %vm24, %v633, 0.0
    %635 = vadd.xlane.f32.xlu0 %v634
    %v636 = vpop.xlane.xlu0 %635
    %v637 = vmul.f32 %v636, %v28
    %v638 = vmul.f32 %v632, %v632
    %v639 = vsub.f32 %v637, %v638
    %v640 = vmax.f32 %v639, 0.0
    %v641 = vadd.f32 %v640, 1e-05
    %v642 = vrsqrt.pop %v641
    %v643 = vmul.f32 %v627, %v642
    %v644 = vmul.f32 %v632, %v643
    %v645 = vsub.f32 %v628, %v644
    %v646 = vmul.f32 %v626, %v643
    %v647 = vadd.f32 %v646, %v645
    %v648 = vmax.f32 %v647, 0.0
    %v649 = vld [vmem:[#allocation2 + $0x278] sm:$0x7]
    %v650 = vld [vmem:[#allocation2 + $0x248] sm:$0x7]
    %v651 = vlaneseq
    %v652 = vshrl.u32 %v651, 7
    %v653 = vsub.s32 0, %v652
    %v654 = vrot.slane %v648, %v653
    %v655 = vmul.f32 %v650, %v654
    %v656 = vld [vmem:[#allocation2 + $0x250] sm:$0x7]
    %v657 = vlaneseq
    %v658 = vshrl.u32 %v657, 7
    %v659 = vsub.s32 1, %v658
    %v660 = vrot.slane %v648, %v659
    %v661 = vmul.f32 %v656, %v660
    %v662 = vld [vmem:[#allocation2 + $0x258] sm:$0x7]
    %v663 = vlaneseq
    %v664 = vshrl.u32 %v663, 7
    %v665 = vsub.s32 2, %v664
    %v666 = vrot.slane %v648, %v665
    %v667 = vmul.f32 %v662, %v666
    %v668 = vld [vmem:[#allocation2 + $0x260] sm:$0x7]
    %v669 = vlaneseq
    %v670 = vshrl.u32 %v669, 7
    %v671 = vsub.s32 3, %v670
    %v672 = vrot.slane %v648, %v671
    %v673 = vmul.f32 %v668, %v672
    %v674 = vld [vmem:[#allocation2 + $0x268] sm:$0x7]
    %v675 = vlaneseq
    %v676 = vshrl.u32 %v675, 7
    %v677 = vsub.s32 4, %v676
    %v678 = vrot.slane %v648, %v677
    %v679 = vmul.f32 %v674, %v678
    %v680 = vld [vmem:[#allocation2 + $0x270] sm:$0x7]
    %v681 = vlaneseq
    %v682 = vshrl.u32 %v681, 7
    %v683 = vsub.s32 5, %v682
    %v684 = vrot.slane %v648, %v683
    %v685 = vmul.f32 %v680, %v684
    %v686 = vadd.f32 %v649, %v655
    %v687 = vadd.f32 %v661, %v667
    %v688 = vadd.f32 %v673, %v679
    %v689 = vadd.f32 %v686, %v687
    %v690 = vadd.f32 %v688, %v685
    %v691 = vadd.f32 %v689, %v690
    %v692 = vld [vmem:[#allocation2 + $0x280] sm:$0x7]
    %v693 = vld [vmem:[#allocation2 + $0x288] sm:$0x7]
    %v694 = vmul.f32 %v691, %v691
    %v696 = vrot.slane %v694, 5
    %v698 = vsel %vm95, %v691, %v696
    %v699 = vsel %vm24, %v698, 0.0
    %700 = vadd.xlane.f32.xlu0 %v699
    %v701 = vpop.xlane.xlu0 %700
    %v702 = vmul.f32 %v701, 0.055555556
    %v703 = vmul.f32 %v702, %v702
    %v705 = vrot.slane %v703, 5
    %v707 = vsub.f32 %v702, %v705
    %v708 = vmax.f32 %v707, 0.0
    %v709 = vadd.f32 %v708, 1e-05
    %v710 = vrsqrt.pop %v709
    %712 = vset.pattern.permute.xlu0 0
    %713 = vperm.xlu0 %712, %v710
    %v714 = vpop.permute.xlu0 %713
    %v715 = vrot.slane %v714, 3
    %v717 = vmul.f32 %v692, %v715
    %v718 = vmul.f32 %v702, %v717
    %v719 = vsub.f32 %v693, %v718
    %v720 = vmul.f32 %v691, %v717
    %v721 = vadd.f32 %v720, %v719
    %v722 = vmax.f32 %v721, 0.0
    %v723 = vld [vmem:[#allocation2 + $0x2a8] sm:$0x7]
    %v724 = vld [vmem:[#allocation2 + $0x290] sm:$0x7]
    %v725 = vlaneseq
    %v726 = vshrl.u32 %v725, 7
    %v727 = vsub.s32 0, %v726
    %v728 = vrot.slane %v722, %v727
    %v729 = vmul.f32 %v724, %v728
    %v730 = vld [vmem:[#allocation2 + $0x298] sm:$0x7]
    %v731 = vlaneseq
    %v732 = vshrl.u32 %v731, 7
    %v733 = vsub.s32 1, %v732
    %v734 = vrot.slane %v722, %v733
    %v735 = vmul.f32 %v730, %v734
    %v736 = vld [vmem:[#allocation2 + $0x2a0] sm:$0x7]
    %v737 = vlaneseq
    %v738 = vshrl.u32 %v737, 7
    %v739 = vsub.s32 2, %v738
    %v740 = vrot.slane %v722, %v739
    %v741 = vmul.f32 %v736, %v740
    %v742 = vadd.f32 %v723, %v729
    %v743 = vadd.f32 %v735, %v741
    %v744 = vadd.f32 %v742, %v743
    %v745 = vld [vmem:[#allocation2 + $0x2b0] sm:$0x7]
    %v746 = vld [vmem:[#allocation2 + $0x2b8] sm:$0x7]
    %v747 = vmul.f32 %v744, %v744
    %v749 = vrot.slane %v747, 5
    %v751 = vsel %vm95, %v744, %v749
    %v752 = vsel %vm24, %v751, 0.0
    %753 = vadd.xlane.f32.xlu0 %v752
    %v754 = vpop.xlane.xlu0 %753
    %v755 = vmul.f32 %v754, 0.055555556
    %v756 = vmul.f32 %v755, %v755
    %v758 = vrot.slane %v756, 5
    %v760 = vsub.f32 %v755, %v758
    %v761 = vmax.f32 %v760, 0.0
    %v762 = vadd.f32 %v761, 1e-05
    %v763 = vrsqrt.pop %v762
    %765 = vset.pattern.permute.xlu0 0
    %766 = vperm.xlu0 %765, %v763
    %v767 = vpop.permute.xlu0 %766
    %v768 = vrot.slane %v767, 3
    %v770 = vmul.f32 %v745, %v768
    %v771 = vmul.f32 %v755, %v770
    %v772 = vsub.f32 %v746, %v771
    %v773 = vmul.f32 %v744, %v770
    %v774 = vadd.f32 %v773, %v772
    %v775 = vmax.f32 %v774, 0.0
    %v776 = vld [vmem:[#allocation2 + $0x2d8] sm:$0x3f]
    %v777 = vld [vmem:[#allocation2 + $0x2c0] sm:$0x3f]
    %v778 = vlaneseq
    %v779 = vshrl.u32 %v778, 7
    %v780 = vsub.s32 0, %v779
    %v781 = vrot.slane %v775, %v780
    %v782 = vmul.f32 %v777, %v781
    %v783 = vld [vmem:[#allocation2 + $0x2c8] sm:$0x3f]
    %v784 = vlaneseq
    %v785 = vshrl.u32 %v784, 7
    %v786 = vsub.s32 1, %v785
    %v787 = vrot.slane %v775, %v786
    %v788 = vmul.f32 %v783, %v787
    %v789 = vld [vmem:[#allocation2 + $0x2d0] sm:$0x3f]
    %v790 = vlaneseq
    %v791 = vshrl.u32 %v790, 7
    %v792 = vsub.s32 2, %v791
    %v793 = vrot.slane %v775, %v792
    %v794 = vmul.f32 %v789, %v793
    %v795 = vadd.f32 %v776, %v782
    %v796 = vadd.f32 %v788, %v794
    %v797 = vadd.f32 %v795, %v796
    %v798 = vadd.f32 %v797, %v626
    %v799 = vld [vmem:[#allocation2 + $0x2e0] sm:$0x3f]
    %v800 = vld [vmem:[#allocation2 + $0x2e8] sm:$0x3f]
    %v801 = vsel %vm24, %v798, 0.0
    %802 = vadd.xlane.f32.xlu0 %v801
    %v803 = vpop.xlane.xlu0 %802
    %v804 = vmul.f32 %v803, %v28
    %v805 = vmul.f32 %v798, %v798
    %v806 = vsel %vm24, %v805, 0.0
    %807 = vadd.xlane.f32.xlu0 %v806
    %v808 = vpop.xlane.xlu0 %807
    %v809 = vmul.f32 %v808, %v28
    %v810 = vmul.f32 %v804, %v804
    %v811 = vsub.f32 %v809, %v810
    %v812 = vmax.f32 %v811, 0.0
    %v813 = vadd.f32 %v812, 1e-05
    %v814 = vrsqrt.pop %v813
    %v815 = vmul.f32 %v799, %v814
    %v816 = vmul.f32 %v804, %v815
    %v817 = vsub.f32 %v800, %v816
    %v818 = vmul.f32 %v798, %v815
    %v819 = vadd.f32 %v818, %v817
    %v820 = vmax.f32 %v819, 0.0
    %v821 = vld [vmem:[#allocation2 + $0x320] sm:$0x7]
    %v822 = vld [vmem:[#allocation2 + $0x2f0] sm:$0x7]
    %v823 = vlaneseq
    %v824 = vshrl.u32 %v823, 7
    %v825 = vsub.s32 0, %v824
    %v826 = vrot.slane %v820, %v825
    %v827 = vmul.f32 %v822, %v826
    %v828 = vld [vmem:[#allocation2 + $0x2f8] sm:$0x7]
    %v829 = vlaneseq
    %v830 = vshrl.u32 %v829, 7
    %v831 = vsub.s32 1, %v830
    %v832 = vrot.slane %v820, %v831
    %v833 = vmul.f32 %v828, %v832
    %v834 = vld [vmem:[#allocation2 + $0x300] sm:$0x7]
    %v835 = vlaneseq
    %v836 = vshrl.u32 %v835, 7
    %v837 = vsub.s32 2, %v836
    %v838 = vrot.slane %v820, %v837
    %v839 = vmul.f32 %v834, %v838
    %v840 = vld [vmem:[#allocation2 + $0x308] sm:$0x7]
    %v841 = vlaneseq
    %v842 = vshrl.u32 %v841, 7
    %v843 = vsub.s32 3, %v842
    %v844 = vrot.slane %v820, %v843
    %v845 = vmul.f32 %v840, %v844
    %v846 = vld [vmem:[#allocation2 + $0x310] sm:$0x7]
    %v847 = vlaneseq
    %v848 = vshrl.u32 %v847, 7
    %v849 = vsub.s32 4, %v848
    %v850 = vrot.slane %v820, %v849
    %v851 = vmul.f32 %v846, %v850
    %v852 = vld [vmem:[#allocation2 + $0x318] sm:$0x7]
    %v853 = vlaneseq
    %v854 = vshrl.u32 %v853, 7
    %v855 = vsub.s32 5, %v854
    %v856 = vrot.slane %v820, %v855
    %v857 = vmul.f32 %v852, %v856
    %v858 = vadd.f32 %v821, %v827
    %v859 = vadd.f32 %v833, %v839
    %v860 = vadd.f32 %v845, %v851
    %v861 = vadd.f32 %v858, %v859
    %v862 = vadd.f32 %v860, %v857
    %v863 = vadd.f32 %v861, %v862
    %v864 = vld [vmem:[#allocation2 + $0x328] sm:$0x7]
    %v865 = vld [vmem:[#allocation2 + $0x330] sm:$0x7]
    %v866 = vmul.f32 %v863, %v863
    %v868 = vrot.slane %v866, 5
    %v870 = vsel %vm95, %v863, %v868
    %v871 = vsel %vm24, %v870, 0.0
    %872 = vadd.xlane.f32.xlu0 %v871
    %v873 = vpop.xlane.xlu0 %872
    %v874 = vmul.f32 %v873, 0.055555556
    %v875 = vmul.f32 %v874, %v874
    %v877 = vrot.slane %v875, 5
    %v879 = vsub.f32 %v874, %v877
    %v880 = vmax.f32 %v879, 0.0
    %v881 = vadd.f32 %v880, 1e-05
    %v882 = vrsqrt.pop %v881
    %884 = vset.pattern.permute.xlu0 0
    %885 = vperm.xlu0 %884, %v882
    %v886 = vpop.permute.xlu0 %885
    %v887 = vrot.slane %v886, 3
    %v889 = vmul.f32 %v864, %v887
    %v890 = vmul.f32 %v874, %v889
    %v891 = vsub.f32 %v865, %v890
    %v892 = vmul.f32 %v863, %v889
    %v893 = vadd.f32 %v892, %v891
    %v894 = vmax.f32 %v893, 0.0
    %v895 = vld [vmem:[#allocation2 + $0x350] sm:$0x7]
    %v896 = vld [vmem:[#allocation2 + $0x338] sm:$0x7]
    %v897 = vlaneseq
    %v898 = vshrl.u32 %v897, 7
    %v899 = vsub.s32 0, %v898
    %v900 = vrot.slane %v894, %v899
    %v901 = vmul.f32 %v896, %v900
    %v902 = vld [vmem:[#allocation2 + $0x340] sm:$0x7]
    %v903 = vlaneseq
    %v904 = vshrl.u32 %v903, 7
    %v905 = vsub.s32 1, %v904
    %v906 = vrot.slane %v894, %v905
    %v907 = vmul.f32 %v902, %v906
    %v908 = vld [vmem:[#allocation2 + $0x348] sm:$0x7]
    %v909 = vlaneseq
    %v910 = vshrl.u32 %v909, 7
    %v911 = vsub.s32 2, %v910
    %v912 = vrot.slane %v894, %v911
    %v913 = vmul.f32 %v908, %v912
    %v914 = vadd.f32 %v895, %v901
    %v915 = vadd.f32 %v907, %v913
    %v916 = vadd.f32 %v914, %v915
    %v917 = vld [vmem:[#allocation2 + $0x358] sm:$0x7]
    %v918 = vld [vmem:[#allocation2 + $0x360] sm:$0x7]
    %v919 = vmul.f32 %v916, %v916
    %v921 = vrot.slane %v919, 5
    %v923 = vsel %vm95, %v916, %v921
    %v924 = vsel %vm24, %v923, 0.0
    %925 = vadd.xlane.f32.xlu0 %v924
    %v926 = vpop.xlane.xlu0 %925
    %v927 = vmul.f32 %v926, 0.055555556
    %v928 = vmul.f32 %v927, %v927
    %v930 = vrot.slane %v928, 5
    %v932 = vsub.f32 %v927, %v930
    %v933 = vmax.f32 %v932, 0.0
    %v934 = vadd.f32 %v933, 1e-05
    %v935 = vrsqrt.pop %v934
    %937 = vset.pattern.permute.xlu0 0
    %938 = vperm.xlu0 %937, %v935
    %v939 = vpop.permute.xlu0 %938
    %v940 = vrot.slane %v939, 3
    %v942 = vmul.f32 %v917, %v940
    %v943 = vmul.f32 %v927, %v942
    %v944 = vsub.f32 %v918, %v943
    %v945 = vmul.f32 %v916, %v942
    %v946 = vadd.f32 %v945, %v944
    %v947 = vmax.f32 %v946, 0.0
    %v948 = vld [vmem:[#allocation2 + $0x380] sm:$0x3f]
    %v949 = vld [vmem:[#allocation2 + $0x368] sm:$0x3f]
    %v950 = vlaneseq
    %v951 = vshrl.u32 %v950, 7
    %v952 = vsub.s32 0, %v951
    %v953 = vrot.slane %v947, %v952
    %v954 = vmul.f32 %v949, %v953
    %v955 = vld [vmem:[#allocation2 + $0x370] sm:$0x3f]
    %v956 = vlaneseq
    %v957 = vshrl.u32 %v956, 7
    %v958 = vsub.s32 1, %v957
    %v959 = vrot.slane %v947, %v958
    %v960 = vmul.f32 %v955, %v959
    %v961 = vld [vmem:[#allocation2 + $0x378] sm:$0x3f]
    %v962 = vlaneseq
    %v963 = vshrl.u32 %v962, 7
    %v964 = vsub.s32 2, %v963
    %v965 = vrot.slane %v947, %v964
    %v966 = vmul.f32 %v961, %v965
    %v967 = vadd.f32 %v948, %v954
    %v968 = vadd.f32 %v960, %v966
    %v969 = vadd.f32 %v967, %v968
    %v970 = vld [vmem:[#allocation2 + $0x8c0] sm:$0x3f]
    %v971 = vld [vmem:[#allocation2 + $0x890] sm:$0x3f]
    %v972 = vlaneseq
    %v973 = vshrl.u32 %v972, 7
    %v974 = vsub.s32 0, %v973
    %v975 = vrot.slane %v798, %v974
    %v976 = vmul.f32 %v971, %v975
    %v977 = vld [vmem:[#allocation2 + $0x898] sm:$0x3f]
    %v978 = vlaneseq
    %v979 = vshrl.u32 %v978, 7
    %v980 = vsub.s32 1, %v979
    %v981 = vrot.slane %v798, %v980
    %v982 = vmul.f32 %v977, %v981
    %v983 = vld [vmem:[#allocation2 + $0x8a0] sm:$0x3f]
    %v984 = vlaneseq
    %v985 = vshrl.u32 %v984, 7
    %v986 = vsub.s32 2, %v985
    %v987 = vrot.slane %v798, %v986
    %v988 = vmul.f32 %v983, %v987
    %v989 = vld [vmem:[#allocation2 + $0x8a8] sm:$0x3f]
    %v990 = vlaneseq
    %v991 = vshrl.u32 %v990, 7
    %v992 = vsub.s32 3, %v991
    %v993 = vrot.slane %v798, %v992
    %v994 = vmul.f32 %v989, %v993
    %v995 = vld [vmem:[#allocation2 + $0x8b0] sm:$0x3f]
    %v996 = vlaneseq
    %v997 = vshrl.u32 %v996, 7
    %v998 = vsub.s32 4, %v997
    %v999 = vrot.slane %v798, %v998
    %v1000 = vmul.f32 %v995, %v999
    %v1001 = vld [vmem:[#allocation2 + $0x8b8] sm:$0x3f]
    %v1002 = vlaneseq
    %v1003 = vshrl.u32 %v1002, 7
    %v1004 = vsub.s32 5, %v1003
    %v1005 = vrot.slane %v798, %v1004
    %v1006 = vmul.f32 %v1001, %v1005
    %v1007 = vadd.f32 %v970, %v976
    %v1008 = vadd.f32 %v982, %v988
    %v1009 = vadd.f32 %v994, %v1000
    %v1010 = vadd.f32 %v1007, %v1008
    %v1011 = vadd.f32 %v1009, %v1006
    %v1012 = vadd.f32 %v1010, %v1011
    %v1013 = vadd.f32 %v969, %v1012
    %v1014 = vld [vmem:[#allocation2 + $0x388] sm:$0x3f]
    %v1015 = vld [vmem:[#allocation2 + $0x390] sm:$0x3f]
    %v1016 = vsel %vm24, %v1013, 0.0
    %1017 = vadd.xlane.f32.xlu0 %v1016
    %v1018 = vpop.xlane.xlu0 %1017
    %v1019 = vmul.f32 %v1018, %v28
    %v1020 = vmul.f32 %v1013, %v1013
    %v1021 = vsel %vm24, %v1020, 0.0
    %1022 = vadd.xlane.f32.xlu0 %v1021
    %v1023 = vpop.xlane.xlu0 %1022
    %v1024 = vmul.f32 %v1023, %v28
    %v1025 = vmul.f32 %v1019, %v1019
    %v1026 = vsub.f32 %v1024, %v1025
    %v1027 = vmax.f32 %v1026, 0.0
    %v1028 = vadd.f32 %v1027, 1e-05
    %v1029 = vrsqrt.pop %v1028
    %v1030 = vmul.f32 %v1014, %v1029
    %v1031 = vmul.f32 %v1019, %v1030
    %v1032 = vsub.f32 %v1015, %v1031
    %v1033 = vmul.f32 %v1013, %v1030
    %v1034 = vadd.f32 %v1033, %v1032
    %v1035 = vmax.f32 %v1034, 0.0
    %v1036 = vld [vmem:[#allocation2 + $0x3c8] sm:$0x7]
    %v1037 = vld [vmem:[#allocation2 + $0x398] sm:$0x7]
    %v1038 = vlaneseq
    %v1039 = vshrl.u32 %v1038, 7
    %v1040 = vsub.s32 0, %v1039
    %v1041 = vrot.slane %v1035, %v1040
    %v1042 = vmul.f32 %v1037, %v1041
    %v1043 = vld [vmem:[#allocation2 + $0x3a0] sm:$0x7]
    %v1044 = vlaneseq
    %v1045 = vshrl.u32 %v1044, 7
    %v1046 = vsub.s32 1, %v1045
    %v1047 = vrot.slane %v1035, %v1046
    %v1048 = vmul.f32 %v1043, %v1047
    %v1049 = vld [vmem:[#allocation2 + $0x3a8] sm:$0x7]
    %v1050 = vlaneseq
    %v1051 = vshrl.u32 %v1050, 7
    %v1052 = vsub.s32 2, %v1051
    %v1053 = vrot.slane %v1035, %v1052
    %v1054 = vmul.f32 %v1049, %v1053
    %v1055 = vld [vmem:[#allocation2 + $0x3b0] sm:$0x7]
    %v1056 = vlaneseq
    %v1057 = vshrl.u32 %v1056, 7
    %v1058 = vsub.s32 3, %v1057
    %v1059 = vrot.slane %v1035, %v1058
    %v1060 = vmul.f32 %v1055, %v1059
    %v1061 = vld [vmem:[#allocation2 + $0x3b8] sm:$0x7]
    %v1062 = vlaneseq
    %v1063 = vshrl.u32 %v1062, 7
    %v1064 = vsub.s32 4, %v1063
    %v1065 = vrot.slane %v1035, %v1064
    %v1066 = vmul.f32 %v1061, %v1065
    %v1067 = vld [vmem:[#allocation2 + $0x3c0] sm:$0x7]
    %v1068 = vlaneseq
    %v1069 = vshrl.u32 %v1068, 7
    %v1070 = vsub.s32 5, %v1069
    %v1071 = vrot.slane %v1035, %v1070
    %v1072 = vmul.f32 %v1067, %v1071
    %v1073 = vadd.f32 %v1036, %v1042
    %v1074 = vadd.f32 %v1048, %v1054
    %v1075 = vadd.f32 %v1060, %v1066
    %v1076 = vadd.f32 %v1073, %v1074
    %v1077 = vadd.f32 %v1075, %v1072
    %v1078 = vadd.f32 %v1076, %v1077
    %v1079 = vld [vmem:[#allocation2 + $0x3d0] sm:$0x7]
    %v1080 = vld [vmem:[#allocation2 + $0x3d8] sm:$0x7]
    %v1081 = vmul.f32 %v1078, %v1078
    %v1083 = vrot.slane %v1081, 5
    %v1085 = vsel %vm95, %v1078, %v1083
    %v1086 = vsel %vm24, %v1085, 0.0
    %1087 = vadd.xlane.f32.xlu0 %v1086
    %v1088 = vpop.xlane.xlu0 %1087
    %v1089 = vmul.f32 %v1088, 0.055555556
    %v1090 = vmul.f32 %v1089, %v1089
    %v1092 = vrot.slane %v1090, 5
    %v1094 = vsub.f32 %v1089, %v1092
    %v1095 = vmax.f32 %v1094, 0.0
    %v1096 = vadd.f32 %v1095, 1e-05
    %v1097 = vrsqrt.pop %v1096
    %1099 = vset.pattern.permute.xlu0 0
    %1100 = vperm.xlu0 %1099, %v1097
    %v1101 = vpop.permute.xlu0 %1100
    %v1102 = vrot.slane %v1101, 3
    %v1104 = vmul.f32 %v1079, %v1102
    %v1105 = vmul.f32 %v1089, %v1104
    %v1106 = vsub.f32 %v1080, %v1105
    %v1107 = vmul.f32 %v1078, %v1104
    %v1108 = vadd.f32 %v1107, %v1106
    %v1109 = vmax.f32 %v1108, 0.0
    %v1110 = vld [vmem:[#allocation2 + $0x3f8] sm:$0x7]
    %v1111 = vld [vmem:[#allocation2 + $0x3e0] sm:$0x7]
    %v1112 = vlaneseq
    %v1113 = vshrl.u32 %v1112, 7
    %v1114 = vsub.s32 0, %v1113
    %v1115 = vrot.slane %v1109, %v1114
    %v1116 = vmul.f32 %v1111, %v1115
    %v1117 = vld [vmem:[#allocation2 + $0x3e8] sm:$0x7]
    %v1118 = vlaneseq
    %v1119 = vshrl.u32 %v1118, 7
    %v1120 = vsub.s32 1, %v1119
    %v1121 = vrot.slane %v1109, %v1120
    %v1122 = vmul.f32 %v1117, %v1121
    %v1123 = vld [vmem:[#allocation2 + $0x3f0] sm:$0x7]
    %v1124 = vlaneseq
    %v1125 = vshrl.u32 %v1124, 7
    %v1126 = vsub.s32 2, %v1125
    %v1127 = vrot.slane %v1109, %v1126
    %v1128 = vmul.f32 %v1123, %v1127
    %v1129 = vadd.f32 %v1110, %v1116
    %v1130 = vadd.f32 %v1122, %v1128
    %v1131 = vadd.f32 %v1129, %v1130
    %v1132 = vld [vmem:[#allocation2 + $0x400] sm:$0x7]
    %v1133 = vld [vmem:[#allocation2 + $0x408] sm:$0x7]
    %v1134 = vmul.f32 %v1131, %v1131
    %v1136 = vrot.slane %v1134, 5
    %v1138 = vsel %vm95, %v1131, %v1136
    %v1139 = vsel %vm24, %v1138, 0.0
    %1140 = vadd.xlane.f32.xlu0 %v1139
    %v1141 = vpop.xlane.xlu0 %1140
    %v1142 = vmul.f32 %v1141, 0.055555556
    %v1143 = vmul.f32 %v1142, %v1142
    %v1145 = vrot.slane %v1143, 5
    %v1147 = vsub.f32 %v1142, %v1145
    %v1148 = vmax.f32 %v1147, 0.0
    %v1149 = vadd.f32 %v1148, 1e-05
    %v1150 = vrsqrt.pop %v1149
    %1152 = vset.pattern.permute.xlu0 0
    %1153 = vperm.xlu0 %1152, %v1150
    %v1154 = vpop.permute.xlu0 %1153
    %v1155 = vrot.slane %v1154, 3
    %v1157 = vmul.f32 %v1132, %v1155
    %v1158 = vmul.f32 %v1142, %v1157
    %v1159 = vsub.f32 %v1133, %v1158
    %v1160 = vmul.f32 %v1131, %v1157
    %v1161 = vadd.f32 %v1160, %v1159
    %v1162 = vmax.f32 %v1161, 0.0
    %v1163 = vld [vmem:[#allocation2 + $0x428] sm:$0x3f]
    %v1164 = vld [vmem:[#allocation2 + $0x410] sm:$0x3f]
    %v1165 = vlaneseq
    %v1166 = vshrl.u32 %v1165, 7
    %v1167 = vsub.s32 0, %v1166
    %v1168 = vrot.slane %v1162, %v1167
    %v1169 = vmul.f32 %v1164, %v1168
    %v1170 = vld [vmem:[#allocation2 + $0x418] sm:$0x3f]
    %v1171 = vlaneseq
    %v1172 = vshrl.u32 %v1171, 7
    %v1173 = vsub.s32 1, %v1172
    %v1174 = vrot.slane %v1162, %v1173
    %v1175 = vmul.f32 %v1170, %v1174
    %v1176 = vld [vmem:[#allocation2 + $0x420] sm:$0x3f]
    %v1177 = vlaneseq
    %v1178 = vshrl.u32 %v1177, 7
    %v1179 = vsub.s32 2, %v1178
    %v1180 = vrot.slane %v1162, %v1179
    %v1181 = vmul.f32 %v1176, %v1180
    %v1182 = vadd.f32 %v1163, %v1169
    %v1183 = vadd.f32 %v1175, %v1181
    %v1184 = vadd.f32 %v1182, %v1183
    %v1185 = vadd.f32 %v1184, %v1013
    %v1186 = vld [vmem:[#allocation2 + $0x430] sm:$0x3f]
    %v1187 = vld [vmem:[#allocation2 + $0x438] sm:$0x3f]
    %v1188 = vsel %vm24, %v1185, 0.0
    %1189 = vadd.xlane.f32.xlu0 %v1188
    %v1190 = vpop.xlane.xlu0 %1189
    %v1191 = vmul.f32 %v1190, %v28
    %v1192 = vmul.f32 %v1185, %v1185
    %v1193 = vsel %vm24, %v1192, 0.0
    %1194 = vadd.xlane.f32.xlu0 %v1193
    %v1195 = vpop.xlane.xlu0 %1194
    %v1196 = vmul.f32 %v1195, %v28
    %v1197 = vmul.f32 %v1191, %v1191
    %v1198 = vsub.f32 %v1196, %v1197
    %v1199 = vmax.f32 %v1198, 0.0
    %v1200 = vadd.f32 %v1199, 1e-05
    %v1201 = vrsqrt.pop %v1200
    %v1202 = vmul.f32 %v1186, %v1201
    %v1203 = vmul.f32 %v1191, %v1202
    %v1204 = vsub.f32 %v1187, %v1203
    %v1205 = vmul.f32 %v1185, %v1202
    %v1206 = vadd.f32 %v1205, %v1204
    %v1207 = vmax.f32 %v1206, 0.0
    %v1208 = vld [vmem:[#allocation2 + $0x470] sm:$0x7]
    %v1209 = vld [vmem:[#allocation2 + $0x440] sm:$0x7]
    %v1210 = vlaneseq
    %v1211 = vshrl.u32 %v1210, 7
    %v1212 = vsub.s32 0, %v1211
    %v1213 = vrot.slane %v1207, %v1212
    %v1214 = vmul.f32 %v1209, %v1213
    %v1215 = vld [vmem:[#allocation2 + $0x448] sm:$0x7]
    %v1216 = vlaneseq
    %v1217 = vshrl.u32 %v1216, 7
    %v1218 = vsub.s32 1, %v1217
    %v1219 = vrot.slane %v1207, %v1218
    %v1220 = vmul.f32 %v1215, %v1219
    %v1221 = vld [vmem:[#allocation2 + $0x450] sm:$0x7]
    %v1222 = vlaneseq
    %v1223 = vshrl.u32 %v1222, 7
    %v1224 = vsub.s32 2, %v1223
    %v1225 = vrot.slane %v1207, %v1224
    %v1226 = vmul.f32 %v1221, %v1225
    %v1227 = vld [vmem:[#allocation2 + $0x458] sm:$0x7]
    %v1228 = vlaneseq
    %v1229 = vshrl.u32 %v1228, 7
    %v1230 = vsub.s32 3, %v1229
    %v1231 = vrot.slane %v1207, %v1230
    %v1232 = vmul.f32 %v1227, %v1231
    %v1233 = vld [vmem:[#allocation2 + $0x460] sm:$0x7]
    %v1234 = vlaneseq
    %v1235 = vshrl.u32 %v1234, 7
    %v1236 = vsub.s32 4, %v1235
    %v1237 = vrot.slane %v1207, %v1236
    %v1238 = vmul.f32 %v1233, %v1237
    %v1239 = vld [vmem:[#allocation2 + $0x468] sm:$0x7]
    %v1240 = vlaneseq
    %v1241 = vshrl.u32 %v1240, 7
    %v1242 = vsub.s32 5, %v1241
    %v1243 = vrot.slane %v1207, %v1242
    %v1244 = vmul.f32 %v1239, %v1243
    %v1245 = vadd.f32 %v1208, %v1214
    %v1246 = vadd.f32 %v1220, %v1226
    %v1247 = vadd.f32 %v1232, %v1238
    %v1248 = vadd.f32 %v1245, %v1246
    %v1249 = vadd.f32 %v1247, %v1244
    %v1250 = vadd.f32 %v1248, %v1249
    %v1251 = vld [vmem:[#allocation2 + $0x478] sm:$0x7]
    %v1252 = vld [vmem:[#allocation2 + $0x480] sm:$0x7]
    %v1253 = vmul.f32 %v1250, %v1250
    %v1255 = vrot.slane %v1253, 5
    %v1257 = vsel %vm95, %v1250, %v1255
    %v1258 = vsel %vm24, %v1257, 0.0
    %1259 = vadd.xlane.f32.xlu0 %v1258
    %v1260 = vpop.xlane.xlu0 %1259
    %v1261 = vmul.f32 %v1260, 0.055555556
    %v1262 = vmul.f32 %v1261, %v1261
    %v1264 = vrot.slane %v1262, 5
    %v1266 = vsub.f32 %v1261, %v1264
    %v1267 = vmax.f32 %v1266, 0.0
    %v1268 = vadd.f32 %v1267, 1e-05
    %v1269 = vrsqrt.pop %v1268
    %1271 = vset.pattern.permute.xlu0 0
    %1272 = vperm.xlu0 %1271, %v1269
    %v1273 = vpop.permute.xlu0 %1272
    %v1274 = vrot.slane %v1273, 3
    %v1276 = vmul.f32 %v1251, %v1274
    %v1277 = vmul.f32 %v1261, %v1276
    %v1278 = vsub.f32 %v1252, %v1277
    %v1279 = vmul.f32 %v1250, %v1276
    %v1280 = vadd.f32 %v1279, %v1278
    %v1281 = vmax.f32 %v1280, 0.0
    %v1282 = vld [vmem:[#allocation2 + $0x4a0] sm:$0x7]
    %v1283 = vld [vmem:[#allocation2 + $0x488] sm:$0x7]
    %v1284 = vlaneseq
    %v1285 = vshrl.u32 %v1284, 7
    %v1286 = vsub.s32 0, %v1285
    %v1287 = vrot.slane %v1281, %v1286
    %v1288 = vmul.f32 %v1283, %v1287
    %v1289 = vld [vmem:[#allocation2 + $0x490] sm:$0x7]
    %v1290 = vlaneseq
    %v1291 = vshrl.u32 %v1290, 7
    %v1292 = vsub.s32 1, %v1291
    %v1293 = vrot.slane %v1281, %v1292
    %v1294 = vmul.f32 %v1289, %v1293
    %v1295 = vld [vmem:[#allocation2 + $0x498] sm:$0x7]
    %v1296 = vlaneseq
    %v1297 = vshrl.u32 %v1296, 7
    %v1298 = vsub.s32 2, %v1297
    %v1299 = vrot.slane %v1281, %v1298
    %v1300 = vmul.f32 %v1295, %v1299
    %v1301 = vadd.f32 %v1282, %v1288
    %v1302 = vadd.f32 %v1294, %v1300
    %v1303 = vadd.f32 %v1301, %v1302
    %v1304 = vld [vmem:[#allocation2 + $0x4a8] sm:$0x7]
    %v1305 = vld [vmem:[#allocation2 + $0x4b0] sm:$0x7]
    %v1306 = vmul.f32 %v1303, %v1303
    %v1308 = vrot.slane %v1306, 5
    %v1310 = vsel %vm95, %v1303, %v1308
    %v1311 = vsel %vm24, %v1310, 0.0
    %1312 = vadd.xlane.f32.xlu0 %v1311
    %v1313 = vpop.xlane.xlu0 %1312
    %v1314 = vmul.f32 %v1313, 0.055555556
    %v1315 = vmul.f32 %v1314, %v1314
    %v1317 = vrot.slane %v1315, 5
    %v1319 = vsub.f32 %v1314, %v1317
    %v1320 = vmax.f32 %v1319, 0.0
    %v1321 = vadd.f32 %v1320, 1e-05
    %v1322 = vrsqrt.pop %v1321
    %1324 = vset.pattern.permute.xlu0 0
    %1325 = vperm.xlu0 %1324, %v1322
    %v1326 = vpop.permute.xlu0 %1325
    %v1327 = vrot.slane %v1326, 3
    %v1329 = vmul.f32 %v1304, %v1327
    %v1330 = vmul.f32 %v1314, %v1329
    %v1331 = vsub.f32 %v1305, %v1330
    %v1332 = vmul.f32 %v1303, %v1329
    %v1333 = vadd.f32 %v1332, %v1331
    %v1334 = vmax.f32 %v1333, 0.0
    %v1335 = vld [vmem:[#allocation2 + $0x4d0] sm:$0x3f]
    %v1336 = vld [vmem:[#allocation2 + $0x4b8] sm:$0x3f]
    %v1337 = vlaneseq
    %v1338 = vshrl.u32 %v1337, 7
    %v1339 = vsub.s32 0, %v1338
    %v1340 = vrot.slane %v1334, %v1339
    %v1341 = vmul.f32 %v1336, %v1340
    %v1342 = vld [vmem:[#allocation2 + $0x4c0] sm:$0x3f]
    %v1343 = vlaneseq
    %v1344 = vshrl.u32 %v1343, 7
    %v1345 = vsub.s32 1, %v1344
    %v1346 = vrot.slane %v1334, %v1345
    %v1347 = vmul.f32 %v1342, %v1346
    %v1348 = vld [vmem:[#allocation2 + $0x4c8] sm:$0x3f]
    %v1349 = vlaneseq
    %v1350 = vshrl.u32 %v1349, 7
    %v1351 = vsub.s32 2, %v1350
    %v1352 = vrot.slane %v1334, %v1351
    %v1353 = vmul.f32 %v1348, %v1352
    %v1354 = vadd.f32 %v1335, %v1341
    %v1355 = vadd.f32 %v1347, %v1353
    %v1356 = vadd.f32 %v1354, %v1355
    %v1357 = vld [vmem:[#allocation2 + $0x8f8] sm:$0x3f]
    %v1358 = vld [vmem:[#allocation2 + $0x8c8] sm:$0x3f]
    %v1359 = vlaneseq
    %v1360 = vshrl.u32 %v1359, 7
    %v1361 = vsub.s32 0, %v1360
    %v1362 = vrot.slane %v1185, %v1361
    %v1363 = vmul.f32 %v1358, %v1362
    %v1364 = vld [vmem:[#allocation2 + $0x8d0] sm:$0x3f]
    %v1365 = vlaneseq
    %v1366 = vshrl.u32 %v1365, 7
    %v1367 = vsub.s32 1, %v1366
    %v1368 = vrot.slane %v1185, %v1367
    %v1369 = vmul.f32 %v1364, %v1368
    %v1370 = vld [vmem:[#allocation2 + $0x8d8] sm:$0x3f]
    %v1371 = vlaneseq
    %v1372 = vshrl.u32 %v1371, 7
    %v1373 = vsub.s32 2, %v1372
    %v1374 = vrot.slane %v1185, %v1373
    %v1375 = vmul.f32 %v1370, %v1374
    %v1376 = vld [vmem:[#allocation2 + $0x8e0] sm:$0x3f]
    %v1377 = vlaneseq
    %v1378 = vshrl.u32 %v1377, 7
    %v1379 = vsub.s32 3, %v1378
    %v1380 = vrot.slane %v1185, %v1379
    %v1381 = vmul.f32 %v1376, %v1380
    %v1382 = vld [vmem:[#allocation2 + $0x8e8] sm:$0x3f]
    %v1383 = vlaneseq
    %v1384 = vshrl.u32 %v1383, 7
    %v1385 = vsub.s32 4, %v1384
    %v1386 = vrot.slane %v1185, %v1385
    %v1387 = vmul.f32 %v1382, %v1386
    %v1388 = vld [vmem:[#allocation2 + $0x8f0] sm:$0x3f]
    %v1389 = vlaneseq
    %v1390 = vshrl.u32 %v1389, 7
    %v1391 = vsub.s32 5, %v1390
    %v1392 = vrot.slane %v1185, %v1391
    %v1393 = vmul.f32 %v1388, %v1392
    %v1394 = vadd.f32 %v1357, %v1363
    %v1395 = vadd.f32 %v1369, %v1375
    %v1396 = vadd.f32 %v1381, %v1387
    %v1397 = vadd.f32 %v1394, %v1395
    %v1398 = vadd.f32 %v1396, %v1393
    %v1399 = vadd.f32 %v1397, %v1398
    %v1400 = vadd.f32 %v1356, %v1399
    %v1401 = vld [vmem:[#allocation2 + $0x4d8] sm:$0x3f]
    %v1402 = vld [vmem:[#allocation2 + $0x4e0] sm:$0x3f]
    %v1403 = vsel %vm24, %v1400, 0.0
    %1404 = vadd.xlane.f32.xlu0 %v1403
    %v1405 = vpop.xlane.xlu0 %1404
    %v1406 = vmul.f32 %v1405, %v28
    %v1407 = vmul.f32 %v1400, %v1400
    %v1408 = vsel %vm24, %v1407, 0.0
    %1409 = vadd.xlane.f32.xlu0 %v1408
    %v1410 = vpop.xlane.xlu0 %1409
    %v1411 = vmul.f32 %v1410, %v28
    %v1412 = vmul.f32 %v1406, %v1406
    %v1413 = vsub.f32 %v1411, %v1412
    %v1414 = vmax.f32 %v1413, 0.0
    %v1415 = vadd.f32 %v1414, 1e-05
    %v1416 = vrsqrt.pop %v1415
    %v1417 = vmul.f32 %v1401, %v1416
    %v1418 = vmul.f32 %v1406, %v1417
    %v1419 = vsub.f32 %v1402, %v1418
    %v1420 = vmul.f32 %v1400, %v1417
    %v1421 = vadd.f32 %v1420, %v1419
    %v1422 = vmax.f32 %v1421, 0.0
    %v1423 = vld [vmem:[#allocation2 + $0x518] sm:$0x7]
    %v1424 = vld [vmem:[#allocation2 + $0x4e8] sm:$0x7]
    %v1425 = vlaneseq
    %v1426 = vshrl.u32 %v1425, 7
    %v1427 = vsub.s32 0, %v1426
    %v1428 = vrot.slane %v1422, %v1427
    %v1429 = vmul.f32 %v1424, %v1428
    %v1430 = vld [vmem:[#allocation2 + $0x4f0] sm:$0x7]
    %v1431 = vlaneseq
    %v1432 = vshrl.u32 %v1431, 7
    %v1433 = vsub.s32 1, %v1432
    %v1434 = vrot.slane %v1422, %v1433
    %v1435 = vmul.f32 %v1430, %v1434
    %v1436 = vld [vmem:[#allocation2 + $0x4f8] sm:$0x7]
    %v1437 = vlaneseq
    %v1438 = vshrl.u32 %v1437, 7
    %v1439 = vsub.s32 2, %v1438
    %v1440 = vrot.slane %v1422, %v1439
    %v1441 = vmul.f32 %v1436, %v1440
    %v1442 = vld [vmem:[#allocation2 + $0x500] sm:$0x7]
    %v1443 = vlaneseq
    %v1444 = vshrl.u32 %v1443, 7
    %v1445 = vsub.s32 3, %v1444
    %v1446 = vrot.slane %v1422, %v1445
    %v1447 = vmul.f32 %v1442, %v1446
    %v1448 = vld [vmem:[#allocation2 + $0x508] sm:$0x7]
    %v1449 = vlaneseq
    %v1450 = vshrl.u32 %v1449, 7
    %v1451 = vsub.s32 4, %v1450
    %v1452 = vrot.slane %v1422, %v1451
    %v1453 = vmul.f32 %v1448, %v1452
    %v1454 = vld [vmem:[#allocation2 + $0x510] sm:$0x7]
    %v1455 = vlaneseq
    %v1456 = vshrl.u32 %v1455, 7
    %v1457 = vsub.s32 5, %v1456
    %v1458 = vrot.slane %v1422, %v1457
    %v1459 = vmul.f32 %v1454, %v1458
    %v1460 = vadd.f32 %v1423, %v1429
    %v1461 = vadd.f32 %v1435, %v1441
    %v1462 = vadd.f32 %v1447, %v1453
    %v1463 = vadd.f32 %v1460, %v1461
    %v1464 = vadd.f32 %v1462, %v1459
    %v1465 = vadd.f32 %v1463, %v1464
    %v1466 = vld [vmem:[#allocation2 + $0x520] sm:$0x7]
    %v1467 = vld [vmem:[#allocation2 + $0x528] sm:$0x7]
    %v1468 = vmul.f32 %v1465, %v1465
    %v1470 = vrot.slane %v1468, 5
    %v1472 = vsel %vm95, %v1465, %v1470
    %v1473 = vsel %vm24, %v1472, 0.0
    %1474 = vadd.xlane.f32.xlu0 %v1473
    %v1475 = vpop.xlane.xlu0 %1474
    %v1476 = vmul.f32 %v1475, 0.055555556
    %v1477 = vmul.f32 %v1476, %v1476
    %v1479 = vrot.slane %v1477, 5
    %v1481 = vsub.f32 %v1476, %v1479
    %v1482 = vmax.f32 %v1481, 0.0
    %v1483 = vadd.f32 %v1482, 1e-05
    %v1484 = vrsqrt.pop %v1483
    %1486 = vset.pattern.permute.xlu0 0
    %1487 = vperm.xlu0 %1486, %v1484
    %v1488 = vpop.permute.xlu0 %1487
    %v1489 = vrot.slane %v1488, 3
    %v1491 = vmul.f32 %v1466, %v1489
    %v1492 = vmul.f32 %v1476, %v1491
    %v1493 = vsub.f32 %v1467, %v1492
    %v1494 = vmul.f32 %v1465, %v1491
    %v1495 = vadd.f32 %v1494, %v1493
    %v1496 = vmax.f32 %v1495, 0.0
    %v1497 = vld [vmem:[#allocation2 + $0x548] sm:$0x7]
    %v1498 = vld [vmem:[#allocation2 + $0x530] sm:$0x7]
    %v1499 = vlaneseq
    %v1500 = vshrl.u32 %v1499, 7
    %v1501 = vsub.s32 0, %v1500
    %v1502 = vrot.slane %v1496, %v1501
    %v1503 = vmul.f32 %v1498, %v1502
    %v1504 = vld [vmem:[#allocation2 + $0x538] sm:$0x7]
    %v1505 = vlaneseq
    %v1506 = vshrl.u32 %v1505, 7
    %v1507 = vsub.s32 1, %v1506
    %v1508 = vrot.slane %v1496, %v1507
    %v1509 = vmul.f32 %v1504, %v1508
    %v1510 = vld [vmem:[#allocation2 + $0x540] sm:$0x7]
    %v1511 = vlaneseq
    %v1512 = vshrl.u32 %v1511, 7
    %v1513 = vsub.s32 2, %v1512
    %v1514 = vrot.slane %v1496, %v1513
    %v1515 = vmul.f32 %v1510, %v1514
    %v1516 = vadd.f32 %v1497, %v1503
    %v1517 = vadd.f32 %v1509, %v1515
    %v1518 = vadd.f32 %v1516, %v1517
    %v1519 = vld [vmem:[#allocation2 + $0x550] sm:$0x7]
    %v1520 = vld [vmem:[#allocation2 + $0x558] sm:$0x7]
    %v1521 = vmul.f32 %v1518, %v1518
    %v1523 = vrot.slane %v1521, 5
    %v1525 = vsel %vm95, %v1518, %v1523
    %v1526 = vsel %vm24, %v1525, 0.0
    %1527 = vadd.xlane.f32.xlu0 %v1526
    %v1528 = vpop.xlane.xlu0 %1527
    %v1529 = vmul.f32 %v1528, 0.055555556
    %v1530 = vmul.f32 %v1529, %v1529
    %v1532 = vrot.slane %v1530, 5
    %v1534 = vsub.f32 %v1529, %v1532
    %v1535 = vmax.f32 %v1534, 0.0
    %v1536 = vadd.f32 %v1535, 1e-05
    %v1537 = vrsqrt.pop %v1536
    %1539 = vset.pattern.permute.xlu0 0
    %1540 = vperm.xlu0 %1539, %v1537
    %v1541 = vpop.permute.xlu0 %1540
    %v1542 = vrot.slane %v1541, 3
    %v1544 = vmul.f32 %v1519, %v1542
    %v1545 = vmul.f32 %v1529, %v1544
    %v1546 = vsub.f32 %v1520, %v1545
    %v1547 = vmul.f32 %v1518, %v1544
    %v1548 = vadd.f32 %v1547, %v1546
    %v1549 = vmax.f32 %v1548, 0.0
    %v1550 = vld [vmem:[#allocation2 + $0x578] sm:$0x3f]
    %v1551 = vld [vmem:[#allocation2 + $0x560] sm:$0x3f]
    %v1552 = vlaneseq
    %v1553 = vshrl.u32 %v1552, 7
    %v1554 = vsub.s32 0, %v1553
    %v1555 = vrot.slane %v1549, %v1554
    %v1556 = vmul.f32 %v1551, %v1555
    %v1557 = vld [vmem:[#allocation2 + $0x568] sm:$0x3f]
    %v1558 = vlaneseq
    %v1559 = vshrl.u32 %v1558, 7
    %v1560 = vsub.s32 1, %v1559
    %v1561 = vrot.slane %v1549, %v1560
    %v1562 = vmul.f32 %v1557, %v1561
    %v1563 = vld [vmem:[#allocation2 + $0x570] sm:$0x3f]
    %v1564 = vlaneseq
    %v1565 = vshrl.u32 %v1564, 7
    %v1566 = vsub.s32 2, %v1565
    %v1567 = vrot.slane %v1549, %v1566
    %v1568 = vmul.f32 %v1563, %v1567
    %v1569 = vadd.f32 %v1550, %v1556
    %v1570 = vadd.f32 %v1562, %v1568
    %v1571 = vadd.f32 %v1569, %v1570
    %v1572 = vadd.f32 %v1571, %v1400
    %v1573 = vld [vmem:[#allocation2 + $0x580] sm:$0x3f]
    %v1574 = vld [vmem:[#allocation2 + $0x588] sm:$0x3f]
    %v1575 = vsel %vm24, %v1572, 0.0
    %1576 = vadd.xlane.f32.xlu0 %v1575
    %v1577 = vpop.xlane.xlu0 %1576
    %v1578 = vmul.f32 %v1577, %v28
    %v1579 = vmul.f32 %v1572, %v1572
    %v1580 = vsel %vm24, %v1579, 0.0
    %1581 = vadd.xlane.f32.xlu0 %v1580
    %v1582 = vpop.xlane.xlu0 %1581
    %v1583 = vmul.f32 %v1582, %v28
    %v1584 = vmul.f32 %v1578, %v1578
    %v1585 = vsub.f32 %v1583, %v1584
    %v1586 = vmax.f32 %v1585, 0.0
    %v1587 = vadd.f32 %v1586, 1e-05
    %v1588 = vrsqrt.pop %v1587
    %v1589 = vmul.f32 %v1573, %v1588
    %v1590 = vmul.f32 %v1578, %v1589
    %v1591 = vsub.f32 %v1574, %v1590
    %v1592 = vmul.f32 %v1572, %v1589
    %v1593 = vadd.f32 %v1592, %v1591
    %v1594 = vmax.f32 %v1593, 0.0
    %v1595 = vld [vmem:[#allocation2 + $0x5c0] sm:$0x7]
    %v1596 = vld [vmem:[#allocation2 + $0x590] sm:$0x7]
    %v1597 = vlaneseq
    %v1598 = vshrl.u32 %v1597, 7
    %v1599 = vsub.s32 0, %v1598
    %v1600 = vrot.slane %v1594, %v1599
    %v1601 = vmul.f32 %v1596, %v1600
    %v1602 = vld [vmem:[#allocation2 + $0x598] sm:$0x7]
    %v1603 = vlaneseq
    %v1604 = vshrl.u32 %v1603, 7
    %v1605 = vsub.s32 1, %v1604
    %v1606 = vrot.slane %v1594, %v1605
    %v1607 = vmul.f32 %v1602, %v1606
    %v1608 = vld [vmem:[#allocation2 + $0x5a0] sm:$0x7]
    %v1609 = vlaneseq
    %v1610 = vshrl.u32 %v1609, 7
    %v1611 = vsub.s32 2, %v1610
    %v1612 = vrot.slane %v1594, %v1611
    %v1613 = vmul.f32 %v1608, %v1612
    %v1614 = vld [vmem:[#allocation2 + $0x5a8] sm:$0x7]
    %v1615 = vlaneseq
    %v1616 = vshrl.u32 %v1615, 7
    %v1617 = vsub.s32 3, %v1616
    %v1618 = vrot.slane %v1594, %v1617
    %v1619 = vmul.f32 %v1614, %v1618
    %v1620 = vld [vmem:[#allocation2 + $0x5b0] sm:$0x7]
    %v1621 = vlaneseq
    %v1622 = vshrl.u32 %v1621, 7
    %v1623 = vsub.s32 4, %v1622
    %v1624 = vrot.slane %v1594, %v1623
    %v1625 = vmul.f32 %v1620, %v1624
    %v1626 = vld [vmem:[#allocation2 + $0x5b8] sm:$0x7]
    %v1627 = vlaneseq
    %v1628 = vshrl.u32 %v1627, 7
    %v1629 = vsub.s32 5, %v1628
    %v1630 = vrot.slane %v1594, %v1629
    %v1631 = vmul.f32 %v1626, %v1630
    %v1632 = vadd.f32 %v1595, %v1601
    %v1633 = vadd.f32 %v1607, %v1613
    %v1634 = vadd.f32 %v1619, %v1625
    %v1635 = vadd.f32 %v1632, %v1633
    %v1636 = vadd.f32 %v1634, %v1631
    %v1637 = vadd.f32 %v1635, %v1636
    %v1638 = vld [vmem:[#allocation2 + $0x5c8] sm:$0x7]
    %v1639 = vld [vmem:[#allocation2 + $0x5d0] sm:$0x7]
    %v1640 = vmul.f32 %v1637, %v1637
    %v1642 = vrot.slane %v1640, 5
    %v1644 = vsel %vm95, %v1637, %v1642
    %v1645 = vsel %vm24, %v1644, 0.0
    %1646 = vadd.xlane.f32.xlu0 %v1645
    %v1647 = vpop.xlane.xlu0 %1646
    %v1648 = vmul.f32 %v1647, 0.055555556
    %v1649 = vmul.f32 %v1648, %v1648
    %v1651 = vrot.slane %v1649, 5
    %v1653 = vsub.f32 %v1648, %v1651
    %v1654 = vmax.f32 %v1653, 0.0
    %v1655 = vadd.f32 %v1654, 1e-05
    %v1656 = vrsqrt.pop %v1655
    %1658 = vset.pattern.permute.xlu0 0
    %1659 = vperm.xlu0 %1658, %v1656
    %v1660 = vpop.permute.xlu0 %1659
    %v1661 = vrot.slane %v1660, 3
    %v1663 = vmul.f32 %v1638, %v1661
    %v1664 = vmul.f32 %v1648, %v1663
    %v1665 = vsub.f32 %v1639, %v1664
    %v1666 = vmul.f32 %v1637, %v1663
    %v1667 = vadd.f32 %v1666, %v1665
    %v1668 = vmax.f32 %v1667, 0.0
    %v1669 = vld [vmem:[#allocation2 + $0x5f0] sm:$0x7]
    %v1670 = vld [vmem:[#allocation2 + $0x5d8] sm:$0x7]
    %v1671 = vlaneseq
    %v1672 = vshrl.u32 %v1671, 7
    %v1673 = vsub.s32 0, %v1672
    %v1674 = vrot.slane %v1668, %v1673
    %v1675 = vmul.f32 %v1670, %v1674
    %v1676 = vld [vmem:[#allocation2 + $0x5e0] sm:$0x7]
    %v1677 = vlaneseq
    %v1678 = vshrl.u32 %v1677, 7
    %v1679 = vsub.s32 1, %v1678
    %v1680 = vrot.slane %v1668, %v1679
    %v1681 = vmul.f32 %v1676, %v1680
    %v1682 = vld [vmem:[#allocation2 + $0x5e8] sm:$0x7]
    %v1683 = vlaneseq
    %v1684 = vshrl.u32 %v1683, 7
    %v1685 = vsub.s32 2, %v1684
    %v1686 = vrot.slane %v1668, %v1685
    %v1687 = vmul.f32 %v1682, %v1686
    %v1688 = vadd.f32 %v1669, %v1675
    %v1689 = vadd.f32 %v1681, %v1687
    %v1690 = vadd.f32 %v1688, %v1689
    %v1691 = vld [vmem:[#allocation2 + $0x5f8] sm:$0x7]
    %v1692 = vld [vmem:[#allocation2 + $0x600] sm:$0x7]
    %v1693 = vmul.f32 %v1690, %v1690
    %v1695 = vrot.slane %v1693, 5
    %v1697 = vsel %vm95, %v1690, %v1695
    %v1698 = vsel %vm24, %v1697, 0.0
    %1699 = vadd.xlane.f32.xlu0 %v1698
    %v1700 = vpop.xlane.xlu0 %1699
    %v1701 = vmul.f32 %v1700, 0.055555556
    %v1702 = vmul.f32 %v1701, %v1701
    %v1704 = vrot.slane %v1702, 5
    %v1706 = vsub.f32 %v1701, %v1704
    %v1707 = vmax.f32 %v1706, 0.0
    %v1708 = vadd.f32 %v1707, 1e-05
    %v1709 = vrsqrt.pop %v1708
    %1711 = vset.pattern.permute.xlu0 0
    %1712 = vperm.xlu0 %1711, %v1709
    %v1713 = vpop.permute.xlu0 %1712
    %v1714 = vrot.slane %v1713, 3
    %v1716 = vmul.f32 %v1691, %v1714
    %v1717 = vmul.f32 %v1701, %v1716
    %v1718 = vsub.f32 %v1692, %v1717
    %v1719 = vmul.f32 %v1690, %v1716
    %v1720 = vadd.f32 %v1719, %v1718
    %v1721 = vmax.f32 %v1720, 0.0
    %v1722 = vld [vmem:[#allocation2 + $0x620] sm:$0x3f]
    %v1723 = vld [vmem:[#allocation2 + $0x608] sm:$0x3f]
    %v1724 = vlaneseq
    %v1725 = vshrl.u32 %v1724, 7
    %v1726 = vsub.s32 0, %v1725
    %v1727 = vrot.slane %v1721, %v1726
    %v1728 = vmul.f32 %v1723, %v1727
    %v1729 = vld [vmem:[#allocation2 + $0x610] sm:$0x3f]
    %v1730 = vlaneseq
    %v1731 = vshrl.u32 %v1730, 7
    %v1732 = vsub.s32 1, %v1731
    %v1733 = vrot.slane %v1721, %v1732
    %v1734 = vmul.f32 %v1729, %v1733
    %v1735 = vld [vmem:[#allocation2 + $0x618] sm:$0x3f]
    %v1736 = vlaneseq
    %v1737 = vshrl.u32 %v1736, 7
    %v1738 = vsub.s32 2, %v1737
    %v1739 = vrot.slane %v1721, %v1738
    %v1740 = vmul.f32 %v1735, %v1739
    %v1741 = vadd.f32 %v1722, %v1728
    %v1742 = vadd.f32 %v1734, %v1740
    %v1743 = vadd.f32 %v1741, %v1742
    %v1744 = vld [vmem:[#allocation2 + $0x628] sm:$0x3f]
    %v1745 = vld [vmem:[#allocation2 + $0x630] sm:$0x3f]
    %v1746 = vsel %vm24, %v1743, 0.0
    %1747 = vadd.xlane.f32.xlu0 %v1746
    %v1748 = vpop.xlane.xlu0 %1747
    %v1749 = vmul.f32 %v1748, %v28
    %v1750 = vmul.f32 %v1743, %v1743
    %v1751 = vsel %vm24, %v1750, 0.0
    %1752 = vadd.xlane.f32.xlu0 %v1751
    %v1753 = vpop.xlane.xlu0 %1752
    %v1754 = vmul.f32 %v1753, %v28
    %v1755 = vmul.f32 %v1749, %v1749
    %v1756 = vsub.f32 %v1754, %v1755
    %v1757 = vmax.f32 %v1756, 0.0
    %v1758 = vadd.f32 %v1757, 1e-05
    %v1759 = vrsqrt.pop %v1758
    %v1760 = vmul.f32 %v1744, %v1759
    %v1761 = vmul.f32 %v1749, %v1760
    %v1762 = vsub.f32 %v1745, %v1761
    %v1763 = vmul.f32 %v1743, %v1760
    %v1764 = vadd.f32 %v1763, %v1762
    %v1765 = vmax.f32 %v1764, 0.0
    %v1766 = vld [vmem:[#allocation2 + $0x668] sm:$0x7]
    %v1767 = vld [vmem:[#allocation2 + $0x638] sm:$0x7]
    %v1768 = vlaneseq
    %v1769 = vshrl.u32 %v1768, 7
    %v1770 = vsub.s32 0, %v1769
    %v1771 = vrot.slane %v1765, %v1770
    %v1772 = vmul.f32 %v1767, %v1771
    %v1773 = vld [vmem:[#allocation2 + $0x640] sm:$0x7]
    %v1774 = vlaneseq
    %v1775 = vshrl.u32 %v1774, 7
    %v1776 = vsub.s32 1, %v1775
    %v1777 = vrot.slane %v1765, %v1776
    %v1778 = vmul.f32 %v1773, %v1777
    %v1779 = vld [vmem:[#allocation2 + $0x648] sm:$0x7]
    %v1780 = vlaneseq
    %v1781 = vshrl.u32 %v1780, 7
    %v1782 = vsub.s32 2, %v1781
    %v1783 = vrot.slane %v1765, %v1782
    %v1784 = vmul.f32 %v1779, %v1783
    %v1785 = vld [vmem:[#allocation2 + $0x650] sm:$0x7]
    %v1786 = vlaneseq
    %v1787 = vshrl.u32 %v1786, 7
    %v1788 = vsub.s32 3, %v1787
    %v1789 = vrot.slane %v1765, %v1788
    %v1790 = vmul.f32 %v1785, %v1789
    %v1791 = vld [vmem:[#allocation2 + $0x658] sm:$0x7]
    %v1792 = vlaneseq
    %v1793 = vshrl.u32 %v1792, 7
    %v1794 = vsub.s32 4, %v1793
    %v1795 = vrot.slane %v1765, %v1794
    %v1796 = vmul.f32 %v1791, %v1795
    %v1797 = vld [vmem:[#allocation2 + $0x660] sm:$0x7]
    %v1798 = vlaneseq
    %v1799 = vshrl.u32 %v1798, 7
    %v1800 = vsub.s32 5, %v1799
    %v1801 = vrot.slane %v1765, %v1800
    %v1802 = vmul.f32 %v1797, %v1801
    %v1803 = vadd.f32 %v1766, %v1772
    %v1804 = vadd.f32 %v1778, %v1784
    %v1805 = vadd.f32 %v1790, %v1796
    %v1806 = vadd.f32 %v1803, %v1804
    %v1807 = vadd.f32 %v1805, %v1802
    %v1808 = vadd.f32 %v1806, %v1807
    %v1809 = vld [vmem:[#allocation2 + $0x670] sm:$0x7]
    %v1810 = vld [vmem:[#allocation2 + $0x678] sm:$0x7]
    %v1811 = vmul.f32 %v1808, %v1808
    %v1813 = vrot.slane %v1811, 5
    %v1815 = vsel %vm95, %v1808, %v1813
    %v1816 = vsel %vm24, %v1815, 0.0
    %1817 = vadd.xlane.f32.xlu0 %v1816
    %v1818 = vpop.xlane.xlu0 %1817
    %v1819 = vmul.f32 %v1818, 0.055555556
    %v1820 = vmul.f32 %v1819, %v1819
    %v1822 = vrot.slane %v1820, 5
    %v1824 = vsub.f32 %v1819, %v1822
    %v1825 = vmax.f32 %v1824, 0.0
    %v1826 = vadd.f32 %v1825, 1e-05
    %v1827 = vrsqrt.pop %v1826
    %1829 = vset.pattern.permute.xlu0 0
    %1830 = vperm.xlu0 %1829, %v1827
    %v1831 = vpop.permute.xlu0 %1830
    %v1832 = vrot.slane %v1831, 3
    %v1834 = vmul.f32 %v1809, %v1832
    %v1835 = vmul.f32 %v1819, %v1834
    %v1836 = vsub.f32 %v1810, %v1835
    %v1837 = vmul.f32 %v1808, %v1834
    %v1838 = vadd.f32 %v1837, %v1836
    %v1839 = vmax.f32 %v1838, 0.0
    %v1840 = vld [vmem:[#allocation2 + $0x698] sm:$0x7]
    %v1841 = vld [vmem:[#allocation2 + $0x680] sm:$0x7]
    %v1842 = vlaneseq
    %v1843 = vshrl.u32 %v1842, 7
    %v1844 = vsub.s32 0, %v1843
    %v1845 = vrot.slane %v1839, %v1844
    %v1846 = vmul.f32 %v1841, %v1845
    %v1847 = vld [vmem:[#allocation2 + $0x688] sm:$0x7]
    %v1848 = vlaneseq
    %v1849 = vshrl.u32 %v1848, 7
    %v1850 = vsub.s32 1, %v1849
    %v1851 = vrot.slane %v1839, %v1850
    %v1852 = vmul.f32 %v1847, %v1851
    %v1853 = vld [vmem:[#allocation2 + $0x690] sm:$0x7]
    %v1854 = vlaneseq
    %v1855 = vshrl.u32 %v1854, 7
    %v1856 = vsub.s32 2, %v1855
    %v1857 = vrot.slane %v1839, %v1856
    %v1858 = vmul.f32 %v1853, %v1857
    %v1859 = vadd.f32 %v1840, %v1846
    %v1860 = vadd.f32 %v1852, %v1858
    %v1861 = vadd.f32 %v1859, %v1860
    %v1862 = vld [vmem:[#allocation2 + $0x6a0] sm:$0x7]
    %v1863 = vld [vmem:[#allocation2 + $0x6a8] sm:$0x7]
    %v1864 = vmul.f32 %v1861, %v1861
    %v1866 = vrot.slane %v1864, 5
    %v1868 = vsel %vm95, %v1861, %v1866
    %v1869 = vsel %vm24, %v1868, 0.0
    %1870 = vadd.xlane.f32.xlu0 %v1869
    %v1871 = vpop.xlane.xlu0 %1870
    %v1872 = vmul.f32 %v1871, 0.055555556
    %v1873 = vmul.f32 %v1872, %v1872
    %v1875 = vrot.slane %v1873, 5
    %v1877 = vsub.f32 %v1872, %v1875
    %v1878 = vmax.f32 %v1877, 0.0
    %v1879 = vadd.f32 %v1878, 1e-05
    %v1880 = vrsqrt.pop %v1879
    %1882 = vset.pattern.permute.xlu0 0
    %1883 = vperm.xlu0 %1882, %v1880
    %v1884 = vpop.permute.xlu0 %1883
    %v1885 = vrot.slane %v1884, 3
    %v1887 = vmul.f32 %v1862, %v1885
    %v1888 = vmul.f32 %v1872, %v1887
    %v1889 = vsub.f32 %v1863, %v1888
    %v1890 = vmul.f32 %v1861, %v1887
    %v1891 = vadd.f32 %v1890, %v1889
    %v1892 = vmax.f32 %v1891, 0.0
    %v1893 = vld [vmem:[#allocation2 + $0x6c8] sm:$0x3f]
    %v1894 = vld [vmem:[#allocation2 + $0x6b0] sm:$0x3f]
    %v1895 = vlaneseq
    %v1896 = vshrl.u32 %v1895, 7
    %v1897 = vsub.s32 0, %v1896
    %v1898 = vrot.slane %v1892, %v1897
    %v1899 = vmul.f32 %v1894, %v1898
    %v1900 = vld [vmem:[#allocation2 + $0x6b8] sm:$0x3f]
    %v1901 = vlaneseq
    %v1902 = vshrl.u32 %v1901, 7
    %v1903 = vsub.s32 1, %v1902
    %v1904 = vrot.slane %v1892, %v1903
    %v1905 = vmul.f32 %v1900, %v1904
    %v1906 = vld [vmem:[#allocation2 + $0x6c0] sm:$0x3f]
    %v1907 = vlaneseq
    %v1908 = vshrl.u32 %v1907, 7
    %v1909 = vsub.s32 2, %v1908
    %v1910 = vrot.slane %v1892, %v1909
    %v1911 = vmul.f32 %v1906, %v1910
    %v1912 = vadd.f32 %v1893, %v1899
    %v1913 = vadd.f32 %v1905, %v1911
    %v1914 = vadd.f32 %v1912, %v1913
    %v1915 = vld [vmem:[#allocation2 + $0x6d0] sm:$0x3f]
    %v1916 = vld [vmem:[#allocation2 + $0x6d8] sm:$0x3f]
    %v1917 = vsel %vm24, %v1914, 0.0
    %1918 = vadd.xlane.f32.xlu0 %v1917
    %v1919 = vpop.xlane.xlu0 %1918
    %v1920 = vmul.f32 %v1919, %v28
    %v1921 = vmul.f32 %v1914, %v1914
    %v1922 = vsel %vm24, %v1921, 0.0
    %1923 = vadd.xlane.f32.xlu0 %v1922
    %v1924 = vpop.xlane.xlu0 %1923
    %v1925 = vmul.f32 %v1924, %v28
    %v1926 = vmul.f32 %v1920, %v1920
    %v1927 = vsub.f32 %v1925, %v1926
    %v1928 = vmax.f32 %v1927, 0.0
    %v1929 = vadd.f32 %v1928, 1e-05
    %v1930 = vrsqrt.pop %v1929
    %v1931 = vmul.f32 %v1915, %v1930
    %v1932 = vmul.f32 %v1920, %v1931
    %v1933 = vsub.f32 %v1916, %v1932
    %v1934 = vmul.f32 %v1914, %v1931
    %v1935 = vadd.f32 %v1934, %v1933
    %v1936 = vmax.f32 %v1935, 0.0
    %v1937 = vld [vmem:[#allocation2 + $0x710] sm:$0x7]
    %v1938 = vld [vmem:[#allocation2 + $0x6e0] sm:$0x7]
    %v1939 = vlaneseq
    %v1940 = vshrl.u32 %v1939, 7
    %v1941 = vsub.s32 0, %v1940
    %v1942 = vrot.slane %v1936, %v1941
    %v1943 = vmul.f32 %v1938, %v1942
    %v1944 = vld [vmem:[#allocation2 + $0x6e8] sm:$0x7]
    %v1945 = vlaneseq
    %v1946 = vshrl.u32 %v1945, 7
    %v1947 = vsub.s32 1, %v1946
    %v1948 = vrot.slane %v1936, %v1947
    %v1949 = vmul.f32 %v1944, %v1948
    %v1950 = vld [vmem:[#allocation2 + $0x6f0] sm:$0x7]
    %v1951 = vlaneseq
    %v1952 = vshrl.u32 %v1951, 7
    %v1953 = vsub.s32 2, %v1952
    %v1954 = vrot.slane %v1936, %v1953
    %v1955 = vmul.f32 %v1950, %v1954
    %v1956 = vld [vmem:[#allocation2 + $0x6f8] sm:$0x7]
    %v1957 = vlaneseq
    %v1958 = vshrl.u32 %v1957, 7
    %v1959 = vsub.s32 3, %v1958
    %v1960 = vrot.slane %v1936, %v1959
    %v1961 = vmul.f32 %v1956, %v1960
    %v1962 = vld [vmem:[#allocation2 + $0x700] sm:$0x7]
    %v1963 = vlaneseq
    %v1964 = vshrl.u32 %v1963, 7
    %v1965 = vsub.s32 4, %v1964
    %v1966 = vrot.slane %v1936, %v1965
    %v1967 = vmul.f32 %v1962, %v1966
    %v1968 = vld [vmem:[#allocation2 + $0x708] sm:$0x7]
    %v1969 = vlaneseq
    %v1970 = vshrl.u32 %v1969, 7
    %v1971 = vsub.s32 5, %v1970
    %v1972 = vrot.slane %v1936, %v1971
    %v1973 = vmul.f32 %v1968, %v1972
    %v1974 = vadd.f32 %v1937, %v1943
    %v1975 = vadd.f32 %v1949, %v1955
    %v1976 = vadd.f32 %v1961, %v1967
    %v1977 = vadd.f32 %v1974, %v1975
    %v1978 = vadd.f32 %v1976, %v1973
    %v1979 = vadd.f32 %v1977, %v1978
    %v1980 = vld [vmem:[#allocation2 + $0x718] sm:$0x7]
    %v1981 = vld [vmem:[#allocation2 + $0x720] sm:$0x7]
    %v1982 = vmul.f32 %v1979, %v1979
    %v1984 = vrot.slane %v1982, 5
    %v1986 = vsel %vm95, %v1979, %v1984
    %v1987 = vsel %vm24, %v1986, 0.0
    %1988 = vadd.xlane.f32.xlu0 %v1987
    %v1989 = vpop.xlane.xlu0 %1988
    %v1990 = vmul.f32 %v1989, 0.055555556
    %v1991 = vmul.f32 %v1990, %v1990
    %v1993 = vrot.slane %v1991, 5
    %v1995 = vsub.f32 %v1990, %v1993
    %v1996 = vmax.f32 %v1995, 0.0
    %v1997 = vadd.f32 %v1996, 1e-05
    %v1998 = vrsqrt.pop %v1997
    %2000 = vset.pattern.permute.xlu0 0
    %2001 = vperm.xlu0 %2000, %v1998
    %v2002 = vpop.permute.xlu0 %2001
    %v2003 = vrot.slane %v2002, 3
    %v2005 = vmul.f32 %v1980, %v2003
    %v2006 = vmul.f32 %v1990, %v2005
    %v2007 = vsub.f32 %v1981, %v2006
    %v2008 = vmul.f32 %v1979, %v2005
    %v2009 = vadd.f32 %v2008, %v2007
    %v2010 = vmax.f32 %v2009, 0.0
    %v2011 = vld [vmem:[#allocation2 + $0x740] sm:$0x7]
    %v2012 = vld [vmem:[#allocation2 + $0x728] sm:$0x7]
    %v2013 = vlaneseq
    %v2014 = vshrl.u32 %v2013, 7
    %v2015 = vsub.s32 0, %v2014
    %v2016 = vrot.slane %v2010, %v2015
    %v2017 = vmul.f32 %v2012, %v2016
    %v2018 = vld [vmem:[#allocation2 + $0x730] sm:$0x7]
    %v2019 = vlaneseq
    %v2020 = vshrl.u32 %v2019, 7
    %v2021 = vsub.s32 1, %v2020
    %v2022 = vrot.slane %v2010, %v2021
    %v2023 = vmul.f32 %v2018, %v2022
    %v2024 = vld [vmem:[#allocation2 + $0x738] sm:$0x7]
    %v2025 = vlaneseq
    %v2026 = vshrl.u32 %v2025, 7
    %v2027 = vsub.s32 2, %v2026
    %v2028 = vrot.slane %v2010, %v2027
    %v2029 = vmul.f32 %v2024, %v2028
    %v2030 = vadd.f32 %v2011, %v2017
    %v2031 = vadd.f32 %v2023, %v2029
    %v2032 = vadd.f32 %v2030, %v2031
    %v2033 = vld [vmem:[#allocation2 + $0x748] sm:$0x7]
    %v2034 = vld [vmem:[#allocation2 + $0x750] sm:$0x7]
    %v2035 = vmul.f32 %v2032, %v2032
    %v2037 = vrot.slane %v2035, 5
    %v2039 = vsel %vm95, %v2032, %v2037
    %v2040 = vsel %vm24, %v2039, 0.0
    %2041 = vadd.xlane.f32.xlu0 %v2040
    %v2042 = vpop.xlane.xlu0 %2041
    %v2043 = vmul.f32 %v2042, 0.055555556
    %v2044 = vmul.f32 %v2043, %v2043
    %v2046 = vrot.slane %v2044, 5
    %v2048 = vsub.f32 %v2043, %v2046
    %v2049 = vmax.f32 %v2048, 0.0
    %v2050 = vadd.f32 %v2049, 1e-05
    %v2051 = vrsqrt.pop %v2050
    %2053 = vset.pattern.permute.xlu0 0
    %2054 = vperm.xlu0 %2053, %v2051
    %v2055 = vpop.permute.xlu0 %2054
    %v2056 = vrot.slane %v2055, 3
    %v2058 = vmul.f32 %v2033, %v2056
    %v2059 = vmul.f32 %v2043, %v2058
    %v2060 = vsub.f32 %v2034, %v2059
    %v2061 = vmul.f32 %v2032, %v2058
    %v2062 = vadd.f32 %v2061, %v2060
    %v2063 = vmax.f32 %v2062, 0.0
    %v2064 = vld [vmem:[#allocation2 + $0x770] sm:$0x3f]
    %v2065 = vld [vmem:[#allocation2 + $0x758] sm:$0x3f]
    %v2066 = vlaneseq
    %v2067 = vshrl.u32 %v2066, 7
    %v2068 = vsub.s32 0, %v2067
    %v2069 = vrot.slane %v2063, %v2068
    %v2070 = vmul.f32 %v2065, %v2069
    %v2071 = vld [vmem:[#allocation2 + $0x760] sm:$0x3f]
    %v2072 = vlaneseq
    %v2073 = vshrl.u32 %v2072, 7
    %v2074 = vsub.s32 1, %v2073
    %v2075 = vrot.slane %v2063, %v2074
    %v2076 = vmul.f32 %v2071, %v2075
    %v2077 = vld [vmem:[#allocation2 + $0x768] sm:$0x3f]
    %v2078 = vlaneseq
    %v2079 = vshrl.u32 %v2078, 7
    %v2080 = vsub.s32 2, %v2079
    %v2081 = vrot.slane %v2063, %v2080
    %v2082 = vmul.f32 %v2077, %v2081
    %v2083 = vadd.f32 %v2064, %v2070
    %v2084 = vadd.f32 %v2076, %v2082
    %v2085 = vadd.f32 %v2083, %v2084
    %v2086 = vld [vmem:[#allocation2 + $0x778] sm:$0x3f]
    %v2087 = vld [vmem:[#allocation2 + $0x780] sm:$0x3f]
    %v2088 = vsel %vm24, %v2085, 0.0
    %2089 = vadd.xlane.f32.xlu0 %v2088
    %v2090 = vpop.xlane.xlu0 %2089
    %v2091 = vmul.f32 %v2090, %v28
    %v2092 = vmul.f32 %v2085, %v2085
    %v2093 = vsel %vm24, %v2092, 0.0
    %2094 = vadd.xlane.f32.xlu0 %v2093
    %v2095 = vpop.xlane.xlu0 %2094
    %v2096 = vmul.f32 %v2095, %v28
    %v2097 = vmul.f32 %v2091, %v2091
    %v2098 = vsub.f32 %v2096, %v2097
    %v2099 = vmax.f32 %v2098, 0.0
    %v2100 = vadd.f32 %v2099, 1e-05
    %v2101 = vrsqrt.pop %v2100
    %v2102 = vmul.f32 %v2086, %v2101
    %v2103 = vmul.f32 %v2091, %v2102
    %v2104 = vsub.f32 %v2087, %v2103
    %v2105 = vmul.f32 %v2085, %v2102
    %v2106 = vadd.f32 %v2105, %v2104
    %v2107 = vmax.f32 %v2106, 0.0
    %v2108 = vld [vmem:[#allocation2 + $0x7b8] sm:$0x7]
    %v2109 = vld [vmem:[#allocation2 + $0x788] sm:$0x7]
    %v2110 = vlaneseq
    %v2111 = vshrl.u32 %v2110, 7
    %v2112 = vsub.s32 0, %v2111
    %v2113 = vrot.slane %v2107, %v2112
    %v2114 = vmul.f32 %v2109, %v2113
    %v2115 = vld [vmem:[#allocation2 + $0x790] sm:$0x7]
    %v2116 = vlaneseq
    %v2117 = vshrl.u32 %v2116, 7
    %v2118 = vsub.s32 1, %v2117
    %v2119 = vrot.slane %v2107, %v2118
    %v2120 = vmul.f32 %v2115, %v2119
    %v2121 = vld [vmem:[#allocation2 + $0x798] sm:$0x7]
    %v2122 = vlaneseq
    %v2123 = vshrl.u32 %v2122, 7
    %v2124 = vsub.s32 2, %v2123
    %v2125 = vrot.slane %v2107, %v2124
    %v2126 = vmul.f32 %v2121, %v2125
    %v2127 = vld [vmem:[#allocation2 + $0x7a0] sm:$0x7]
    %v2128 = vlaneseq
    %v2129 = vshrl.u32 %v2128, 7
    %v2130 = vsub.s32 3, %v2129
    %v2131 = vrot.slane %v2107, %v2130
    %v2132 = vmul.f32 %v2127, %v2131
    %v2133 = vld [vmem:[#allocation2 + $0x7a8] sm:$0x7]
    %v2134 = vlaneseq
    %v2135 = vshrl.u32 %v2134, 7
    %v2136 = vsub.s32 4, %v2135
    %v2137 = vrot.slane %v2107, %v2136
    %v2138 = vmul.f32 %v2133, %v2137
    %v2139 = vld [vmem:[#allocation2 + $0x7b0] sm:$0x7]
    %v2140 = vlaneseq
    %v2141 = vshrl.u32 %v2140, 7
    %v2142 = vsub.s32 5, %v2141
    %v2143 = vrot.slane %v2107, %v2142
    %v2144 = vmul.f32 %v2139, %v2143
    %v2145 = vadd.f32 %v2108, %v2114
    %v2146 = vadd.f32 %v2120, %v2126
    %v2147 = vadd.f32 %v2132, %v2138
    %v2148 = vadd.f32 %v2145, %v2146
    %v2149 = vadd.f32 %v2147, %v2144
    %v2150 = vadd.f32 %v2148, %v2149
    %v2151 = vld [vmem:[#allocation2 + $0x7c0] sm:$0x7]
    %v2152 = vld [vmem:[#allocation2 + $0x7c8] sm:$0x7]
    %v2153 = vmul.f32 %v2150, %v2150
    %v2155 = vrot.slane %v2153, 5
    %v2157 = vsel %vm95, %v2150, %v2155
    %v2158 = vsel %vm24, %v2157, 0.0
    %2159 = vadd.xlane.f32.xlu0 %v2158
    %v2160 = vpop.xlane.xlu0 %2159
    %v2161 = vmul.f32 %v2160, 0.055555556
    %v2162 = vmul.f32 %v2161, %v2161
    %v2164 = vrot.slane %v2162, 5
    %v2166 = vsub.f32 %v2161, %v2164
    %v2167 = vmax.f32 %v2166, 0.0
    %v2168 = vadd.f32 %v2167, 1e-05
    %v2169 = vrsqrt.pop %v2168
    %2171 = vset.pattern.permute.xlu0 0
    %2172 = vperm.xlu0 %2171, %v2169
    %v2173 = vpop.permute.xlu0 %2172
    %v2174 = vrot.slane %v2173, 3
    %v2176 = vmul.f32 %v2151, %v2174
    %v2177 = vmul.f32 %v2161, %v2176
    %v2178 = vsub.f32 %v2152, %v2177
    %v2179 = vmul.f32 %v2150, %v2176
    %v2180 = vadd.f32 %v2179, %v2178
    %v2181 = vmax.f32 %v2180, 0.0
    %v2182 = vld [vmem:[#allocation2 + $0x7e8] sm:$0x7]
    %v2183 = vld [vmem:[#allocation2 + $0x7d0] sm:$0x7]
    %v2184 = vlaneseq
    %v2185 = vshrl.u32 %v2184, 7
    %v2186 = vsub.s32 0, %v2185
    %v2187 = vrot.slane %v2181, %v2186
    %v2188 = vmul.f32 %v2183, %v2187
    %v2189 = vld [vmem:[#allocation2 + $0x7d8] sm:$0x7]
    %v2190 = vlaneseq
    %v2191 = vshrl.u32 %v2190, 7
    %v2192 = vsub.s32 1, %v2191
    %v2193 = vrot.slane %v2181, %v2192
    %v2194 = vmul.f32 %v2189, %v2193
    %v2195 = vld [vmem:[#allocation2 + $0x7e0] sm:$0x7]
    %v2196 = vlaneseq
    %v2197 = vshrl.u32 %v2196, 7
    %v2198 = vsub.s32 2, %v2197
    %v2199 = vrot.slane %v2181, %v2198
    %v2200 = vmul.f32 %v2195, %v2199
    %v2201 = vadd.f32 %v2182, %v2188
    %v2202 = vadd.f32 %v2194, %v2200
    %v2203 = vadd.f32 %v2201, %v2202
    %v2204 = vld [vmem:[#allocation2 + $0x7f0] sm:$0x7]
    %v2205 = vld [vmem:[#allocation2 + $0x7f8] sm:$0x7]
    %v2206 = vmul.f32 %v2203, %v2203
    %v2208 = vrot.slane %v2206, 5
    %v2210 = vsel %vm95, %v2203, %v2208
    %v2211 = vsel %vm24, %v2210, 0.0
    %2212 = vadd.xlane.f32.xlu0 %v2211
    %v2213 = vpop.xlane.xlu0 %2212
    %v2214 = vmul.f32 %v2213, 0.055555556
    %v2215 = vmul.f32 %v2214, %v2214
    %v2217 = vrot.slane %v2215, 5
    %v2219 = vsub.f32 %v2214, %v2217
    %v2220 = vmax.f32 %v2219, 0.0
    %v2221 = vadd.f32 %v2220, 1e-05
    %v2222 = vrsqrt.pop %v2221
    %2224 = vset.pattern.permute.xlu0 0
    %2225 = vperm.xlu0 %2224, %v2222
    %v2226 = vpop.permute.xlu0 %2225
    %v2227 = vrot.slane %v2226, 3
    %v2229 = vmul.f32 %v2204, %v2227
    %v2230 = vmul.f32 %v2214, %v2229
    %v2231 = vsub.f32 %v2205, %v2230
    %v2232 = vmul.f32 %v2203, %v2229
    %v2233 = vadd.f32 %v2232, %v2231
    %v2234 = vmax.f32 %v2233, 0.0
    %v2235 = vld [vmem:[#allocation2 + $0x818] sm:$0x3f]
    %v2236 = vld [vmem:[#allocation2 + $0x800] sm:$0x3f]
    %v2237 = vlaneseq
    %v2238 = vshrl.u32 %v2237, 7
    %v2239 = vsub.s32 0, %v2238
    %v2240 = vrot.slane %v2234, %v2239
    %v2241 = vmul.f32 %v2236, %v2240
    %v2242 = vld [vmem:[#allocation2 + $0x808] sm:$0x3f]
    %v2243 = vlaneseq
    %v2244 = vshrl.u32 %v2243, 7
    %v2245 = vsub.s32 1, %v2244
    %v2246 = vrot.slane %v2234, %v2245
    %v2247 = vmul.f32 %v2242, %v2246
    %v2248 = vld [vmem:[#allocation2 + $0x810] sm:$0x3f]
    %v2249 = vlaneseq
    %v2250 = vshrl.u32 %v2249, 7
    %v2251 = vsub.s32 2, %v2250
    %v2252 = vrot.slane %v2234, %v2251
    %v2253 = vmul.f32 %v2248, %v2252
    %v2254 = vadd.f32 %v2235, %v2241
    %v2255 = vadd.f32 %v2247, %v2253
    %v2256 = vadd.f32 %v2254, %v2255
    %v2257 = vld [vmem:[#allocation2 + $0x38] sm:$0x3]
    %v2258 = vld [vmem:[#allocation2 + $0x8] sm:$0x3]
    %v2259 = vlaneseq
    %v2260 = vshrl.u32 %v2259, 7
    %v2261 = vsub.s32 0, %v2260
    %v2262 = vrot.slane %v2256, %v2261
    %v2263 = vmul.f32 %v2258, %v2262
    %v2264 = vld [vmem:[#allocation2 + $0x10] sm:$0x3]
    %v2265 = vlaneseq
    %v2266 = vshrl.u32 %v2265, 7
    %v2267 = vsub.s32 1, %v2266
    %v2268 = vrot.slane %v2256, %v2267
    %v2269 = vmul.f32 %v2264, %v2268
    %v2270 = vld [vmem:[#allocation2 + $0x18] sm:$0x3]
    %v2271 = vlaneseq
    %v2272 = vshrl.u32 %v2271, 7
    %v2273 = vsub.s32 2, %v2272
    %v2274 = vrot.slane %v2256, %v2273
    %v2275 = vmul.f32 %v2270, %v2274
    %v2276 = vld [vmem:[#allocation2 + $0x20] sm:$0x3]
    %v2277 = vlaneseq
    %v2278 = vshrl.u32 %v2277, 7
    %v2279 = vsub.s32 3, %v2278
    %v2280 = vrot.slane %v2256, %v2279
    %v2281 = vmul.f32 %v2276, %v2280
    %v2282 = vld [vmem:[#allocation2 + $0x28] sm:$0x3]
    %v2283 = vlaneseq
    %v2284 = vshrl.u32 %v2283, 7
    %v2285 = vsub.s32 4, %v2284
    %v2286 = vrot.slane %v2256, %v2285
    %v2287 = vmul.f32 %v2282, %v2286
    %v2288 = vld [vmem:[#allocation2 + $0x30] sm:$0x3]
    %v2289 = vlaneseq
    %v2290 = vshrl.u32 %v2289, 7
    %v2291 = vsub.s32 5, %v2290
    %v2292 = vrot.slane %v2256, %v2291
    %v2293 = vmul.f32 %v2288, %v2292
    %v2294 = vadd.f32 %v2257, %v2263
    %v2295 = vadd.f32 %v2269, %v2275
    %v2296 = vadd.f32 %v2281, %v2287
    %v2297 = vadd.f32 %v2294, %v2295
    %v2298 = vadd.f32 %v2296, %v2293
    %v2299 = vadd.f32 %v2297, %v2298
    %vm2300 = vcmask 140288
    %2301 = vst.msk [vmem:[#allocation5] sm:$0x3] %vm2300, %v2299
    // Predicated region
    $region10: #{tpu_custom_call.1} parent=1 // pred_check
      _
    $region11: #{tpu_custom_call.1} parent=1 // pred_check_branch
      %2303 = sbr.rel (0) target = $region13
    $region12: #{tpu_custom_call.1} parent=1 // pred_region
      %s2305 = ssub.s32 32, 32
      %2306 = vsyncadd [#allocation4], %s2305
      %s2308 = sshll.u32 [#allocation5], 4
      %s2309 = int_to_ptr.vmem [resolvable:$true] %s2308
      %2311 = dma.vmem_to_hbm [thread:$0]  %s2309, 32, %s1, [#allocation4]
    $region13: #{tpu_custom_call.1} parent=1 // pred_fallthru
      _
    // Predicated region
    $region14: #{tpu_custom_call.1} parent=1 // pred_check
      _
    $region15: #{tpu_custom_call.1} parent=1 // pred_check_branch
      %2313 = sbr.rel (0) target = $region17
    $region16: #{tpu_custom_call.1} parent=1 // pred_region
      %2314 = dma.done [#allocation4], 32
    $region17: #{tpu_custom_call.1} parent=1 // pred_fallthru
      _
    %2315 = vsyncpa [#allocation3], 1
    %2316 = vsyncpa [#allocation4], 1

</llo_original>
